<compile_context>
chip_gen: v5e
topology: v5e:2x2
jax: 0.10.0
libtpu: 0.0.40
codegen_flags: <defaults>
</compile_context>

<pallas_src>
import numpy as np

import jax
import jax.numpy as jnp
from jax import lax
from jax.experimental import pallas as pl
from jax.experimental.pallas import tpu as pltpu


_LN_EPS = 1e-5          # PyTorch nn.LayerNorm default eps


# ----------------------------------------------------------------------------
# Plain-JAX glue: nn.Unfold(kernel k, stride s, padding p) on NCHW input.
# Output matches PyTorch: (B, C*k*k, L), block elements ordered (c, kh, kw),
# L = row-major output spatial index.  Only used on the raw input image.
# ----------------------------------------------------------------------------
def _unfold(x, k, s, p):
    B, C, H, W = x.shape
    xp = jnp.pad(x, ((0, 0), (0, 0), (p, p), (p, p)))
    oh = (H + 2 * p - k) // s + 1
    ow = (W + 2 * p - k) // s + 1
    rows = (jnp.arange(oh) * s)[:, None] + jnp.arange(k)[None, :]       # (oh, k)
    cols = (jnp.arange(ow) * s)[:, None] + jnp.arange(k)[None, :]       # (ow, k)
    patches = xp[:, :, rows[:, None, :, None], cols[None, :, None, :]]  # (B,C,oh,ow,k,k)
    patches = patches.transpose(0, 1, 4, 5, 2, 3).reshape(B, C * k * k, oh * ow)
    return patches


# ----------------------------------------------------------------------------
# In-kernel math helpers
# ----------------------------------------------------------------------------
def _erf(x):
    # Abramowitz & Stegun 7.1.26 rational approximation, |error| <= 1.5e-7.
    a1, a2, a3, a4, a5 = 0.254829592, -0.284496736, 1.421413741, -1.453152027, 1.061405429
    ax = jnp.abs(x)
    t = 1.0 / (1.0 + 0.3275911 * ax)
    poly = ((((a5 * t + a4) * t + a3) * t + a2) * t + a1) * t
    y = 1.0 - poly * jnp.exp(-ax * ax)
    return jnp.where(x >= 0.0, y, -y)


def _gelu(x):
    return 0.5 * x * (1.0 + _erf(x * 0.7071067811865476))


def _layer_norm(v, g, b):
    mu = jnp.mean(v, axis=-1, keepdims=True)
    var = jnp.mean(jnp.square(v - mu), axis=-1, keepdims=True)
    return (v - mu) * lax.rsqrt(var + _LN_EPS) * g + b


def _transformer_block(x2d, w_ref, v_ref, bblk, n, d):
    """timm-style Block on bblk stacked images.

    x2d  : (bblk*n, d) tokens (batch-major rows)
    w_ref: (d, 6d) packed weights  [Wq|Wk|Wv | Wproj | Wfc1 | Wfc2]
    v_ref: (8, d)  packed vectors  [ln1_g, ln1_b, bproj, ln2_g, ln2_b, bfc1, bfc2, 0]
    """
    ln1_g, ln1_b = v_ref[0:1, :], v_ref[1:2, :]
    bproj = v_ref[2:3, :]
    ln2_g, ln2_b = v_ref[3:4, :], v_ref[4:5, :]
    bfc1, bfc2 = v_ref[5:6, :], v_ref[6:7, :]

    # --- attention (single head) ---
    h = _layer_norm(x2d, ln1_g, ln1_b)
    qkv = jnp.dot(h, w_ref[:, 0:3 * d], preferred_element_type=jnp.float32)  # (M, 3d)
    scale = 1.0 / float(d) ** 0.5
    q = (qkv[:, 0:d] * scale).reshape(bblk, n, d)
    k = qkv[:, d:2 * d].reshape(bblk, n, d)
    v = qkv[:, 2 * d:3 * d].reshape(bblk, n, d)

    s = jnp.einsum('bnd,bmd->bnm', q, k, preferred_element_type=jnp.float32)
    s = s - jnp.max(s, axis=-1, keepdims=True)
    p = jnp.exp(s)
    p = p * pl.reciprocal(jnp.sum(p, axis=-1, keepdims=True), approx=True)   # EUP slot
    ctx = jnp.einsum('bnm,bmd->bnd', p, v, preferred_element_type=jnp.float32)
    ctx = ctx.reshape(bblk * n, d)
    x2d = x2d + jnp.dot(ctx, w_ref[:, 3 * d:4 * d],
                        preferred_element_type=jnp.float32) + bproj

    # --- MLP (ratio = 1.0) ---
    h2 = _layer_norm(x2d, ln2_g, ln2_b)
    h2 = jnp.dot(h2, w_ref[:, 4 * d:5 * d], preferred_element_type=jnp.float32) + bfc1
    h2 = _gelu(h2)
    h2 = jnp.dot(h2, w_ref[:, 5 * d:6 * d], preferred_element_type=jnp.float32) + bfc2
    return x2d + h2


def _unfold_project(x2d, sel_ref, wcat_ref, bias, d_out):
    """Fused nn.Unfold(3x3, s=2, p=1) + nn.Linear on bblk stacked images.

    x2d     : (bblk*n_in, c)
    sel_ref : (9, bblk*n_out, bblk*n_in) block-diagonal one-hot selectors
    wcat_ref: (c, 9*d_out) kernel-position-major projection weights
    bias    : (1, d_out)
    """
    y = jnp.dot(x2d, wcat_ref[...], preferred_element_type=jnp.float32)  # lane-dense
    acc = None
    for p in range(sel_ref.shape[0]):                 # unrolled, k*k = 9
        t = jnp.dot(sel_ref[p], y[:, p * d_out:(p + 1) * d_out],
                    preferred_element_type=jnp.float32)
        acc = t if acc is None else acc + t
    return acc + bias


# ----------------------------------------------------------------------------
# The fused kernel: one grid step = whole forward for `bblk` batch elements.
# ----------------------------------------------------------------------------
def _t2t_kernel(p0_ref, w1_ref, blk1w_ref, blk1v_ref, sel1_ref, wcat2_ref,
                blk2w_ref, blk2v_ref, sel2_ref, wcat3_ref, bias_ref, o_ref):
    bblk, n0, din = p0_ref.shape
    d = w1_ref.shape[1]
    n1 = sel1_ref.shape[1] // bblk
    d_out = wcat3_ref.shape[1] // 9

    # stage 0: proj_before_attention1 + attention1 (image patches unfolded outside)
    x = jnp.dot(p0_ref[...].reshape(bblk * n0, din), w1_ref[...],
                preferred_element_type=jnp.float32) + bias_ref[0:1, :d]
    x = _transformer_block(x, blk1w_ref, blk1v_ref, bblk, n0, d)

    # stage 1: soft_split1 (in-kernel unfold) + proj_before_attention2 + attention2
    x = _unfold_project(x, sel1_ref, wcat2_ref, bias_ref[1:2, :d], d)
    x = _transformer_block(x, blk2w_ref, blk2v_ref, bblk, n1, d)

    # stage 2: soft_split2 (in-kernel unfold) + project
    x = _unfold_project(x, sel2_ref, wcat3_ref, bias_ref[2:3, :d_out], d_out)
    o_ref[...] = x.astype(o_ref.dtype)                # (bblk*n2, d_out) dense slab


def t2t_forward(x, prep):
    """T2T_module.forward: XLA patch gather + one fused batch-blocked pallas_call."""
    B = x.shape[0]
    # stage-0 patch extraction (nn.Unfold 7x7 s4 p2) on the raw image.
    p0 = _unfold(x, 7, 4, 2).transpose(0, 2, 1)                       # (B, n0, Cin*49)
    din_pad = prep["w1"].shape[0]
    p0 = jnp.pad(p0, ((0, 0), (0, 0), (0, din_pad - p0.shape[2])))    # 49 -> 56 (8-aligned)

    # Static geometry derived from shapes (works under jit; prep holds arrays only).
    n0 = p0.shape[1]
    g0 = int(round(np.sqrt(n0)))
    n1 = ((g0 + 2 * 1 - 3) // 2 + 1) ** 2
    bblk = prep["sel1"].shape[1] // n1
    n2 = prep["sel2"].shape[1] // bblk
    d_out = prep["wcat3"].shape[1] // 9
    assert B % bblk == 0, (B, bblk)

    names = ("w1", "blk1_w", "blk1_v", "sel1", "wcat2",
             "blk2_w", "blk2_v", "sel2", "wcat3", "bias")
    weights = [prep[k] for k in names]

    in_specs = [pl.BlockSpec((bblk, n0, din_pad), lambda b: (b, 0, 0))]
    for a in weights:   # resident weights: full-array blocks, constant index map
        in_specs.append(pl.BlockSpec(a.shape, lambda b, nd=a.ndim: (0,) * nd))

    out2d = pl.pallas_call(
        _t2t_kernel,
        out_shape=jax.ShapeDtypeStruct((B * n2, d_out), x.dtype),
        grid=(B // bblk,),
        in_specs=in_specs,
        out_specs=pl.BlockSpec((bblk * n2, d_out), lambda b: (b, 0)),
        compiler_params=pltpu.CompilerParams(
            dimension_semantics=("parallel",),
            vmem_limit_bytes=32 * 1024 * 1024),
    )(p0, *weights)
    return out2d.reshape(B, n2, d_out)


# ----------------------------------------------------------------------------
# Parameters (synthetic, PyTorch layout) + one-time kernel-layout preparation.
# ----------------------------------------------------------------------------
def make_params(key, in_chans=1, token_dim=32, embed_dim=64):
    """Synthetic params; Linear weights stored as (Din, Dout) for the x @ W convention."""
    def w(k, shape, scale=0.02):
        return (scale * jax.random.normal(k, shape)).astype(jnp.float32)

    def block_params(k, d):
        ks = jax.random.split(k, 6)
        ones = jnp.ones((1, d), jnp.float32)
        zeros = jnp.zeros((1, d), jnp.float32)
        return dict(
            ln1_g=ones, ln1_b=zeros,
            wq=w(ks[0], (d, d)), wk=w(ks[1], (d, d)), wv=w(ks[2], (d, d)),
            wproj=w(ks[3], (d, d)), bproj=zeros,
            ln2_g=ones, ln2_b=zeros,
            wfc1=w(ks[4], (d, d)), bfc1=zeros,
            wfc2=w(ks[5], (d, d)), bfc2=zeros,
        )

    keys = jax.random.split(key, 8)
    return dict(
        w_pb1=w(keys[0], (in_chans * 7 * 7, token_dim)),
        b_pb1=jnp.zeros((token_dim,), jnp.float32),
        block1=block_params(keys[1], token_dim),
        w_pb2=w(keys[2], (token_dim * 3 * 3, token_dim)),
        b_pb2=jnp.zeros((token_dim,), jnp.float32),
        block2=block_params(keys[3], token_dim),
        w_proj=w(keys[4], (token_dim * 3 * 3, embed_dim)),
        b_proj=jnp.zeros((embed_dim,), jnp.float32),
    )


def _make_unfold_selectors(grid_in, k, s, p, bblk):
    """Block-diagonal (over bblk batch elements) one-hot matrices implementing
    nn.Unfold(k, stride=s, padding=p) on a (grid_in x grid_in) token grid:
    out shape (k*k, bblk*n_out, bblk*n_in)."""
    grid_out = (grid_in + 2 * p - k) // s + 1
    n_in, n_out = grid_in * grid_in, grid_out * grid_out
    sel = np.zeros((k * k, n_out, n_in), np.float32)
    for kh in range(k):
        for kw in range(k):
            off = kh * k + kw
            for i in range(grid_out):
                for j in range(grid_out):
                    r, c = i * s - p + kh, j * s - p + kw
                    if 0 <= r < grid_in and 0 <= c < grid_in:
                        sel[off, i * grid_out + j, r * grid_in + c] = 1.0
    blk = np.zeros((k * k, bblk * n_out, bblk * n_in), np.float32)
    for b in range(bblk):
        blk[:, b * n_out:(b + 1) * n_out, b * n_in:(b + 1) * n_in] = sel
    return jnp.asarray(blk)


def prepare_params(params, img_size=32, bblk=2):
    """One-time (outside jit) conversion of PyTorch-layout params to the fused,
    batch-blocked kernel layout.  `bblk` = batch elements per grid step
    (keep <= ~16: block-diagonal selectors grow as bblk^2)."""
    token_dim = params["w_pb1"].shape[1]
    embed_dim = params["w_proj"].shape[1]
    assert embed_dim >= token_dim
    g0 = (img_size + 2 * 2 - 7) // 4 + 1      # token grid after soft_split0
    g1 = (g0 + 2 * 1 - 3) // 2 + 1            # token grid after soft_split1

    w1 = params["w_pb1"]
    w1 = jnp.pad(w1, ((0, (-w1.shape[0]) % 8), (0, 0)))   # 8-align contracting dim (49 -> 56)

    def pack_block(bp):
        w = jnp.concatenate([bp["wq"], bp["wk"], bp["wv"], bp["wproj"],
                             bp["wfc1"], bp["wfc2"]], axis=1)                    # (d, 6d)
        v = jnp.concatenate([bp["ln1_g"], bp["ln1_b"], bp["bproj"],
                             bp["ln2_g"], bp["ln2_b"], bp["bfc1"], bp["bfc2"],
                             jnp.zeros((1, token_dim), jnp.float32)], axis=0)    # (8, d)
        return w, v

    blk1_w, blk1_v = pack_block(params["block1"])
    blk2_w, blk2_v = pack_block(params["block2"])

    bias = np.zeros((8, embed_dim), np.float32)           # shared bias bundle
    bias[0, :token_dim] = np.asarray(params["b_pb1"])
    bias[1, :token_dim] = np.asarray(params["b_pb2"])
    bias[2, :embed_dim] = np.asarray(params["b_proj"])

    # PyTorch unfold row order is (c, kh, kw), so (C*9, D) -> (C, 9*D) is a pure reshape.
    wcat2 = params["w_pb2"].reshape(token_dim, 9 * token_dim)
    wcat3 = params["w_proj"].reshape(token_dim, 9 * embed_dim)

    return dict(
        w1=w1,
        blk1_w=blk1_w, blk1_v=blk1_v,
        sel1=_make_unfold_selectors(g0, 3, 2, 1, bblk),
        wcat2=wcat2,
        blk2_w=blk2_w, blk2_v=blk2_v,
        sel2=_make_unfold_selectors(g1, 3, 2, 1, bblk),
        wcat3=wcat3,
        bias=jnp.asarray(bias),
    )


# ----------------------------------------------------------------------------
# Pure-JAX reference (mirrors the PyTorch module) for validation.
# ----------------------------------------------------------------------------
def t2t_forward_reference(x, params):
    def layer_norm(v, g, b):
        mu = v.mean(-1, keepdims=True)
        var = ((v - mu) ** 2).mean(-1, keepdims=True)
        return (v - mu) / jnp.sqrt(var + _LN_EPS) * g + b

    def block(v, bp):
        d = v.shape[-1]
        h = layer_norm(v, bp["ln1_g"], bp["ln1_b"])
        q, k, w = h @ bp["wq"], h @ bp["wk"], h @ bp["wv"]
        s = jnp.einsum("bnd,bmd->bnm", q, k) / jnp.sqrt(float(d))
        p = jax.nn.softmax(s, axis=-1)
        a = jnp.einsum("bnm,bmd->bnd", p, w) @ bp["wproj"] + bp["bproj"]
        v = v + a
        h2 = layer_norm(v, bp["ln2_g"], bp["ln2_b"])
        h2 = h2 @ bp["wfc1"] + bp["bfc1"]
        h2 = jax.nn.gelu(h2, approximate=False)      # exact erf GELU (PyTorch default)
        h2 = h2 @ bp["wfc2"] + bp["bfc2"]
        return v + h2

    B = x.shape[0]
    token_dim = params["w_pb1"].shape[1]
    x = _unfold(x, 7, 4, 2).transpose(0, 2, 1) @ params["w_pb1"] + params["b_pb1"]
    x = block(x, params["block1"])
    n = int(np.sqrt(x.shape[1])); assert n * n == x.shape[1]
    x = x.transpose(0, 2, 1).reshape(B, token_dim, n, n)
    x = _unfold(x, 3, 2, 1).transpose(0, 2, 1) @ params["w_pb2"] + params["b_pb2"]
    x = block(x, params["block2"])
    n = int(np.sqrt(x.shape[1])); assert n * n == x.shape[1]
    x = x.transpose(0, 2, 1).reshape(B, token_dim, n, n)
    x = _unfold(x, 3, 2, 1).transpose(0, 2, 1) @ params["w_proj"] + params["b_proj"]
    return x


if __name__ == "__main__":
    # Small shapes consistent with the module: img_size=32, in_chans=1,
    # token_dim=32, embed_dim=64, batch=2.  num_patches = (32 // 16)^2 = 4.
    key = jax.random.PRNGKey(0)
    k_x, k_p = jax.random.split(key)

    B = 2
    x = jax.random.normal(k_x, (B, 1, 32, 32), dtype=jnp.float32)       # NCHW
    params = make_params(k_p, in_chans=1, token_dim=32, embed_dim=64)
    # bblk=B here (single grid step).  On real batches pick bblk so that
    # B//bblk >= 2 (v7x megacore / prologue pipelining) with bblk <= ~16.
    prep = prepare_params(params, img_size=32, bblk=B)

    fwd = jax.jit(t2t_forward)
    out = jax.block_until_ready(fwd(x, prep))

    assert out.shape == (B, 4, 64), out.shape
    assert bool(jnp.all(jnp.isfinite(out)))

    ref = t2t_forward_reference(x, params)
    err = float(jnp.max(jnp.abs(out - ref)))
    assert err < 2e-2, f"max |err| vs reference = {err}"

    print("KERNEL_OK")
</pallas_src>

<mosaic_0001>
module attributes {stable_mosaic.version = 11 : i64} {
  func.func @_t2t_kernel(%arg0: i32, %arg1: memref<2x64x56xf32, #tpu.memory_space<vmem>>, %arg2: memref<56x32xf32, #tpu.memory_space<vmem>>, %arg3: memref<32x192xf32, #tpu.memory_space<vmem>>, %arg4: memref<8x32xf32, #tpu.memory_space<vmem>>, %arg5: memref<9x32x128xf32, #tpu.memory_space<vmem>>, %arg6: memref<32x288xf32, #tpu.memory_space<vmem>>, %arg7: memref<32x192xf32, #tpu.memory_space<vmem>>, %arg8: memref<8x32xf32, #tpu.memory_space<vmem>>, %arg9: memref<9x8x32xf32, #tpu.memory_space<vmem>>, %arg10: memref<32x576xf32, #tpu.memory_space<vmem>>, %arg11: memref<8x64xf32, #tpu.memory_space<vmem>>, %arg12: memref<8x64xf32, #tpu.memory_space<vmem>>) attributes {dimension_semantics = [#tpu.dimension_semantics<parallel>], iteration_bounds = array<i64: 1>, scalar_prefetch = 0 : i64, scratch_operands = 0 : i64, tpu.core_type = #tpu.core_type<tc>, window_params = [{transform_indices = @transform_0, window_bounds = array<i64: 2, 64, 56>}, {pipeline_mode = #tpu.pipeline_mode<synchronous>, transform_indices = @transform_1, window_bounds = array<i64: 56, 32>}, {pipeline_mode = #tpu.pipeline_mode<synchronous>, transform_indices = @transform_2, window_bounds = array<i64: 32, 192>}, {pipeline_mode = #tpu.pipeline_mode<synchronous>, transform_indices = @transform_3, window_bounds = array<i64: 8, 32>}, {pipeline_mode = #tpu.pipeline_mode<synchronous>, transform_indices = @transform_4, window_bounds = array<i64: 9, 32, 128>}, {pipeline_mode = #tpu.pipeline_mode<synchronous>, transform_indices = @transform_5, window_bounds = array<i64: 32, 288>}, {pipeline_mode = #tpu.pipeline_mode<synchronous>, transform_indices = @transform_6, window_bounds = array<i64: 32, 192>}, {pipeline_mode = #tpu.pipeline_mode<synchronous>, transform_indices = @transform_7, window_bounds = array<i64: 8, 32>}, {pipeline_mode = #tpu.pipeline_mode<synchronous>, transform_indices = @transform_8, window_bounds = array<i64: 9, 8, 32>}, {pipeline_mode = #tpu.pipeline_mode<synchronous>, transform_indices = @transform_9, window_bounds = array<i64: 32, 576>}, {pipeline_mode = #tpu.pipeline_mode<synchronous>, transform_indices = @transform_10, window_bounds = array<i64: 8, 64>}, {transform_indices = @transform_11, window_bounds = array<i64: 8, 64>}]} {
    %c0 = arith.constant 0 : index
    %c0_0 = arith.constant 0 : index
    %c0_1 = arith.constant 0 : index
    %0 = vector.load %arg1[%c0, %c0_0, %c0_1] : memref<2x64x56xf32, #tpu.memory_space<vmem>>, vector<2x64x56xf32>
    %1 = vector.shape_cast %0 : vector<2x64x56xf32> to vector<128x56xf32>
    %c0_2 = arith.constant 0 : index
    %c0_3 = arith.constant 0 : index
    %2 = vector.load %arg2[%c0_2, %c0_3] : memref<56x32xf32, #tpu.memory_space<vmem>>, vector<56x32xf32>
    %cst = arith.constant dense<0.000000e+00> : vector<128x32xf32>
    %3 = tpu.matmul %1, %2, %cst {dimension_numbers = #tpu.dot_dimension_numbers<[1], [0], [0], [1], [0, 0, 1, 1], [], []>} : vector<128x56xf32>, vector<56x32xf32>, vector<128x32xf32> -> vector<128x32xf32>
    %c0_4 = arith.constant 0 : index
    %c0_5 = arith.constant 0 : index
    %4 = vector.load %arg11[%c0_4, %c0_5] : memref<8x64xf32, #tpu.memory_space<vmem>>, vector<1x32xf32>
    %5 = vector.broadcast %4 : vector<1x32xf32> to vector<128x32xf32>
    %6 = arith.addf %3, %5 : vector<128x32xf32>
    %c0_6 = arith.constant 0 : index
    %c0_7 = arith.constant 0 : index
    %7 = vector.load %arg4[%c0_6, %c0_7] : memref<8x32xf32, #tpu.memory_space<vmem>>, vector<1x32xf32>
    %c1 = arith.constant 1 : index
    %c0_8 = arith.constant 0 : index
    %8 = vector.load %arg4[%c1, %c0_8] : memref<8x32xf32, #tpu.memory_space<vmem>>, vector<1x32xf32>
    %c2 = arith.constant 2 : index
    %c0_9 = arith.constant 0 : index
    %9 = vector.load %arg4[%c2, %c0_9] : memref<8x32xf32, #tpu.memory_space<vmem>>, vector<1x32xf32>
    %c3 = arith.constant 3 : index
    %c0_10 = arith.constant 0 : index
    %10 = vector.load %arg4[%c3, %c0_10] : memref<8x32xf32, #tpu.memory_space<vmem>>, vector<1x32xf32>
    %c4 = arith.constant 4 : index
    %c0_11 = arith.constant 0 : index
    %11 = vector.load %arg4[%c4, %c0_11] : memref<8x32xf32, #tpu.memory_space<vmem>>, vector<1x32xf32>
    %c5 = arith.constant 5 : index
    %c0_12 = arith.constant 0 : index
    %12 = vector.load %arg4[%c5, %c0_12] : memref<8x32xf32, #tpu.memory_space<vmem>>, vector<1x32xf32>
    %c6 = arith.constant 6 : index
    %c0_13 = arith.constant 0 : index
    %13 = vector.load %arg4[%c6, %c0_13] : memref<8x32xf32, #tpu.memory_space<vmem>>, vector<1x32xf32>
    %cst_14 = arith.constant dense<0.000000e+00> : vector<128xf32>
    %14 = vector.multi_reduction <add>, %6, %cst_14 [1] : vector<128x32xf32> to vector<128xf32>
    %15 = vector.shape_cast %14 : vector<128xf32> to vector<128x1xf32>
    %cst_15 = arith.constant 3.200000e+01 : f32
    %16 = vector.broadcast %cst_15 : f32 to vector<128x1xf32>
    %17 = arith.divf %15, %16 : vector<128x1xf32>
    %18 = vector.broadcast %17 : vector<128x1xf32> to vector<128x32xf32>
    %19 = arith.subf %6, %18 : vector<128x32xf32>
    %20 = arith.mulf %19, %19 : vector<128x32xf32>
    %cst_16 = arith.constant dense<0.000000e+00> : vector<128xf32>
    %21 = vector.multi_reduction <add>, %20, %cst_16 [1] : vector<128x32xf32> to vector<128xf32>
    %22 = vector.shape_cast %21 : vector<128xf32> to vector<128x1xf32>
    %cst_17 = arith.constant 3.200000e+01 : f32
    %23 = vector.broadcast %cst_17 : f32 to vector<128x1xf32>
    %24 = arith.divf %22, %23 : vector<128x1xf32>
    %25 = vector.broadcast %17 : vector<128x1xf32> to vector<128x32xf32>
    %26 = arith.subf %6, %25 : vector<128x32xf32>
    %cst_18 = arith.constant 9.99999974E-6 : f32
    %27 = vector.broadcast %cst_18 : f32 to vector<128x1xf32>
    %28 = arith.addf %24, %27 : vector<128x1xf32>
    %29 = math.rsqrt %28 : vector<128x1xf32>
    %30 = vector.broadcast %29 : vector<128x1xf32> to vector<128x32xf32>
    %31 = arith.mulf %26, %30 : vector<128x32xf32>
    %32 = vector.broadcast %7 : vector<1x32xf32> to vector<128x32xf32>
    %33 = arith.mulf %31, %32 : vector<128x32xf32>
    %34 = vector.broadcast %8 : vector<1x32xf32> to vector<128x32xf32>
    %35 = arith.addf %33, %34 : vector<128x32xf32>
    %c0_19 = arith.constant 0 : index
    %c0_20 = arith.constant 0 : index
    %36 = vector.load %arg3[%c0_19, %c0_20] : memref<32x192xf32, #tpu.memory_space<vmem>>, vector<32x96xf32>
    %cst_21 = arith.constant dense<0.000000e+00> : vector<128x96xf32>
    %37 = tpu.matmul %35, %36, %cst_21 {dimension_numbers = #tpu.dot_dimension_numbers<[1], [0], [0], [1], [0, 0, 1, 1], [], []>} : vector<128x32xf32>, vector<32x96xf32>, vector<128x96xf32> -> vector<128x96xf32>
    %38 = vector.extract_strided_slice %37 {offsets = [0, 0], sizes = [128, 32], strides = [1, 1]} : vector<128x96xf32> to vector<128x32xf32>
    %cst_22 = arith.constant 0.176776692 : f32
    %39 = vector.broadcast %cst_22 : f32 to vector<128x32xf32>
    %40 = arith.mulf %38, %39 : vector<128x32xf32>
    %41 = vector.shape_cast %40 : vector<128x32xf32> to vector<2x64x32xf32>
    %42 = vector.extract_strided_slice %37 {offsets = [0, 32], sizes = [128, 32], strides = [1, 1]} : vector<128x96xf32> to vector<128x32xf32>
    %43 = vector.shape_cast %42 : vector<128x32xf32> to vector<2x64x32xf32>
    %44 = vector.extract_strided_slice %37 {offsets = [0, 64], sizes = [128, 32], strides = [1, 1]} : vector<128x96xf32> to vector<128x32xf32>
    %45 = vector.shape_cast %44 : vector<128x32xf32> to vector<2x64x32xf32>
    "tpu.trace_start"() <{level = 10 : i32, message = "bnd,bmd->bnm"}> : () -> ()
    %cst_23 = arith.constant dense<0.000000e+00> : vector<2x64x64xf32>
    %46 = tpu.matmul %41, %43, %cst_23 {dimension_numbers = #tpu.dot_dimension_numbers<[2], [2], [1], [1], [0, 0, 0, 1, 1, 1], [0], [0]>} : vector<2x64x32xf32>, vector<2x64x32xf32>, vector<2x64x64xf32> -> vector<2x64x64xf32>
    "tpu.trace_stop"() : () -> ()
    %cst_24 = arith.constant dense<0xFF800000> : vector<2x64xf32>
    %47 = vector.multi_reduction <maximumf>, %46, %cst_24 [2] : vector<2x64x64xf32> to vector<2x64xf32>
    %48 = vector.shape_cast %47 : vector<2x64xf32> to vector<2x64x1xf32>
    %49 = vector.broadcast %48 : vector<2x64x1xf32> to vector<2x64x64xf32>
    %50 = arith.subf %46, %49 : vector<2x64x64xf32>
    %51 = math.exp %50 : vector<2x64x64xf32>
    %cst_25 = arith.constant dense<0.000000e+00> : vector<2x64xf32>
    %52 = vector.multi_reduction <add>, %51, %cst_25 [2] : vector<2x64x64xf32> to vector<2x64xf32>
    %53 = vector.shape_cast %52 : vector<2x64xf32> to vector<2x64x1xf32>
    %54 = tpu.reciprocal %53 {approx = true} : vector<2x64x1xf32> -> vector<2x64x1xf32>
    %55 = vector.broadcast %54 : vector<2x64x1xf32> to vector<2x64x64xf32>
    %56 = arith.mulf %51, %55 : vector<2x64x64xf32>
    "tpu.trace_start"() <{level = 10 : i32, message = "bnm,bmd->bnd"}> : () -> ()
    %cst_26 = arith.constant dense<0.000000e+00> : vector<2x64x32xf32>
    %57 = tpu.matmul %56, %45, %cst_26 {dimension_numbers = #tpu.dot_dimension_numbers<[2], [1], [1], [2], [0, 0, 0, 1, 1, 2], [0], [0]>} : vector<2x64x64xf32>, vector<2x64x32xf32>, vector<2x64x32xf32> -> vector<2x64x32xf32>
    "tpu.trace_stop"() : () -> ()
    %58 = vector.shape_cast %57 : vector<2x64x32xf32> to vector<128x32xf32>
    %c0_27 = arith.constant 0 : index
    %c96 = arith.constant 96 : index
    %59 = vector.load %arg3[%c0_27, %c96] : memref<32x192xf32, #tpu.memory_space<vmem>>, vector<32x32xf32>
    %cst_28 = arith.constant dense<0.000000e+00> : vector<128x32xf32>
    %60 = tpu.matmul %58, %59, %cst_28 {dimension_numbers = #tpu.dot_dimension_numbers<[1], [0], [0], [1], [0, 0, 1, 1], [], []>} : vector<128x32xf32>, vector<32x32xf32>, vector<128x32xf32> -> vector<128x32xf32>
    %61 = arith.addf %6, %60 : vector<128x32xf32>
    %62 = vector.broadcast %9 : vector<1x32xf32> to vector<128x32xf32>
    %63 = arith.addf %61, %62 : vector<128x32xf32>
    %cst_29 = arith.constant dense<0.000000e+00> : vector<128xf32>
    %64 = vector.multi_reduction <add>, %63, %cst_29 [1] : vector<128x32xf32> to vector<128xf32>
    %65 = vector.shape_cast %64 : vector<128xf32> to vector<128x1xf32>
    %cst_30 = arith.constant 3.200000e+01 : f32
    %66 = vector.broadcast %cst_30 : f32 to vector<128x1xf32>
    %67 = arith.divf %65, %66 : vector<128x1xf32>
    %68 = vector.broadcast %67 : vector<128x1xf32> to vector<128x32xf32>
    %69 = arith.subf %63, %68 : vector<128x32xf32>
    %70 = arith.mulf %69, %69 : vector<128x32xf32>
    %cst_31 = arith.constant dense<0.000000e+00> : vector<128xf32>
    %71 = vector.multi_reduction <add>, %70, %cst_31 [1] : vector<128x32xf32> to vector<128xf32>
    %72 = vector.shape_cast %71 : vector<128xf32> to vector<128x1xf32>
    %cst_32 = arith.constant 3.200000e+01 : f32
    %73 = vector.broadcast %cst_32 : f32 to vector<128x1xf32>
    %74 = arith.divf %72, %73 : vector<128x1xf32>
    %75 = vector.broadcast %67 : vector<128x1xf32> to vector<128x32xf32>
    %76 = arith.subf %63, %75 : vector<128x32xf32>
    %cst_33 = arith.constant 9.99999974E-6 : f32
    %77 = vector.broadcast %cst_33 : f32 to vector<128x1xf32>
    %78 = arith.addf %74, %77 : vector<128x1xf32>
    %79 = math.rsqrt %78 : vector<128x1xf32>
    %80 = vector.broadcast %79 : vector<128x1xf32> to vector<128x32xf32>
    %81 = arith.mulf %76, %80 : vector<128x32xf32>
    %82 = vector.broadcast %10 : vector<1x32xf32> to vector<128x32xf32>
    %83 = arith.mulf %81, %82 : vector<128x32xf32>
    %84 = vector.broadcast %11 : vector<1x32xf32> to vector<128x32xf32>
    %85 = arith.addf %83, %84 : vector<128x32xf32>
    %c0_34 = arith.constant 0 : index
    %c128 = arith.constant 128 : index
    %86 = vector.load %arg3[%c0_34, %c128] : memref<32x192xf32, #tpu.memory_space<vmem>>, vector<32x32xf32>
    %cst_35 = arith.constant dense<0.000000e+00> : vector<128x32xf32>
    %87 = tpu.matmul %85, %86, %cst_35 {dimension_numbers = #tpu.dot_dimension_numbers<[1], [0], [0], [1], [0, 0, 1, 1], [], []>} : vector<128x32xf32>, vector<32x32xf32>, vector<128x32xf32> -> vector<128x32xf32>
    %88 = vector.broadcast %12 : vector<1x32xf32> to vector<128x32xf32>
    %89 = arith.addf %87, %88 : vector<128x32xf32>
    %cst_36 = arith.constant 5.000000e-01 : f32
    %90 = vector.broadcast %cst_36 : f32 to vector<128x32xf32>
    %91 = arith.mulf %90, %89 : vector<128x32xf32>
    %cst_37 = arith.constant 0.707106769 : f32
    %92 = vector.broadcast %cst_37 : f32 to vector<128x32xf32>
    %93 = arith.mulf %89, %92 : vector<128x32xf32>
    %94 = math.absf %93 : vector<128x32xf32>
    %cst_38 = arith.constant 0.327591091 : f32
    %95 = vector.broadcast %cst_38 : f32 to vector<128x32xf32>
    %96 = arith.mulf %95, %94 : vector<128x32xf32>
    %cst_39 = arith.constant 1.000000e+00 : f32
    %97 = vector.broadcast %cst_39 : f32 to vector<128x32xf32>
    %98 = arith.addf %97, %96 : vector<128x32xf32>
    %cst_40 = arith.constant 1.000000e+00 : f32
    %99 = vector.broadcast %cst_40 : f32 to vector<128x32xf32>
    %100 = arith.divf %99, %98 : vector<128x32xf32>
    %cst_41 = arith.constant 1.06140542 : f32
    %101 = vector.broadcast %cst_41 : f32 to vector<128x32xf32>
    %102 = arith.mulf %101, %100 : vector<128x32xf32>
    %cst_42 = arith.constant -1.45315206 : f32
    %103 = vector.broadcast %cst_42 : f32 to vector<128x32xf32>
    %104 = arith.addf %102, %103 : vector<128x32xf32>
    %105 = arith.mulf %104, %100 : vector<128x32xf32>
    %cst_43 = arith.constant 1.42141378 : f32
    %106 = vector.broadcast %cst_43 : f32 to vector<128x32xf32>
    %107 = arith.addf %105, %106 : vector<128x32xf32>
    %108 = arith.mulf %107, %100 : vector<128x32xf32>
    %cst_44 = arith.constant -0.284496725 : f32
    %109 = vector.broadcast %cst_44 : f32 to vector<128x32xf32>
    %110 = arith.addf %108, %109 : vector<128x32xf32>
    %111 = arith.mulf %110, %100 : vector<128x32xf32>
    %cst_45 = arith.constant 0.254829586 : f32
    %112 = vector.broadcast %cst_45 : f32 to vector<128x32xf32>
    %113 = arith.addf %111, %112 : vector<128x32xf32>
    %114 = arith.mulf %113, %100 : vector<128x32xf32>
    %cst_46 = arith.constant 0.000000e+00 : f32
    %115 = vector.broadcast %cst_46 : f32 to vector<128x32xf32>
    %116 = arith.subf %115, %94 : vector<128x32xf32>
    %117 = arith.mulf %116, %94 : vector<128x32xf32>
    %118 = math.exp %117 : vector<128x32xf32>
    %119 = arith.mulf %114, %118 : vector<128x32xf32>
    %cst_47 = arith.constant 1.000000e+00 : f32
    %120 = vector.broadcast %cst_47 : f32 to vector<128x32xf32>
    %121 = arith.subf %120, %119 : vector<128x32xf32>
    %cst_48 = arith.constant 0.000000e+00 : f32
    %122 = vector.broadcast %cst_48 : f32 to vector<128x32xf32>
    %123 = arith.cmpf oge, %93, %122 : vector<128x32xf32>
    %cst_49 = arith.constant 0.000000e+00 : f32
    %124 = vector.broadcast %cst_49 : f32 to vector<128x32xf32>
    %125 = arith.subf %124, %121 : vector<128x32xf32>
    %126 = arith.select %123, %121, %125 : vector<128x32xi1>, vector<128x32xf32>
    %cst_50 = arith.constant 1.000000e+00 : f32
    %127 = vector.broadcast %cst_50 : f32 to vector<128x32xf32>
    %128 = arith.addf %127, %126 : vector<128x32xf32>
    %129 = arith.mulf %91, %128 : vector<128x32xf32>
    %c0_51 = arith.constant 0 : index
    %c160 = arith.constant 160 : index
    %130 = vector.load %arg3[%c0_51, %c160] : memref<32x192xf32, #tpu.memory_space<vmem>>, vector<32x32xf32>
    %cst_52 = arith.constant dense<0.000000e+00> : vector<128x32xf32>
    %131 = tpu.matmul %129, %130, %cst_52 {dimension_numbers = #tpu.dot_dimension_numbers<[1], [0], [0], [1], [0, 0, 1, 1], [], []>} : vector<128x32xf32>, vector<32x32xf32>, vector<128x32xf32> -> vector<128x32xf32>
    %132 = vector.broadcast %13 : vector<1x32xf32> to vector<128x32xf32>
    %133 = arith.addf %131, %132 : vector<128x32xf32>
    %134 = arith.addf %63, %133 : vector<128x32xf32>
    %c1_53 = arith.constant 1 : index
    %c0_54 = arith.constant 0 : index
    %135 = vector.load %arg11[%c1_53, %c0_54] : memref<8x64xf32, #tpu.memory_space<vmem>>, vector<1x32xf32>
    %c0_55 = arith.constant 0 : index
    %c0_56 = arith.constant 0 : index
    %136 = vector.load %arg6[%c0_55, %c0_56] : memref<32x288xf32, #tpu.memory_space<vmem>>, vector<32x288xf32>
    %cst_57 = arith.constant dense<0.000000e+00> : vector<128x288xf32>
    %137 = tpu.matmul %134, %136, %cst_57 {dimension_numbers = #tpu.dot_dimension_numbers<[1], [0], [0], [1], [0, 0, 1, 1], [], []>} : vector<128x32xf32>, vector<32x288xf32>, vector<128x288xf32> -> vector<128x288xf32>
    %c0_58 = arith.constant 0 : index
    %c0_59 = arith.constant 0 : index
    %c0_60 = arith.constant 0 : index
    %138 = vector.load %arg5[%c0_58, %c0_59, %c0_60] : memref<9x32x128xf32, #tpu.memory_space<vmem>>, vector<1x32x128xf32>
    %139 = vector.shape_cast %138 : vector<1x32x128xf32> to vector<32x128xf32>
    %140 = vector.extract_strided_slice %137 {offsets = [0, 0], sizes = [128, 32], strides = [1, 1]} : vector<128x288xf32> to vector<128x32xf32>
    %cst_61 = arith.constant dense<0.000000e+00> : vector<32x32xf32>
    %141 = tpu.matmul %139, %140, %cst_61 {dimension_numbers = #tpu.dot_dimension_numbers<[1], [0], [0], [1], [0, 0, 1, 1], [], []>} : vector<32x128xf32>, vector<128x32xf32>, vector<32x32xf32> -> vector<32x32xf32>
    %c1_62 = arith.constant 1 : index
    %c0_63 = arith.constant 0 : index
    %c0_64 = arith.constant 0 : index
    %142 = vector.load %arg5[%c1_62, %c0_63, %c0_64] : memref<9x32x128xf32, #tpu.memory_space<vmem>>, vector<1x32x128xf32>
    %143 = vector.shape_cast %142 : vector<1x32x128xf32> to vector<32x128xf32>
    %144 = vector.extract_strided_slice %137 {offsets = [0, 32], sizes = [128, 32], strides = [1, 1]} : vector<128x288xf32> to vector<128x32xf32>
    %cst_65 = arith.constant dense<0.000000e+00> : vector<32x32xf32>
    %145 = tpu.matmul %143, %144, %cst_65 {dimension_numbers = #tpu.dot_dimension_numbers<[1], [0], [0], [1], [0, 0, 1, 1], [], []>} : vector<32x128xf32>, vector<128x32xf32>, vector<32x32xf32> -> vector<32x32xf32>
    %146 = arith.addf %141, %145 : vector<32x32xf32>
    %c2_66 = arith.constant 2 : index
    %c0_67 = arith.constant 0 : index
    %c0_68 = arith.constant 0 : index
    %147 = vector.load %arg5[%c2_66, %c0_67, %c0_68] : memref<9x32x128xf32, #tpu.memory_space<vmem>>, vector<1x32x128xf32>
    %148 = vector.shape_cast %147 : vector<1x32x128xf32> to vector<32x128xf32>
    %149 = vector.extract_strided_slice %137 {offsets = [0, 64], sizes = [128, 32], strides = [1, 1]} : vector<128x288xf32> to vector<128x32xf32>
    %cst_69 = arith.constant dense<0.000000e+00> : vector<32x32xf32>
    %150 = tpu.matmul %148, %149, %cst_69 {dimension_numbers = #tpu.dot_dimension_numbers<[1], [0], [0], [1], [0, 0, 1, 1], [], []>} : vector<32x128xf32>, vector<128x32xf32>, vector<32x32xf32> -> vector<32x32xf32>
    %151 = arith.addf %146, %150 : vector<32x32xf32>
    %c3_70 = arith.constant 3 : index
    %c0_71 = arith.constant 0 : index
    %c0_72 = arith.constant 0 : index
    %152 = vector.load %arg5[%c3_70, %c0_71, %c0_72] : memref<9x32x128xf32, #tpu.memory_space<vmem>>, vector<1x32x128xf32>
    %153 = vector.shape_cast %152 : vector<1x32x128xf32> to vector<32x128xf32>
    %154 = vector.extract_strided_slice %137 {offsets = [0, 96], sizes = [128, 32], strides = [1, 1]} : vector<128x288xf32> to vector<128x32xf32>
    %cst_73 = arith.constant dense<0.000000e+00> : vector<32x32xf32>
    %155 = tpu.matmul %153, %154, %cst_73 {dimension_numbers = #tpu.dot_dimension_numbers<[1], [0], [0], [1], [0, 0, 1, 1], [], []>} : vector<32x128xf32>, vector<128x32xf32>, vector<32x32xf32> -> vector<32x32xf32>
    %156 = arith.addf %151, %155 : vector<32x32xf32>
    %c4_74 = arith.constant 4 : index
    %c0_75 = arith.constant 0 : index
    %c0_76 = arith.constant 0 : index
    %157 = vector.load %arg5[%c4_74, %c0_75, %c0_76] : memref<9x32x128xf32, #tpu.memory_space<vmem>>, vector<1x32x128xf32>
    %158 = vector.shape_cast %157 : vector<1x32x128xf32> to vector<32x128xf32>
    %159 = vector.extract_strided_slice %137 {offsets = [0, 128], sizes = [128, 32], strides = [1, 1]} : vector<128x288xf32> to vector<128x32xf32>
    %cst_77 = arith.constant dense<0.000000e+00> : vector<32x32xf32>
    %160 = tpu.matmul %158, %159, %cst_77 {dimension_numbers = #tpu.dot_dimension_numbers<[1], [0], [0], [1], [0, 0, 1, 1], [], []>} : vector<32x128xf32>, vector<128x32xf32>, vector<32x32xf32> -> vector<32x32xf32>
    %161 = arith.addf %156, %160 : vector<32x32xf32>
    %c5_78 = arith.constant 5 : index
    %c0_79 = arith.constant 0 : index
    %c0_80 = arith.constant 0 : index
    %162 = vector.load %arg5[%c5_78, %c0_79, %c0_80] : memref<9x32x128xf32, #tpu.memory_space<vmem>>, vector<1x32x128xf32>
    %163 = vector.shape_cast %162 : vector<1x32x128xf32> to vector<32x128xf32>
    %164 = vector.extract_strided_slice %137 {offsets = [0, 160], sizes = [128, 32], strides = [1, 1]} : vector<128x288xf32> to vector<128x32xf32>
    %cst_81 = arith.constant dense<0.000000e+00> : vector<32x32xf32>
    %165 = tpu.matmul %163, %164, %cst_81 {dimension_numbers = #tpu.dot_dimension_numbers<[1], [0], [0], [1], [0, 0, 1, 1], [], []>} : vector<32x128xf32>, vector<128x32xf32>, vector<32x32xf32> -> vector<32x32xf32>
    %166 = arith.addf %161, %165 : vector<32x32xf32>
    %c6_82 = arith.constant 6 : index
    %c0_83 = arith.constant 0 : index
    %c0_84 = arith.constant 0 : index
    %167 = vector.load %arg5[%c6_82, %c0_83, %c0_84] : memref<9x32x128xf32, #tpu.memory_space<vmem>>, vector<1x32x128xf32>
    %168 = vector.shape_cast %167 : vector<1x32x128xf32> to vector<32x128xf32>
    %169 = vector.extract_strided_slice %137 {offsets = [0, 192], sizes = [128, 32], strides = [1, 1]} : vector<128x288xf32> to vector<128x32xf32>
    %cst_85 = arith.constant dense<0.000000e+00> : vector<32x32xf32>
    %170 = tpu.matmul %168, %169, %cst_85 {dimension_numbers = #tpu.dot_dimension_numbers<[1], [0], [0], [1], [0, 0, 1, 1], [], []>} : vector<32x128xf32>, vector<128x32xf32>, vector<32x32xf32> -> vector<32x32xf32>
    %171 = arith.addf %166, %170 : vector<32x32xf32>
    %c7 = arith.constant 7 : index
    %c0_86 = arith.constant 0 : index
    %c0_87 = arith.constant 0 : index
    %172 = vector.load %arg5[%c7, %c0_86, %c0_87] : memref<9x32x128xf32, #tpu.memory_space<vmem>>, vector<1x32x128xf32>
    %173 = vector.shape_cast %172 : vector<1x32x128xf32> to vector<32x128xf32>
    %174 = vector.extract_strided_slice %137 {offsets = [0, 224], sizes = [128, 32], strides = [1, 1]} : vector<128x288xf32> to vector<128x32xf32>
    %cst_88 = arith.constant dense<0.000000e+00> : vector<32x32xf32>
    %175 = tpu.matmul %173, %174, %cst_88 {dimension_numbers = #tpu.dot_dimension_numbers<[1], [0], [0], [1], [0, 0, 1, 1], [], []>} : vector<32x128xf32>, vector<128x32xf32>, vector<32x32xf32> -> vector<32x32xf32>
    %176 = arith.addf %171, %175 : vector<32x32xf32>
    %c8 = arith.constant 8 : index
    %c0_89 = arith.constant 0 : index
    %c0_90 = arith.constant 0 : index
    %177 = vector.load %arg5[%c8, %c0_89, %c0_90] : memref<9x32x128xf32, #tpu.memory_space<vmem>>, vector<1x32x128xf32>
    %178 = vector.shape_cast %177 : vector<1x32x128xf32> to vector<32x128xf32>
    %179 = vector.extract_strided_slice %137 {offsets = [0, 256], sizes = [128, 32], strides = [1, 1]} : vector<128x288xf32> to vector<128x32xf32>
    %cst_91 = arith.constant dense<0.000000e+00> : vector<32x32xf32>
    %180 = tpu.matmul %178, %179, %cst_91 {dimension_numbers = #tpu.dot_dimension_numbers<[1], [0], [0], [1], [0, 0, 1, 1], [], []>} : vector<32x128xf32>, vector<128x32xf32>, vector<32x32xf32> -> vector<32x32xf32>
    %181 = arith.addf %176, %180 : vector<32x32xf32>
    %182 = vector.broadcast %135 : vector<1x32xf32> to vector<32x32xf32>
    %183 = arith.addf %181, %182 : vector<32x32xf32>
    %c0_92 = arith.constant 0 : index
    %c0_93 = arith.constant 0 : index
    %184 = vector.load %arg8[%c0_92, %c0_93] : memref<8x32xf32, #tpu.memory_space<vmem>>, vector<1x32xf32>
    %c1_94 = arith.constant 1 : index
    %c0_95 = arith.constant 0 : index
    %185 = vector.load %arg8[%c1_94, %c0_95] : memref<8x32xf32, #tpu.memory_space<vmem>>, vector<1x32xf32>
    %c2_96 = arith.constant 2 : index
    %c0_97 = arith.constant 0 : index
    %186 = vector.load %arg8[%c2_96, %c0_97] : memref<8x32xf32, #tpu.memory_space<vmem>>, vector<1x32xf32>
    %c3_98 = arith.constant 3 : index
    %c0_99 = arith.constant 0 : index
    %187 = vector.load %arg8[%c3_98, %c0_99] : memref<8x32xf32, #tpu.memory_space<vmem>>, vector<1x32xf32>
    %c4_100 = arith.constant 4 : index
    %c0_101 = arith.constant 0 : index
    %188 = vector.load %arg8[%c4_100, %c0_101] : memref<8x32xf32, #tpu.memory_space<vmem>>, vector<1x32xf32>
    %c5_102 = arith.constant 5 : index
    %c0_103 = arith.constant 0 : index
    %189 = vector.load %arg8[%c5_102, %c0_103] : memref<8x32xf32, #tpu.memory_space<vmem>>, vector<1x32xf32>
    %c6_104 = arith.constant 6 : index
    %c0_105 = arith.constant 0 : index
    %190 = vector.load %arg8[%c6_104, %c0_105] : memref<8x32xf32, #tpu.memory_space<vmem>>, vector<1x32xf32>
    %cst_106 = arith.constant dense<0.000000e+00> : vector<32xf32>
    %191 = vector.multi_reduction <add>, %183, %cst_106 [1] : vector<32x32xf32> to vector<32xf32>
    %192 = vector.shape_cast %191 : vector<32xf32> to vector<32x1xf32>
    %cst_107 = arith.constant 3.200000e+01 : f32
    %193 = vector.broadcast %cst_107 : f32 to vector<32x1xf32>
    %194 = arith.divf %192, %193 : vector<32x1xf32>
    %195 = vector.broadcast %194 : vector<32x1xf32> to vector<32x32xf32>
    %196 = arith.subf %183, %195 : vector<32x32xf32>
    %197 = arith.mulf %196, %196 : vector<32x32xf32>
    %cst_108 = arith.constant dense<0.000000e+00> : vector<32xf32>
    %198 = vector.multi_reduction <add>, %197, %cst_108 [1] : vector<32x32xf32> to vector<32xf32>
    %199 = vector.shape_cast %198 : vector<32xf32> to vector<32x1xf32>
    %cst_109 = arith.constant 3.200000e+01 : f32
    %200 = vector.broadcast %cst_109 : f32 to vector<32x1xf32>
    %201 = arith.divf %199, %200 : vector<32x1xf32>
    %202 = vector.broadcast %194 : vector<32x1xf32> to vector<32x32xf32>
    %203 = arith.subf %183, %202 : vector<32x32xf32>
    %cst_110 = arith.constant 9.99999974E-6 : f32
    %204 = vector.broadcast %cst_110 : f32 to vector<32x1xf32>
    %205 = arith.addf %201, %204 : vector<32x1xf32>
    %206 = math.rsqrt %205 : vector<32x1xf32>
    %207 = vector.broadcast %206 : vector<32x1xf32> to vector<32x32xf32>
    %208 = arith.mulf %203, %207 : vector<32x32xf32>
    %209 = vector.broadcast %184 : vector<1x32xf32> to vector<32x32xf32>
    %210 = arith.mulf %208, %209 : vector<32x32xf32>
    %211 = vector.broadcast %185 : vector<1x32xf32> to vector<32x32xf32>
    %212 = arith.addf %210, %211 : vector<32x32xf32>
    %c0_111 = arith.constant 0 : index
    %c0_112 = arith.constant 0 : index
    %213 = vector.load %arg7[%c0_111, %c0_112] : memref<32x192xf32, #tpu.memory_space<vmem>>, vector<32x96xf32>
    %cst_113 = arith.constant dense<0.000000e+00> : vector<32x96xf32>
    %214 = tpu.matmul %212, %213, %cst_113 {dimension_numbers = #tpu.dot_dimension_numbers<[1], [0], [0], [1], [0, 0, 1, 1], [], []>} : vector<32x32xf32>, vector<32x96xf32>, vector<32x96xf32> -> vector<32x96xf32>
    %215 = vector.extract_strided_slice %214 {offsets = [0, 0], sizes = [32, 32], strides = [1, 1]} : vector<32x96xf32> to vector<32x32xf32>
    %cst_114 = arith.constant 0.176776692 : f32
    %216 = vector.broadcast %cst_114 : f32 to vector<32x32xf32>
    %217 = arith.mulf %215, %216 : vector<32x32xf32>
    %218 = vector.shape_cast %217 : vector<32x32xf32> to vector<2x16x32xf32>
    %219 = vector.extract_strided_slice %214 {offsets = [0, 32], sizes = [32, 32], strides = [1, 1]} : vector<32x96xf32> to vector<32x32xf32>
    %220 = vector.shape_cast %219 : vector<32x32xf32> to vector<2x16x32xf32>
    %221 = vector.extract_strided_slice %214 {offsets = [0, 64], sizes = [32, 32], strides = [1, 1]} : vector<32x96xf32> to vector<32x32xf32>
    %222 = vector.shape_cast %221 : vector<32x32xf32> to vector<2x16x32xf32>
    "tpu.trace_start"() <{level = 10 : i32, message = "bnd,bmd->bnm"}> : () -> ()
    %cst_115 = arith.constant dense<0.000000e+00> : vector<2x16x16xf32>
    %223 = tpu.matmul %218, %220, %cst_115 {dimension_numbers = #tpu.dot_dimension_numbers<[2], [2], [1], [1], [0, 0, 0, 1, 1, 1], [0], [0]>} : vector<2x16x32xf32>, vector<2x16x32xf32>, vector<2x16x16xf32> -> vector<2x16x16xf32>
    "tpu.trace_stop"() : () -> ()
    %cst_116 = arith.constant dense<0xFF800000> : vector<2x16xf32>
    %224 = vector.multi_reduction <maximumf>, %223, %cst_116 [2] : vector<2x16x16xf32> to vector<2x16xf32>
    %225 = vector.shape_cast %224 : vector<2x16xf32> to vector<2x16x1xf32>
    %226 = vector.broadcast %225 : vector<2x16x1xf32> to vector<2x16x16xf32>
    %227 = arith.subf %223, %226 : vector<2x16x16xf32>
    %228 = math.exp %227 : vector<2x16x16xf32>
    %cst_117 = arith.constant dense<0.000000e+00> : vector<2x16xf32>
    %229 = vector.multi_reduction <add>, %228, %cst_117 [2] : vector<2x16x16xf32> to vector<2x16xf32>
    %230 = vector.shape_cast %229 : vector<2x16xf32> to vector<2x16x1xf32>
    %231 = tpu.reciprocal %230 {approx = true} : vector<2x16x1xf32> -> vector<2x16x1xf32>
    %232 = vector.broadcast %231 : vector<2x16x1xf32> to vector<2x16x16xf32>
    %233 = arith.mulf %228, %232 : vector<2x16x16xf32>
    "tpu.trace_start"() <{level = 10 : i32, message = "bnm,bmd->bnd"}> : () -> ()
    %cst_118 = arith.constant dense<0.000000e+00> : vector<2x16x32xf32>
    %234 = tpu.matmul %233, %222, %cst_118 {dimension_numbers = #tpu.dot_dimension_numbers<[2], [1], [1], [2], [0, 0, 0, 1, 1, 2], [0], [0]>} : vector<2x16x16xf32>, vector<2x16x32xf32>, vector<2x16x32xf32> -> vector<2x16x32xf32>
    "tpu.trace_stop"() : () -> ()
    %235 = vector.shape_cast %234 : vector<2x16x32xf32> to vector<32x32xf32>
    %c0_119 = arith.constant 0 : index
    %c96_120 = arith.constant 96 : index
    %236 = vector.load %arg7[%c0_119, %c96_120] : memref<32x192xf32, #tpu.memory_space<vmem>>, vector<32x32xf32>
    %cst_121 = arith.constant dense<0.000000e+00> : vector<32x32xf32>
    %237 = tpu.matmul %235, %236, %cst_121 {dimension_numbers = #tpu.dot_dimension_numbers<[1], [0], [0], [1], [0, 0, 1, 1], [], []>} : vector<32x32xf32>, vector<32x32xf32>, vector<32x32xf32> -> vector<32x32xf32>
    %238 = arith.addf %183, %237 : vector<32x32xf32>
    %239 = vector.broadcast %186 : vector<1x32xf32> to vector<32x32xf32>
    %240 = arith.addf %238, %239 : vector<32x32xf32>
    %cst_122 = arith.constant dense<0.000000e+00> : vector<32xf32>
    %241 = vector.multi_reduction <add>, %240, %cst_122 [1] : vector<32x32xf32> to vector<32xf32>
    %242 = vector.shape_cast %241 : vector<32xf32> to vector<32x1xf32>
    %cst_123 = arith.constant 3.200000e+01 : f32
    %243 = vector.broadcast %cst_123 : f32 to vector<32x1xf32>
    %244 = arith.divf %242, %243 : vector<32x1xf32>
    %245 = vector.broadcast %244 : vector<32x1xf32> to vector<32x32xf32>
    %246 = arith.subf %240, %245 : vector<32x32xf32>
    %247 = arith.mulf %246, %246 : vector<32x32xf32>
    %cst_124 = arith.constant dense<0.000000e+00> : vector<32xf32>
    %248 = vector.multi_reduction <add>, %247, %cst_124 [1] : vector<32x32xf32> to vector<32xf32>
    %249 = vector.shape_cast %248 : vector<32xf32> to vector<32x1xf32>
    %cst_125 = arith.constant 3.200000e+01 : f32
    %250 = vector.broadcast %cst_125 : f32 to vector<32x1xf32>
    %251 = arith.divf %249, %250 : vector<32x1xf32>
    %252 = vector.broadcast %244 : vector<32x1xf32> to vector<32x32xf32>
    %253 = arith.subf %240, %252 : vector<32x32xf32>
    %cst_126 = arith.constant 9.99999974E-6 : f32
    %254 = vector.broadcast %cst_126 : f32 to vector<32x1xf32>
    %255 = arith.addf %251, %254 : vector<32x1xf32>
    %256 = math.rsqrt %255 : vector<32x1xf32>
    %257 = vector.broadcast %256 : vector<32x1xf32> to vector<32x32xf32>
    %258 = arith.mulf %253, %257 : vector<32x32xf32>
    %259 = vector.broadcast %187 : vector<1x32xf32> to vector<32x32xf32>
    %260 = arith.mulf %258, %259 : vector<32x32xf32>
    %261 = vector.broadcast %188 : vector<1x32xf32> to vector<32x32xf32>
    %262 = arith.addf %260, %261 : vector<32x32xf32>
    %c0_127 = arith.constant 0 : index
    %c128_128 = arith.constant 128 : index
    %263 = vector.load %arg7[%c0_127, %c128_128] : memref<32x192xf32, #tpu.memory_space<vmem>>, vector<32x32xf32>
    %cst_129 = arith.constant dense<0.000000e+00> : vector<32x32xf32>
    %264 = tpu.matmul %262, %263, %cst_129 {dimension_numbers = #tpu.dot_dimension_numbers<[1], [0], [0], [1], [0, 0, 1, 1], [], []>} : vector<32x32xf32>, vector<32x32xf32>, vector<32x32xf32> -> vector<32x32xf32>
    %265 = vector.broadcast %189 : vector<1x32xf32> to vector<32x32xf32>
    %266 = arith.addf %264, %265 : vector<32x32xf32>
    %cst_130 = arith.constant 5.000000e-01 : f32
    %267 = vector.broadcast %cst_130 : f32 to vector<32x32xf32>
    %268 = arith.mulf %267, %266 : vector<32x32xf32>
    %cst_131 = arith.constant 0.707106769 : f32
    %269 = vector.broadcast %cst_131 : f32 to vector<32x32xf32>
    %270 = arith.mulf %266, %269 : vector<32x32xf32>
    %271 = math.absf %270 : vector<32x32xf32>
    %cst_132 = arith.constant 0.327591091 : f32
    %272 = vector.broadcast %cst_132 : f32 to vector<32x32xf32>
    %273 = arith.mulf %272, %271 : vector<32x32xf32>
    %cst_133 = arith.constant 1.000000e+00 : f32
    %274 = vector.broadcast %cst_133 : f32 to vector<32x32xf32>
    %275 = arith.addf %274, %273 : vector<32x32xf32>
    %cst_134 = arith.constant 1.000000e+00 : f32
    %276 = vector.broadcast %cst_134 : f32 to vector<32x32xf32>
    %277 = arith.divf %276, %275 : vector<32x32xf32>
    %cst_135 = arith.constant 1.06140542 : f32
    %278 = vector.broadcast %cst_135 : f32 to vector<32x32xf32>
    %279 = arith.mulf %278, %277 : vector<32x32xf32>
    %cst_136 = arith.constant -1.45315206 : f32
    %280 = vector.broadcast %cst_136 : f32 to vector<32x32xf32>
    %281 = arith.addf %279, %280 : vector<32x32xf32>
    %282 = arith.mulf %281, %277 : vector<32x32xf32>
    %cst_137 = arith.constant 1.42141378 : f32
    %283 = vector.broadcast %cst_137 : f32 to vector<32x32xf32>
    %284 = arith.addf %282, %283 : vector<32x32xf32>
    %285 = arith.mulf %284, %277 : vector<32x32xf32>
    %cst_138 = arith.constant -0.284496725 : f32
    %286 = vector.broadcast %cst_138 : f32 to vector<32x32xf32>
    %287 = arith.addf %285, %286 : vector<32x32xf32>
    %288 = arith.mulf %287, %277 : vector<32x32xf32>
    %cst_139 = arith.constant 0.254829586 : f32
    %289 = vector.broadcast %cst_139 : f32 to vector<32x32xf32>
    %290 = arith.addf %288, %289 : vector<32x32xf32>
    %291 = arith.mulf %290, %277 : vector<32x32xf32>
    %cst_140 = arith.constant 0.000000e+00 : f32
    %292 = vector.broadcast %cst_140 : f32 to vector<32x32xf32>
    %293 = arith.subf %292, %271 : vector<32x32xf32>
    %294 = arith.mulf %293, %271 : vector<32x32xf32>
    %295 = math.exp %294 : vector<32x32xf32>
    %296 = arith.mulf %291, %295 : vector<32x32xf32>
    %cst_141 = arith.constant 1.000000e+00 : f32
    %297 = vector.broadcast %cst_141 : f32 to vector<32x32xf32>
    %298 = arith.subf %297, %296 : vector<32x32xf32>
    %cst_142 = arith.constant 0.000000e+00 : f32
    %299 = vector.broadcast %cst_142 : f32 to vector<32x32xf32>
    %300 = arith.cmpf oge, %270, %299 : vector<32x32xf32>
    %cst_143 = arith.constant 0.000000e+00 : f32
    %301 = vector.broadcast %cst_143 : f32 to vector<32x32xf32>
    %302 = arith.subf %301, %298 : vector<32x32xf32>
    %303 = arith.select %300, %298, %302 : vector<32x32xi1>, vector<32x32xf32>
    %cst_144 = arith.constant 1.000000e+00 : f32
    %304 = vector.broadcast %cst_144 : f32 to vector<32x32xf32>
    %305 = arith.addf %304, %303 : vector<32x32xf32>
    %306 = arith.mulf %268, %305 : vector<32x32xf32>
    %c0_145 = arith.constant 0 : index
    %c160_146 = arith.constant 160 : index
    %307 = vector.load %arg7[%c0_145, %c160_146] : memref<32x192xf32, #tpu.memory_space<vmem>>, vector<32x32xf32>
    %cst_147 = arith.constant dense<0.000000e+00> : vector<32x32xf32>
    %308 = tpu.matmul %306, %307, %cst_147 {dimension_numbers = #tpu.dot_dimension_numbers<[1], [0], [0], [1], [0, 0, 1, 1], [], []>} : vector<32x32xf32>, vector<32x32xf32>, vector<32x32xf32> -> vector<32x32xf32>
    %309 = vector.broadcast %190 : vector<1x32xf32> to vector<32x32xf32>
    %310 = arith.addf %308, %309 : vector<32x32xf32>
    %311 = arith.addf %240, %310 : vector<32x32xf32>
    %c2_148 = arith.constant 2 : index
    %c0_149 = arith.constant 0 : index
    %312 = vector.load %arg11[%c2_148, %c0_149] : memref<8x64xf32, #tpu.memory_space<vmem>>, vector<1x64xf32>
    %c0_150 = arith.constant 0 : index
    %c0_151 = arith.constant 0 : index
    %313 = vector.load %arg10[%c0_150, %c0_151] : memref<32x576xf32, #tpu.memory_space<vmem>>, vector<32x576xf32>
    %cst_152 = arith.constant dense<0.000000e+00> : vector<32x576xf32>
    %314 = tpu.matmul %311, %313, %cst_152 {dimension_numbers = #tpu.dot_dimension_numbers<[1], [0], [0], [1], [0, 0, 1, 1], [], []>} : vector<32x32xf32>, vector<32x576xf32>, vector<32x576xf32> -> vector<32x576xf32>
    %c0_153 = arith.constant 0 : index
    %c0_154 = arith.constant 0 : index
    %c0_155 = arith.constant 0 : index
    %315 = vector.load %arg9[%c0_153, %c0_154, %c0_155] : memref<9x8x32xf32, #tpu.memory_space<vmem>>, vector<1x8x32xf32>
    %316 = vector.shape_cast %315 : vector<1x8x32xf32> to vector<8x32xf32>
    %317 = vector.extract_strided_slice %314 {offsets = [0, 0], sizes = [32, 64], strides = [1, 1]} : vector<32x576xf32> to vector<32x64xf32>
    %cst_156 = arith.constant dense<0.000000e+00> : vector<8x64xf32>
    %318 = tpu.matmul %316, %317, %cst_156 {dimension_numbers = #tpu.dot_dimension_numbers<[1], [0], [0], [1], [0, 0, 1, 1], [], []>} : vector<8x32xf32>, vector<32x64xf32>, vector<8x64xf32> -> vector<8x64xf32>
    %c1_157 = arith.constant 1 : index
    %c0_158 = arith.constant 0 : index
    %c0_159 = arith.constant 0 : index
    %319 = vector.load %arg9[%c1_157, %c0_158, %c0_159] : memref<9x8x32xf32, #tpu.memory_space<vmem>>, vector<1x8x32xf32>
    %320 = vector.shape_cast %319 : vector<1x8x32xf32> to vector<8x32xf32>
    %321 = vector.extract_strided_slice %314 {offsets = [0, 64], sizes = [32, 64], strides = [1, 1]} : vector<32x576xf32> to vector<32x64xf32>
    %cst_160 = arith.constant dense<0.000000e+00> : vector<8x64xf32>
    %322 = tpu.matmul %320, %321, %cst_160 {dimension_numbers = #tpu.dot_dimension_numbers<[1], [0], [0], [1], [0, 0, 1, 1], [], []>} : vector<8x32xf32>, vector<32x64xf32>, vector<8x64xf32> -> vector<8x64xf32>
    %323 = arith.addf %318, %322 : vector<8x64xf32>
    %c2_161 = arith.constant 2 : index
    %c0_162 = arith.constant 0 : index
    %c0_163 = arith.constant 0 : index
    %324 = vector.load %arg9[%c2_161, %c0_162, %c0_163] : memref<9x8x32xf32, #tpu.memory_space<vmem>>, vector<1x8x32xf32>
    %325 = vector.shape_cast %324 : vector<1x8x32xf32> to vector<8x32xf32>
    %326 = vector.extract_strided_slice %314 {offsets = [0, 128], sizes = [32, 64], strides = [1, 1]} : vector<32x576xf32> to vector<32x64xf32>
    %cst_164 = arith.constant dense<0.000000e+00> : vector<8x64xf32>
    %327 = tpu.matmul %325, %326, %cst_164 {dimension_numbers = #tpu.dot_dimension_numbers<[1], [0], [0], [1], [0, 0, 1, 1], [], []>} : vector<8x32xf32>, vector<32x64xf32>, vector<8x64xf32> -> vector<8x64xf32>
    %328 = arith.addf %323, %327 : vector<8x64xf32>
    %c3_165 = arith.constant 3 : index
    %c0_166 = arith.constant 0 : index
    %c0_167 = arith.constant 0 : index
    %329 = vector.load %arg9[%c3_165, %c0_166, %c0_167] : memref<9x8x32xf32, #tpu.memory_space<vmem>>, vector<1x8x32xf32>
    %330 = vector.shape_cast %329 : vector<1x8x32xf32> to vector<8x32xf32>
    %331 = vector.extract_strided_slice %314 {offsets = [0, 192], sizes = [32, 64], strides = [1, 1]} : vector<32x576xf32> to vector<32x64xf32>
    %cst_168 = arith.constant dense<0.000000e+00> : vector<8x64xf32>
    %332 = tpu.matmul %330, %331, %cst_168 {dimension_numbers = #tpu.dot_dimension_numbers<[1], [0], [0], [1], [0, 0, 1, 1], [], []>} : vector<8x32xf32>, vector<32x64xf32>, vector<8x64xf32> -> vector<8x64xf32>
    %333 = arith.addf %328, %332 : vector<8x64xf32>
    %c4_169 = arith.constant 4 : index
    %c0_170 = arith.constant 0 : index
    %c0_171 = arith.constant 0 : index
    %334 = vector.load %arg9[%c4_169, %c0_170, %c0_171] : memref<9x8x32xf32, #tpu.memory_space<vmem>>, vector<1x8x32xf32>
    %335 = vector.shape_cast %334 : vector<1x8x32xf32> to vector<8x32xf32>
    %336 = vector.extract_strided_slice %314 {offsets = [0, 256], sizes = [32, 64], strides = [1, 1]} : vector<32x576xf32> to vector<32x64xf32>
    %cst_172 = arith.constant dense<0.000000e+00> : vector<8x64xf32>
    %337 = tpu.matmul %335, %336, %cst_172 {dimension_numbers = #tpu.dot_dimension_numbers<[1], [0], [0], [1], [0, 0, 1, 1], [], []>} : vector<8x32xf32>, vector<32x64xf32>, vector<8x64xf32> -> vector<8x64xf32>
    %338 = arith.addf %333, %337 : vector<8x64xf32>
    %c5_173 = arith.constant 5 : index
    %c0_174 = arith.constant 0 : index
    %c0_175 = arith.constant 0 : index
    %339 = vector.load %arg9[%c5_173, %c0_174, %c0_175] : memref<9x8x32xf32, #tpu.memory_space<vmem>>, vector<1x8x32xf32>
    %340 = vector.shape_cast %339 : vector<1x8x32xf32> to vector<8x32xf32>
    %341 = vector.extract_strided_slice %314 {offsets = [0, 320], sizes = [32, 64], strides = [1, 1]} : vector<32x576xf32> to vector<32x64xf32>
    %cst_176 = arith.constant dense<0.000000e+00> : vector<8x64xf32>
    %342 = tpu.matmul %340, %341, %cst_176 {dimension_numbers = #tpu.dot_dimension_numbers<[1], [0], [0], [1], [0, 0, 1, 1], [], []>} : vector<8x32xf32>, vector<32x64xf32>, vector<8x64xf32> -> vector<8x64xf32>
    %343 = arith.addf %338, %342 : vector<8x64xf32>
    %c6_177 = arith.constant 6 : index
    %c0_178 = arith.constant 0 : index
    %c0_179 = arith.constant 0 : index
    %344 = vector.load %arg9[%c6_177, %c0_178, %c0_179] : memref<9x8x32xf32, #tpu.memory_space<vmem>>, vector<1x8x32xf32>
    %345 = vector.shape_cast %344 : vector<1x8x32xf32> to vector<8x32xf32>
    %346 = vector.extract_strided_slice %314 {offsets = [0, 384], sizes = [32, 64], strides = [1, 1]} : vector<32x576xf32> to vector<32x64xf32>
    %cst_180 = arith.constant dense<0.000000e+00> : vector<8x64xf32>
    %347 = tpu.matmul %345, %346, %cst_180 {dimension_numbers = #tpu.dot_dimension_numbers<[1], [0], [0], [1], [0, 0, 1, 1], [], []>} : vector<8x32xf32>, vector<32x64xf32>, vector<8x64xf32> -> vector<8x64xf32>
    %348 = arith.addf %343, %347 : vector<8x64xf32>
    %c7_181 = arith.constant 7 : index
    %c0_182 = arith.constant 0 : index
    %c0_183 = arith.constant 0 : index
    %349 = vector.load %arg9[%c7_181, %c0_182, %c0_183] : memref<9x8x32xf32, #tpu.memory_space<vmem>>, vector<1x8x32xf32>
    %350 = vector.shape_cast %349 : vector<1x8x32xf32> to vector<8x32xf32>
    %351 = vector.extract_strided_slice %314 {offsets = [0, 448], sizes = [32, 64], strides = [1, 1]} : vector<32x576xf32> to vector<32x64xf32>
    %cst_184 = arith.constant dense<0.000000e+00> : vector<8x64xf32>
    %352 = tpu.matmul %350, %351, %cst_184 {dimension_numbers = #tpu.dot_dimension_numbers<[1], [0], [0], [1], [0, 0, 1, 1], [], []>} : vector<8x32xf32>, vector<32x64xf32>, vector<8x64xf32> -> vector<8x64xf32>
    %353 = arith.addf %348, %352 : vector<8x64xf32>
    %c8_185 = arith.constant 8 : index
    %c0_186 = arith.constant 0 : index
    %c0_187 = arith.constant 0 : index
    %354 = vector.load %arg9[%c8_185, %c0_186, %c0_187] : memref<9x8x32xf32, #tpu.memory_space<vmem>>, vector<1x8x32xf32>
    %355 = vector.shape_cast %354 : vector<1x8x32xf32> to vector<8x32xf32>
    %356 = vector.extract_strided_slice %314 {offsets = [0, 512], sizes = [32, 64], strides = [1, 1]} : vector<32x576xf32> to vector<32x64xf32>
    %cst_188 = arith.constant dense<0.000000e+00> : vector<8x64xf32>
    %357 = tpu.matmul %355, %356, %cst_188 {dimension_numbers = #tpu.dot_dimension_numbers<[1], [0], [0], [1], [0, 0, 1, 1], [], []>} : vector<8x32xf32>, vector<32x64xf32>, vector<8x64xf32> -> vector<8x64xf32>
    %358 = arith.addf %353, %357 : vector<8x64xf32>
    %359 = vector.broadcast %312 : vector<1x64xf32> to vector<8x64xf32>
    %360 = arith.addf %358, %359 : vector<8x64xf32>
    %c0_189 = arith.constant 0 : index
    %c0_190 = arith.constant 0 : index
    %361 = vector.load %arg12[%c0_189, %c0_190] : memref<8x64xf32, #tpu.memory_space<vmem>>, vector<8x64xf32>
    tpu.vector_store %arg12[%c0_189, %c0_190], %360 {strides = array<i32>} : memref<8x64xf32, #tpu.memory_space<vmem>>, vector<8x64xf32>,
    return
  }
  func.func @transform_0(%arg0: i32) -> (i32, i32, i32) {
    %c0_i32 = arith.constant 0 : i32
    %c0_i32_0 = arith.constant 0 : i32
    %c0_i32_1 = arith.constant 0 : i32
    return %arg0, %c0_i32, %c0_i32_0 : i32, i32, i32
  }
  func.func @transform_1(%arg0: i32) -> (i32, i32) {
    %c0_i32 = arith.constant 0 : i32
    %c0_i32_0 = arith.constant 0 : i32
    %c0_i32_1 = arith.constant 0 : i32
    return %c0_i32, %c0_i32_0 : i32, i32
  }
  func.func @transform_2(%arg0: i32) -> (i32, i32) {
    %c0_i32 = arith.constant 0 : i32
    %c0_i32_0 = arith.constant 0 : i32
    %c0_i32_1 = arith.constant 0 : i32
    return %c0_i32, %c0_i32_0 : i32, i32
  }
  func.func @transform_3(%arg0: i32) -> (i32, i32) {
    %c0_i32 = arith.constant 0 : i32
    %c0_i32_0 = arith.constant 0 : i32
    %c0_i32_1 = arith.constant 0 : i32
    return %c0_i32, %c0_i32_0 : i32, i32
  }
  func.func @transform_4(%arg0: i32) -> (i32, i32, i32) {
    %c0_i32 = arith.constant 0 : i32
    %c0_i32_0 = arith.constant 0 : i32
    %c0_i32_1 = arith.constant 0 : i32
    %c0_i32_2 = arith.constant 0 : i32
    return %c0_i32, %c0_i32_0, %c0_i32_1 : i32, i32, i32
  }
  func.func @transform_5(%arg0: i32) -> (i32, i32) {
    %c0_i32 = arith.constant 0 : i32
    %c0_i32_0 = arith.constant 0 : i32
    %c0_i32_1 = arith.constant 0 : i32
    return %c0_i32, %c0_i32_0 : i32, i32
  }
  func.func @transform_6(%arg0: i32) -> (i32, i32) {
    %c0_i32 = arith.constant 0 : i32
    %c0_i32_0 = arith.constant 0 : i32
    %c0_i32_1 = arith.constant 0 : i32
    return %c0_i32, %c0_i32_0 : i32, i32
  }
  func.func @transform_7(%arg0: i32) -> (i32, i32) {
    %c0_i32 = arith.constant 0 : i32
    %c0_i32_0 = arith.constant 0 : i32
    %c0_i32_1 = arith.constant 0 : i32
    return %c0_i32, %c0_i32_0 : i32, i32
  }
  func.func @transform_8(%arg0: i32) -> (i32, i32, i32) {
    %c0_i32 = arith.constant 0 : i32
    %c0_i32_0 = arith.constant 0 : i32
    %c0_i32_1 = arith.constant 0 : i32
    %c0_i32_2 = arith.constant 0 : i32
    return %c0_i32, %c0_i32_0, %c0_i32_1 : i32, i32, i32
  }
  func.func @transform_9(%arg0: i32) -> (i32, i32) {
    %c0_i32 = arith.constant 0 : i32
    %c0_i32_0 = arith.constant 0 : i32
    %c0_i32_1 = arith.constant 0 : i32
    return %c0_i32, %c0_i32_0 : i32, i32
  }
  func.func @transform_10(%arg0: i32) -> (i32, i32) {
    %c0_i32 = arith.constant 0 : i32
    %c0_i32_0 = arith.constant 0 : i32
    %c0_i32_1 = arith.constant 0 : i32
    return %c0_i32, %c0_i32_0 : i32, i32
  }
  func.func @transform_11(%arg0: i32) -> (i32, i32) {
    %c0_i32 = arith.constant 0 : i32
    %c0_i32_0 = arith.constant 0 : i32
    return %arg0, %c0_i32 : i32, i32
  }
}

</mosaic_0001>

<llo_original>
// kernel: t2t_forward.1
$region0: #{t2t_forward.1}
  #allocation0 [shape = 'u32[]', space=smem, size = 0x4, offset = 0x4, fixed_abs, tag = 'smem constant byte address 0x4 - core index']
  #allocation1 [shape = 'u32[72,128]{1,0:T(1,128)}', space=vmem, size = 0x9000, scoped, tag = 'internal scratch']
  %s0 = inlined_call_operand.vmem [shape: f32[2,64,56], index: 0, kind: input, shape index: {}]
  %s1 = inlined_call_operand.vmem [shape: f32[56,32], index: 1, kind: input, shape index: {}]
  %s2 = inlined_call_operand.vmem [shape: f32[32,192], index: 2, kind: input, shape index: {}]
  %s3 = inlined_call_operand.vmem [shape: f32[8,32], index: 3, kind: input, shape index: {}]
  %s4 = inlined_call_operand.vmem [shape: f32[9,32,128], index: 4, kind: input, shape index: {}]
  %s5 = inlined_call_operand.vmem [shape: f32[32,288], index: 5, kind: input, shape index: {}]
  %s6 = inlined_call_operand.vmem [shape: f32[32,192], index: 6, kind: input, shape index: {}]
  %s7 = inlined_call_operand.vmem [shape: f32[8,32], index: 7, kind: input, shape index: {}]
  %s8 = inlined_call_operand.vmem [shape: f32[9,8,32], index: 8, kind: input, shape index: {}]
  %s9 = inlined_call_operand.vmem [shape: f32[32,576], index: 9, kind: input, shape index: {}]
  %s10 = inlined_call_operand.vmem [shape: f32[8,64], index: 10, kind: input, shape index: {}]
  %s11 = inlined_call_operand.hbm [shape: f32[8,64], index: 11, kind: output, shape index: {}]
  %s12 = sld [smem:[#allocation0]]
  $region54: #{t2t_forward.1} parent=0
    _
  %s14 = ssub.s32 1, %s12
  %s15 = scalar_select 0, %s14, %s12
  $region1: #{t2t_forward.1} parent=0
    #allocation2 [shape = 'u8[4096]{0}', space=vmem, size = 0x1000, scoped, tag = 'output window, operand 0, single buffered']
    #allocation3 [shape = 's32[1]{0}', space=sflag, size = 0x4, scoped, tag = 'scoped memory for t2t_forward.1']
    %16 = vsyncpa [#allocation3], 0
    // Predicated region
    $region2: #{t2t_forward.1} parent=1 // pred_check
      _
    $region3: #{t2t_forward.1} parent=1 // pred_check_branch
      %18 = sbr.rel (0) target = $region5
    $region4: #{t2t_forward.1} parent=1 // pred_region
      _
    $region5: #{t2t_forward.1} parent=1 // pred_fallthru
      _
    // Predicated region
    $region6: #{t2t_forward.1} parent=1 // pred_check
      _
    $region7: #{t2t_forward.1} parent=1 // pred_check_branch
      %20 = sbr.rel (0) target = $region9
    $region8: #{t2t_forward.1} parent=1 // pred_region
      _
    $region9: #{t2t_forward.1} parent=1 // pred_fallthru
      _
    // Predicated region
    $region10: #{t2t_forward.1} parent=1 // pred_check
      _
    $region11: #{t2t_forward.1} parent=1 // pred_check_branch
      %22 = sbr.rel (0) target = $region13
    $region12: #{t2t_forward.1} parent=1 // pred_region
      _
    $region13: #{t2t_forward.1} parent=1 // pred_fallthru
      _
    // Predicated region
    $region14: #{t2t_forward.1} parent=1 // pred_check
      _
    $region15: #{t2t_forward.1} parent=1 // pred_check_branch
      %24 = sbr.rel (0) target = $region17
    $region16: #{t2t_forward.1} parent=1 // pred_region
      _
    $region17: #{t2t_forward.1} parent=1 // pred_fallthru
      _
    // Predicated region
    $region18: #{t2t_forward.1} parent=1 // pred_check
      _
    $region19: #{t2t_forward.1} parent=1 // pred_check_branch
      %26 = sbr.rel (0) target = $region21
    $region20: #{t2t_forward.1} parent=1 // pred_region
      _
    $region21: #{t2t_forward.1} parent=1 // pred_fallthru
      _
    // Predicated region
    $region22: #{t2t_forward.1} parent=1 // pred_check
      _
    $region23: #{t2t_forward.1} parent=1 // pred_check_branch
      %28 = sbr.rel (0) target = $region25
    $region24: #{t2t_forward.1} parent=1 // pred_region
      _
    $region25: #{t2t_forward.1} parent=1 // pred_fallthru
      _
    // Predicated region
    $region26: #{t2t_forward.1} parent=1 // pred_check
      _
    $region27: #{t2t_forward.1} parent=1 // pred_check_branch
      %30 = sbr.rel (0) target = $region29
    $region28: #{t2t_forward.1} parent=1 // pred_region
      _
    $region29: #{t2t_forward.1} parent=1 // pred_fallthru
      _
    // Predicated region
    $region30: #{t2t_forward.1} parent=1 // pred_check
      _
    $region31: #{t2t_forward.1} parent=1 // pred_check_branch
      %32 = sbr.rel (0) target = $region33
    $region32: #{t2t_forward.1} parent=1 // pred_region
      _
    $region33: #{t2t_forward.1} parent=1 // pred_fallthru
      _
    // Predicated region
    $region34: #{t2t_forward.1} parent=1 // pred_check
      _
    $region35: #{t2t_forward.1} parent=1 // pred_check_branch
      %34 = sbr.rel (0) target = $region37
    $region36: #{t2t_forward.1} parent=1 // pred_region
      _
    $region37: #{t2t_forward.1} parent=1 // pred_fallthru
      _
    // Predicated region
    $region38: #{t2t_forward.1} parent=1 // pred_check
      _
    $region39: #{t2t_forward.1} parent=1 // pred_check_branch
      %36 = sbr.rel (0) target = $region41
    $region40: #{t2t_forward.1} parent=1 // pred_region
      _
    $region41: #{t2t_forward.1} parent=1 // pred_fallthru
      _
    // Predicated region
    $region42: #{t2t_forward.1} parent=1 // pred_check
      _
    $region43: #{t2t_forward.1} parent=1 // pred_check_branch
      %38 = sbr.rel (0) target = $region45
    $region44: #{t2t_forward.1} parent=1 // pred_region
      _
    $region45: #{t2t_forward.1} parent=1 // pred_fallthru
      _
    %v39 = vld [vmem:[%s0] sm:$0xff]
    %v40 = vld [vmem:[%s0 + $0x8] sm:$0xff]
    %v41 = vld [vmem:[%s0 + $0x10] sm:$0xff]
    %v42 = vld [vmem:[%s0 + $0x18] sm:$0xff]
    %v43 = vld [vmem:[%s0 + $0x20] sm:$0xff]
    %v44 = vld [vmem:[%s0 + $0x28] sm:$0xff]
    %v45 = vld [vmem:[%s0 + $0x30] sm:$0xff]
    %v46 = vld [vmem:[%s0 + $0x38] sm:$0xff]
    %v47 = vld [vmem:[%s0 + $0x40] sm:$0xff]
    %v48 = vld [vmem:[%s0 + $0x48] sm:$0xff]
    %v49 = vld [vmem:[%s0 + $0x50] sm:$0xff]
    %v50 = vld [vmem:[%s0 + $0x58] sm:$0xff]
    %v51 = vld [vmem:[%s0 + $0x60] sm:$0xff]
    %v52 = vld [vmem:[%s0 + $0x68] sm:$0xff]
    %v53 = vld [vmem:[%s0 + $0x70] sm:$0xff]
    %v54 = vld [vmem:[%s0 + $0x78] sm:$0xff]
    %v55 = vld [vmem:[%s1] sm:$0xff]
    %v56 = vld [vmem:[%s1 + $0x8] sm:$0xff]
    %v57 = vld [vmem:[%s1 + $0x10] sm:$0xff]
    %v58 = vld [vmem:[%s1 + $0x18] sm:$0xff]
    %v59 = vld [vmem:[%s1 + $0x20] sm:$0xff]
    %v60 = vld [vmem:[%s1 + $0x28] sm:$0xff]
    %v61 = vld [vmem:[%s1 + $0x30] sm:$0xff]
    %v62 = vld [vmem:[%s10] sm:$0x1]
    %v63 = vperm.slane %v62, 0
    %vm64 = vcmask 457728
    %v66 = vsel %vm64, %v39, 0
    %v69 = vsel %vm64, %v40, 0
    %v72 = vsel %vm64, %v41, 0
    %v75 = vsel %vm64, %v42, 0
    %v78 = vsel %vm64, %v43, 0
    %v81 = vsel %vm64, %v44, 0
    %v84 = vsel %vm64, %v45, 0
    %v87 = vsel %vm64, %v46, 0
    %v90 = vsel %vm64, %v47, 0
    %v93 = vsel %vm64, %v48, 0
    %v96 = vsel %vm64, %v49, 0
    %v99 = vsel %vm64, %v50, 0
    %v102 = vsel %vm64, %v51, 0
    %v105 = vsel %vm64, %v52, 0
    %v108 = vsel %vm64, %v53, 0
    %v111 = vsel %vm64, %v54, 0
    %113 = vmatpush.msra.mxu0 0.0
    %114 = vmatpush.msra.mxu0 0.0
    %115 = vmatpush.msra.mxu0 0.0
    %116 = vmatpush.msra.mxu0 0.0
    %117 = vmatpush.msra.mxu0 0.0
    %118 = vmatpush.msra.mxu0 0.0
    %119 = vmatpush.msra.mxu0 0.0
    %120 = vmatpush.msra.mxu0 0.0
    %121 = vmatpush.msra.mxu0 0.0
    %122 = vmatpush.msra.mxu0 %v61
    %123 = vmatpush.msra.mxu0 %v60
    %124 = vmatpush.msra.mxu0 %v59
    %125 = vmatpush.msra.mxu0 %v58
    %126 = vmatpush.msra.mxu0 %v57
    %127 = vmatpush.msra.mxu0 %v56
    %128 = vmatpush.msra.mxu0 %v55
    %129 = vmatmul.f32.gmra.mxu0 %v66
    %v130 = vpop.f32.mrf.mxu0
    %v131 = vadd.f32 %v63, %v130
    %132 = vmatmul.f32.gmra.mxu0 %v69
    %v133 = vpop.f32.mrf.mxu0
    %v134 = vadd.f32 %v63, %v133
    %135 = vmatmul.f32.gmra.mxu0 %v72
    %v136 = vpop.f32.mrf.mxu0
    %v137 = vadd.f32 %v63, %v136
    %138 = vmatmul.f32.gmra.mxu0 %v75
    %v139 = vpop.f32.mrf.mxu0
    %v140 = vadd.f32 %v63, %v139
    %141 = vmatmul.f32.gmra.mxu0 %v78
    %v142 = vpop.f32.mrf.mxu0
    %v143 = vadd.f32 %v63, %v142
    %144 = vmatmul.f32.gmra.mxu0 %v81
    %v145 = vpop.f32.mrf.mxu0
    %v146 = vadd.f32 %v63, %v145
    %147 = vmatmul.f32.gmra.mxu0 %v84
    %v148 = vpop.f32.mrf.mxu0
    %v149 = vadd.f32 %v63, %v148
    %150 = vmatmul.f32.gmra.mxu0 %v87
    %v151 = vpop.f32.mrf.mxu0
    %v152 = vadd.f32 %v63, %v151
    %153 = vmatmul.f32.gmra.mxu0 %v90
    %v154 = vpop.f32.mrf.mxu0
    %v155 = vadd.f32 %v63, %v154
    %156 = vmatmul.f32.gmra.mxu0 %v93
    %v157 = vpop.f32.mrf.mxu0
    %v158 = vadd.f32 %v63, %v157
    %159 = vmatmul.f32.gmra.mxu0 %v96
    %v160 = vpop.f32.mrf.mxu0
    %v161 = vadd.f32 %v63, %v160
    %162 = vmatmul.f32.gmra.mxu0 %v99
    %v163 = vpop.f32.mrf.mxu0
    %v164 = vadd.f32 %v63, %v163
    %165 = vmatmul.f32.gmra.mxu0 %v102
    %v166 = vpop.f32.mrf.mxu0
    %v167 = vadd.f32 %v63, %v166
    %168 = vmatmul.f32.gmra.mxu0 %v105
    %v169 = vpop.f32.mrf.mxu0
    %v170 = vadd.f32 %v63, %v169
    %171 = vmatmul.f32.gmra.mxu0 %v108
    %v172 = vpop.f32.mrf.mxu0
    %v173 = vadd.f32 %v63, %v172
    %174 = vmatmul.f32.gmra.mxu0 %v111
    %v175 = vpop.f32.mrf.mxu0
    %v176 = vadd.f32 %v63, %v175
    %177 = vdwg.mxu0
    %v178 = vld [vmem:[%s3] sm:$0x1]
    %v179 = vld [vmem:[%s3 + $0x1] sm:$0x1]
    %v180 = vld [vmem:[%s3 + $0x2] sm:$0x1]
    %v181 = vld [vmem:[%s3 + $0x3] sm:$0x1]
    %v182 = vld [vmem:[%s3 + $0x4] sm:$0x1]
    %v183 = vld [vmem:[%s3 + $0x5] sm:$0x1]
    %v184 = vld [vmem:[%s3 + $0x6] sm:$0x1]
    %vm185 = vcmask 261120
    %v186 = vsel %vm185, %v131, 0.0
    %187 = vadd.xlane.f32.xlu0 %v186
    %v188 = vpop.xlane.xlu0 %187
    %v189 = vsel %vm185, %v134, 0.0
    %190 = vadd.xlane.f32.xlu0 %v189
    %v191 = vpop.xlane.xlu0 %190
    %v192 = vsel %vm185, %v137, 0.0
    %193 = vadd.xlane.f32.xlu0 %v192
    %v194 = vpop.xlane.xlu0 %193
    %v195 = vsel %vm185, %v140, 0.0
    %196 = vadd.xlane.f32.xlu0 %v195
    %v197 = vpop.xlane.xlu0 %196
    %v198 = vsel %vm185, %v143, 0.0
    %199 = vadd.xlane.f32.xlu0 %v198
    %v200 = vpop.xlane.xlu0 %199
    %v201 = vsel %vm185, %v146, 0.0
    %202 = vadd.xlane.f32.xlu0 %v201
    %v203 = vpop.xlane.xlu0 %202
    %v204 = vsel %vm185, %v149, 0.0
    %205 = vadd.xlane.f32.xlu0 %v204
    %v206 = vpop.xlane.xlu0 %205
    %v207 = vsel %vm185, %v152, 0.0
    %208 = vadd.xlane.f32.xlu0 %v207
    %v209 = vpop.xlane.xlu0 %208
    %v210 = vsel %vm185, %v155, 0.0
    %211 = vadd.xlane.f32.xlu0 %v210
    %v212 = vpop.xlane.xlu0 %211
    %v213 = vsel %vm185, %v158, 0.0
    %214 = vadd.xlane.f32.xlu0 %v213
    %v215 = vpop.xlane.xlu0 %214
    %v216 = vsel %vm185, %v161, 0.0
    %217 = vadd.xlane.f32.xlu0 %v216
    %v218 = vpop.xlane.xlu0 %217
    %v219 = vsel %vm185, %v164, 0.0
    %220 = vadd.xlane.f32.xlu0 %v219
    %v221 = vpop.xlane.xlu0 %220
    %v222 = vsel %vm185, %v167, 0.0
    %223 = vadd.xlane.f32.xlu0 %v222
    %v224 = vpop.xlane.xlu0 %223
    %v225 = vsel %vm185, %v170, 0.0
    %226 = vadd.xlane.f32.xlu0 %v225
    %v227 = vpop.xlane.xlu0 %226
    %v228 = vsel %vm185, %v173, 0.0
    %229 = vadd.xlane.f32.xlu0 %v228
    %v230 = vpop.xlane.xlu0 %229
    %v231 = vsel %vm185, %v176, 0.0
    %232 = vadd.xlane.f32.xlu0 %v231
    %v233 = vpop.xlane.xlu0 %232
    %v234 = vrcp.pop 32.0
    %v235 = vmul.f32 32.0, %v234
    %v236 = vsub.f32 1.0, %v235
    %v237 = vmul.f32 %v234, %v236
    %v238 = vadd.f32 %v234, %v237
    %vm239 = vweird.f32 %v234
    %v240 = vsel %vm239, %v234, %v238
    %v241 = vmul.f32 %v188, %v240
    %v242 = vmul.f32 %v191, %v240
    %v243 = vmul.f32 %v194, %v240
    %v244 = vmul.f32 %v197, %v240
    %v245 = vmul.f32 %v200, %v240
    %v246 = vmul.f32 %v203, %v240
    %v247 = vmul.f32 %v206, %v240
    %v248 = vmul.f32 %v209, %v240
    %v249 = vmul.f32 %v212, %v240
    %v250 = vmul.f32 %v215, %v240
    %v251 = vmul.f32 %v218, %v240
    %v252 = vmul.f32 %v221, %v240
    %v253 = vmul.f32 %v224, %v240
    %v254 = vmul.f32 %v227, %v240
    %v255 = vmul.f32 %v230, %v240
    %v256 = vmul.f32 %v233, %v240
    %v257 = vsub.f32 %v131, %v241
    %v258 = vsub.f32 %v134, %v242
    %v259 = vsub.f32 %v137, %v243
    %v260 = vsub.f32 %v140, %v244
    %v261 = vsub.f32 %v143, %v245
    %v262 = vsub.f32 %v146, %v246
    %v263 = vsub.f32 %v149, %v247
    %v264 = vsub.f32 %v152, %v248
    %v265 = vsub.f32 %v155, %v249
    %v266 = vsub.f32 %v158, %v250
    %v267 = vsub.f32 %v161, %v251
    %v268 = vsub.f32 %v164, %v252
    %v269 = vsub.f32 %v167, %v253
    %v270 = vsub.f32 %v170, %v254
    %v271 = vsub.f32 %v173, %v255
    %v272 = vsub.f32 %v176, %v256
    %v273 = vmul.f32 %v257, %v257
    %v274 = vmul.f32 %v258, %v258
    %v275 = vmul.f32 %v259, %v259
    %v276 = vmul.f32 %v260, %v260
    %v277 = vmul.f32 %v261, %v261
    %v278 = vmul.f32 %v262, %v262
    %v279 = vmul.f32 %v263, %v263
    %v280 = vmul.f32 %v264, %v264
    %v281 = vmul.f32 %v265, %v265
    %v282 = vmul.f32 %v266, %v266
    %v283 = vmul.f32 %v267, %v267
    %v284 = vmul.f32 %v268, %v268
    %v285 = vmul.f32 %v269, %v269
    %v286 = vmul.f32 %v270, %v270
    %v287 = vmul.f32 %v271, %v271
    %v288 = vmul.f32 %v272, %v272
    %v289 = vsel %vm185, %v273, 0.0
    %290 = vadd.xlane.f32.xlu0 %v289
    %v291 = vpop.xlane.xlu0 %290
    %v292 = vsel %vm185, %v274, 0.0
    %293 = vadd.xlane.f32.xlu0 %v292
    %v294 = vpop.xlane.xlu0 %293
    %v295 = vsel %vm185, %v275, 0.0
    %296 = vadd.xlane.f32.xlu0 %v295
    %v297 = vpop.xlane.xlu0 %296
    %v298 = vsel %vm185, %v276, 0.0
    %299 = vadd.xlane.f32.xlu0 %v298
    %v300 = vpop.xlane.xlu0 %299
    %v301 = vsel %vm185, %v277, 0.0
    %302 = vadd.xlane.f32.xlu0 %v301
    %v303 = vpop.xlane.xlu0 %302
    %v304 = vsel %vm185, %v278, 0.0
    %305 = vadd.xlane.f32.xlu0 %v304
    %v306 = vpop.xlane.xlu0 %305
    %v307 = vsel %vm185, %v279, 0.0
    %308 = vadd.xlane.f32.xlu0 %v307
    %v309 = vpop.xlane.xlu0 %308
    %v310 = vsel %vm185, %v280, 0.0
    %311 = vadd.xlane.f32.xlu0 %v310
    %v312 = vpop.xlane.xlu0 %311
    %v313 = vsel %vm185, %v281, 0.0
    %314 = vadd.xlane.f32.xlu0 %v313
    %v315 = vpop.xlane.xlu0 %314
    %v316 = vsel %vm185, %v282, 0.0
    %317 = vadd.xlane.f32.xlu0 %v316
    %v318 = vpop.xlane.xlu0 %317
    %v319 = vsel %vm185, %v283, 0.0
    %320 = vadd.xlane.f32.xlu0 %v319
    %v321 = vpop.xlane.xlu0 %320
    %v322 = vsel %vm185, %v284, 0.0
    %323 = vadd.xlane.f32.xlu0 %v322
    %v324 = vpop.xlane.xlu0 %323
    %v325 = vsel %vm185, %v285, 0.0
    %326 = vadd.xlane.f32.xlu0 %v325
    %v327 = vpop.xlane.xlu0 %326
    %v328 = vsel %vm185, %v286, 0.0
    %329 = vadd.xlane.f32.xlu0 %v328
    %v330 = vpop.xlane.xlu0 %329
    %v331 = vsel %vm185, %v287, 0.0
    %332 = vadd.xlane.f32.xlu0 %v331
    %v333 = vpop.xlane.xlu0 %332
    %v334 = vsel %vm185, %v288, 0.0
    %335 = vadd.xlane.f32.xlu0 %v334
    %v336 = vpop.xlane.xlu0 %335
    %v337 = vmul.f32 %v291, %v240
    %v338 = vmul.f32 %v294, %v240
    %v339 = vmul.f32 %v297, %v240
    %v340 = vmul.f32 %v300, %v240
    %v341 = vmul.f32 %v303, %v240
    %v342 = vmul.f32 %v306, %v240
    %v343 = vmul.f32 %v309, %v240
    %v344 = vmul.f32 %v312, %v240
    %v345 = vmul.f32 %v315, %v240
    %v346 = vmul.f32 %v318, %v240
    %v347 = vmul.f32 %v321, %v240
    %v348 = vmul.f32 %v324, %v240
    %v349 = vmul.f32 %v327, %v240
    %v350 = vmul.f32 %v330, %v240
    %v351 = vmul.f32 %v333, %v240
    %v352 = vmul.f32 %v336, %v240
    %v353 = vadd.f32 %v337, 1e-05
    %v354 = vadd.f32 %v338, 1e-05
    %v355 = vadd.f32 %v339, 1e-05
    %v356 = vadd.f32 %v340, 1e-05
    %v357 = vadd.f32 %v341, 1e-05
    %v358 = vadd.f32 %v342, 1e-05
    %v359 = vadd.f32 %v343, 1e-05
    %v360 = vadd.f32 %v344, 1e-05
    %v361 = vadd.f32 %v345, 1e-05
    %v362 = vadd.f32 %v346, 1e-05
    %v363 = vadd.f32 %v347, 1e-05
    %v364 = vadd.f32 %v348, 1e-05
    %v365 = vadd.f32 %v349, 1e-05
    %v366 = vadd.f32 %v350, 1e-05
    %v367 = vadd.f32 %v351, 1e-05
    %v368 = vadd.f32 %v352, 1e-05
    %v369 = vrsqrt.pop %v353
    %v370 = vmul.f32 %v369, %v353
    %v371 = vmul.f32 %v370, %v369
    %v372 = vmul.f32 0.5, %v371
    %v373 = vsub.f32 1.5, %v372
    %v374 = vmul.f32 %v369, %v373
    %vm375 = vweird.f32 %v353
    %vm376 = vweird.f32 %v369
    %vm377 = vmor %vm375, %vm376
    %v378 = vsel %vm377, %v369, %v374
    %v379 = vrsqrt.pop %v354
    %v380 = vmul.f32 %v379, %v354
    %v381 = vmul.f32 %v380, %v379
    %v382 = vmul.f32 0.5, %v381
    %v383 = vsub.f32 1.5, %v382
    %v384 = vmul.f32 %v379, %v383
    %vm385 = vweird.f32 %v354
    %vm386 = vweird.f32 %v379
    %vm387 = vmor %vm385, %vm386
    %v388 = vsel %vm387, %v379, %v384
    %v389 = vrsqrt.pop %v355
    %v390 = vmul.f32 %v389, %v355
    %v391 = vmul.f32 %v390, %v389
    %v392 = vmul.f32 0.5, %v391
    %v393 = vsub.f32 1.5, %v392
    %v394 = vmul.f32 %v389, %v393
    %vm395 = vweird.f32 %v355
    %vm396 = vweird.f32 %v389
    %vm397 = vmor %vm395, %vm396
    %v398 = vsel %vm397, %v389, %v394
    %v399 = vrsqrt.pop %v356
    %v400 = vmul.f32 %v399, %v356
    %v401 = vmul.f32 %v400, %v399
    %v402 = vmul.f32 0.5, %v401
    %v403 = vsub.f32 1.5, %v402
    %v404 = vmul.f32 %v399, %v403
    %vm405 = vweird.f32 %v356
    %vm406 = vweird.f32 %v399
    %vm407 = vmor %vm405, %vm406
    %v408 = vsel %vm407, %v399, %v404
    %v409 = vrsqrt.pop %v357
    %v410 = vmul.f32 %v409, %v357
    %v411 = vmul.f32 %v410, %v409
    %v412 = vmul.f32 0.5, %v411
    %v413 = vsub.f32 1.5, %v412
    %v414 = vmul.f32 %v409, %v413
    %vm415 = vweird.f32 %v357
    %vm416 = vweird.f32 %v409
    %vm417 = vmor %vm415, %vm416
    %v418 = vsel %vm417, %v409, %v414
    %v419 = vrsqrt.pop %v358
    %v420 = vmul.f32 %v419, %v358
    %v421 = vmul.f32 %v420, %v419
    %v422 = vmul.f32 0.5, %v421
    %v423 = vsub.f32 1.5, %v422
    %v424 = vmul.f32 %v419, %v423
    %vm425 = vweird.f32 %v358
    %vm426 = vweird.f32 %v419
    %vm427 = vmor %vm425, %vm426
    %v428 = vsel %vm427, %v419, %v424
    %v429 = vrsqrt.pop %v359
    %v430 = vmul.f32 %v429, %v359
    %v431 = vmul.f32 %v430, %v429
    %v432 = vmul.f32 0.5, %v431
    %v433 = vsub.f32 1.5, %v432
    %v434 = vmul.f32 %v429, %v433
    %vm435 = vweird.f32 %v359
    %vm436 = vweird.f32 %v429
    %vm437 = vmor %vm435, %vm436
    %v438 = vsel %vm437, %v429, %v434
    %v439 = vrsqrt.pop %v360
    %v440 = vmul.f32 %v439, %v360
    %v441 = vmul.f32 %v440, %v439
    %v442 = vmul.f32 0.5, %v441
    %v443 = vsub.f32 1.5, %v442
    %v444 = vmul.f32 %v439, %v443
    %vm445 = vweird.f32 %v360
    %vm446 = vweird.f32 %v439
    %vm447 = vmor %vm445, %vm446
    %v448 = vsel %vm447, %v439, %v444
    %v449 = vrsqrt.pop %v361
    %v450 = vmul.f32 %v449, %v361
    %v451 = vmul.f32 %v450, %v449
    %v452 = vmul.f32 0.5, %v451
    %v453 = vsub.f32 1.5, %v452
    %v454 = vmul.f32 %v449, %v453
    %vm455 = vweird.f32 %v361
    %vm456 = vweird.f32 %v449
    %vm457 = vmor %vm455, %vm456
    %v458 = vsel %vm457, %v449, %v454
    %v459 = vrsqrt.pop %v362
    %v460 = vmul.f32 %v459, %v362
    %v461 = vmul.f32 %v460, %v459
    %v462 = vmul.f32 0.5, %v461
    %v463 = vsub.f32 1.5, %v462
    %v464 = vmul.f32 %v459, %v463
    %vm465 = vweird.f32 %v362
    %vm466 = vweird.f32 %v459
    %vm467 = vmor %vm465, %vm466
    %v468 = vsel %vm467, %v459, %v464
    %v469 = vrsqrt.pop %v363
    %v470 = vmul.f32 %v469, %v363
    %v471 = vmul.f32 %v470, %v469
    %v472 = vmul.f32 0.5, %v471
    %v473 = vsub.f32 1.5, %v472
    %v474 = vmul.f32 %v469, %v473
    %vm475 = vweird.f32 %v363
    %vm476 = vweird.f32 %v469
    %vm477 = vmor %vm475, %vm476
    %v478 = vsel %vm477, %v469, %v474
    %v479 = vrsqrt.pop %v364
    %v480 = vmul.f32 %v479, %v364
    %v481 = vmul.f32 %v480, %v479
    %v482 = vmul.f32 0.5, %v481
    %v483 = vsub.f32 1.5, %v482
    %v484 = vmul.f32 %v479, %v483
    %vm485 = vweird.f32 %v364
    %vm486 = vweird.f32 %v479
    %vm487 = vmor %vm485, %vm486
    %v488 = vsel %vm487, %v479, %v484
    %v489 = vrsqrt.pop %v365
    %v490 = vmul.f32 %v489, %v365
    %v491 = vmul.f32 %v490, %v489
    %v492 = vmul.f32 0.5, %v491
    %v493 = vsub.f32 1.5, %v492
    %v494 = vmul.f32 %v489, %v493
    %vm495 = vweird.f32 %v365
    %vm496 = vweird.f32 %v489
    %vm497 = vmor %vm495, %vm496
    %v498 = vsel %vm497, %v489, %v494
    %v499 = vrsqrt.pop %v366
    %v500 = vmul.f32 %v499, %v366
    %v501 = vmul.f32 %v500, %v499
    %v502 = vmul.f32 0.5, %v501
    %v503 = vsub.f32 1.5, %v502
    %v504 = vmul.f32 %v499, %v503
    %vm505 = vweird.f32 %v366
    %vm506 = vweird.f32 %v499
    %vm507 = vmor %vm505, %vm506
    %v508 = vsel %vm507, %v499, %v504
    %v509 = vrsqrt.pop %v367
    %v510 = vmul.f32 %v509, %v367
    %v511 = vmul.f32 %v510, %v509
    %v512 = vmul.f32 0.5, %v511
    %v513 = vsub.f32 1.5, %v512
    %v514 = vmul.f32 %v509, %v513
    %vm515 = vweird.f32 %v367
    %vm516 = vweird.f32 %v509
    %vm517 = vmor %vm515, %vm516
    %v518 = vsel %vm517, %v509, %v514
    %v519 = vrsqrt.pop %v368
    %v520 = vmul.f32 %v519, %v368
    %v521 = vmul.f32 %v520, %v519
    %v522 = vmul.f32 0.5, %v521
    %v523 = vsub.f32 1.5, %v522
    %v524 = vmul.f32 %v519, %v523
    %vm525 = vweird.f32 %v368
    %vm526 = vweird.f32 %v519
    %vm527 = vmor %vm525, %vm526
    %v528 = vsel %vm527, %v519, %v524
    %v529 = vmul.f32 %v257, %v378
    %v530 = vmul.f32 %v258, %v388
    %v531 = vmul.f32 %v259, %v398
    %v532 = vmul.f32 %v260, %v408
    %v533 = vmul.f32 %v261, %v418
    %v534 = vmul.f32 %v262, %v428
    %v535 = vmul.f32 %v263, %v438
    %v536 = vmul.f32 %v264, %v448
    %v537 = vmul.f32 %v265, %v458
    %v538 = vmul.f32 %v266, %v468
    %v539 = vmul.f32 %v267, %v478
    %v540 = vmul.f32 %v268, %v488
    %v541 = vmul.f32 %v269, %v498
    %v542 = vmul.f32 %v270, %v508
    %v543 = vmul.f32 %v271, %v518
    %v544 = vmul.f32 %v272, %v528
    %v545 = vperm.slane %v178, 0
    %v546 = vmul.f32 %v529, %v545
    %v547 = vmul.f32 %v530, %v545
    %v548 = vmul.f32 %v531, %v545
    %v549 = vmul.f32 %v532, %v545
    %v550 = vmul.f32 %v533, %v545
    %v551 = vmul.f32 %v534, %v545
    %v552 = vmul.f32 %v535, %v545
    %v553 = vmul.f32 %v536, %v545
    %v554 = vmul.f32 %v537, %v545
    %v555 = vmul.f32 %v538, %v545
    %v556 = vmul.f32 %v539, %v545
    %v557 = vmul.f32 %v540, %v545
    %v558 = vmul.f32 %v541, %v545
    %v559 = vmul.f32 %v542, %v545
    %v560 = vmul.f32 %v543, %v545
    %v561 = vmul.f32 %v544, %v545
    %v562 = vperm.slane %v179, 0
    %v563 = vadd.f32 %v546, %v562
    %v564 = vadd.f32 %v547, %v562
    %v565 = vadd.f32 %v548, %v562
    %v566 = vadd.f32 %v549, %v562
    %v567 = vadd.f32 %v550, %v562
    %v568 = vadd.f32 %v551, %v562
    %v569 = vadd.f32 %v552, %v562
    %v570 = vadd.f32 %v553, %v562
    %v571 = vadd.f32 %v554, %v562
    %v572 = vadd.f32 %v555, %v562
    %v573 = vadd.f32 %v556, %v562
    %v574 = vadd.f32 %v557, %v562
    %v575 = vadd.f32 %v558, %v562
    %v576 = vadd.f32 %v559, %v562
    %v577 = vadd.f32 %v560, %v562
    %v578 = vadd.f32 %v561, %v562
    %v579 = vld [vmem:[%s2] sm:$0xff]
    %v580 = vld [vmem:[%s2 + $0x10] sm:$0xff]
    %v581 = vld [vmem:[%s2 + $0x20] sm:$0xff]
    %v582 = vld [vmem:[%s2 + $0x30] sm:$0xff]
    %v584 = vsel %vm185, %v563, 0
    %v587 = vsel %vm185, %v564, 0
    %v590 = vsel %vm185, %v565, 0
    %v593 = vsel %vm185, %v566, 0
    %v596 = vsel %vm185, %v567, 0
    %v599 = vsel %vm185, %v568, 0
    %v602 = vsel %vm185, %v569, 0
    %v605 = vsel %vm185, %v570, 0
    %v608 = vsel %vm185, %v571, 0
    %v611 = vsel %vm185, %v572, 0
    %v614 = vsel %vm185, %v573, 0
    %v617 = vsel %vm185, %v574, 0
    %v620 = vsel %vm185, %v575, 0
    %v623 = vsel %vm185, %v576, 0
    %v626 = vsel %vm185, %v577, 0
    %v629 = vsel %vm185, %v578, 0
    %631 = vmatpush.msra.mxu0 0.0
    %632 = vmatpush.msra.mxu0 0.0
    %633 = vmatpush.msra.mxu0 0.0
    %634 = vmatpush.msra.mxu0 0.0
    %635 = vmatpush.msra.mxu0 0.0
    %636 = vmatpush.msra.mxu0 0.0
    %637 = vmatpush.msra.mxu0 0.0
    %638 = vmatpush.msra.mxu0 0.0
    %639 = vmatpush.msra.mxu0 0.0
    %640 = vmatpush.msra.mxu0 0.0
    %641 = vmatpush.msra.mxu0 0.0
    %642 = vmatpush.msra.mxu0 0.0
    %643 = vmatpush.msra.mxu0 %v582
    %644 = vmatpush.msra.mxu0 %v581
    %645 = vmatpush.msra.mxu0 %v580
    %646 = vmatpush.msra.mxu0 %v579
    %647 = vmatmul.f32.gmra.mxu0 %v584
    %v648 = vpop.f32.mrf.mxu0
    %v649 = vadd.f32 0.0, %v648
    %650 = vmatmul.f32.gmra.mxu0 %v587
    %v651 = vpop.f32.mrf.mxu0
    %v652 = vadd.f32 0.0, %v651
    %653 = vmatmul.f32.gmra.mxu0 %v590
    %v654 = vpop.f32.mrf.mxu0
    %v655 = vadd.f32 0.0, %v654
    %656 = vmatmul.f32.gmra.mxu0 %v593
    %v657 = vpop.f32.mrf.mxu0
    %v658 = vadd.f32 0.0, %v657
    %659 = vmatmul.f32.gmra.mxu0 %v596
    %v660 = vpop.f32.mrf.mxu0
    %v661 = vadd.f32 0.0, %v660
    %662 = vmatmul.f32.gmra.mxu0 %v599
    %v663 = vpop.f32.mrf.mxu0
    %v664 = vadd.f32 0.0, %v663
    %665 = vmatmul.f32.gmra.mxu0 %v602
    %v666 = vpop.f32.mrf.mxu0
    %v667 = vadd.f32 0.0, %v666
    %668 = vmatmul.f32.gmra.mxu0 %v605
    %v669 = vpop.f32.mrf.mxu0
    %v670 = vadd.f32 0.0, %v669
    %671 = vmatmul.f32.gmra.mxu0 %v608
    %v672 = vpop.f32.mrf.mxu0
    %v673 = vadd.f32 0.0, %v672
    %674 = vmatmul.f32.gmra.mxu0 %v611
    %v675 = vpop.f32.mrf.mxu0
    %v676 = vadd.f32 0.0, %v675
    %677 = vmatmul.f32.gmra.mxu0 %v614
    %v678 = vpop.f32.mrf.mxu0
    %v679 = vadd.f32 0.0, %v678
    %680 = vmatmul.f32.gmra.mxu0 %v617
    %v681 = vpop.f32.mrf.mxu0
    %v682 = vadd.f32 0.0, %v681
    %683 = vmatmul.f32.gmra.mxu0 %v620
    %v684 = vpop.f32.mrf.mxu0
    %v685 = vadd.f32 0.0, %v684
    %686 = vmatmul.f32.gmra.mxu0 %v623
    %v687 = vpop.f32.mrf.mxu0
    %v688 = vadd.f32 0.0, %v687
    %689 = vmatmul.f32.gmra.mxu0 %v626
    %v690 = vpop.f32.mrf.mxu0
    %v691 = vadd.f32 0.0, %v690
    %692 = vmatmul.f32.gmra.mxu0 %v629
    %v693 = vpop.f32.mrf.mxu0
    %v694 = vadd.f32 0.0, %v693
    %695 = vdwg.mxu0
    %v696 = vmul.f32 %v649, 0.17677669
    %v697 = vmul.f32 %v652, 0.17677669
    %v698 = vmul.f32 %v655, 0.17677669
    %v699 = vmul.f32 %v658, 0.17677669
    %v700 = vmul.f32 %v661, 0.17677669
    %v701 = vmul.f32 %v664, 0.17677669
    %v702 = vmul.f32 %v667, 0.17677669
    %v703 = vmul.f32 %v670, 0.17677669
    %v704 = vmul.f32 %v673, 0.17677669
    %v705 = vmul.f32 %v676, 0.17677669
    %v706 = vmul.f32 %v679, 0.17677669
    %v707 = vmul.f32 %v682, 0.17677669
    %v708 = vmul.f32 %v685, 0.17677669
    %v709 = vmul.f32 %v688, 0.17677669
    %v710 = vmul.f32 %v691, 0.17677669
    %v711 = vmul.f32 %v694, 0.17677669
    %720 = vrot.lane.b32.xlu0 %v649, 96
    %v721 = vpop.permute.xlu0 %720
    %722 = vrot.lane.b32.xlu0 %v652, 96
    %v723 = vpop.permute.xlu0 %722
    %724 = vrot.lane.b32.xlu0 %v655, 96
    %v725 = vpop.permute.xlu0 %724
    %726 = vrot.lane.b32.xlu0 %v658, 96
    %v727 = vpop.permute.xlu0 %726
    %728 = vrot.lane.b32.xlu0 %v661, 96
    %v729 = vpop.permute.xlu0 %728
    %730 = vrot.lane.b32.xlu0 %v664, 96
    %v731 = vpop.permute.xlu0 %730
    %732 = vrot.lane.b32.xlu0 %v667, 96
    %v733 = vpop.permute.xlu0 %732
    %734 = vrot.lane.b32.xlu0 %v670, 96
    %v735 = vpop.permute.xlu0 %734
    %v737 = vsel %vm185, %v696, 0
    %v740 = vsel %vm185, %v697, 0
    %v743 = vsel %vm185, %v698, 0
    %v746 = vsel %vm185, %v699, 0
    %v749 = vsel %vm185, %v700, 0
    %v752 = vsel %vm185, %v701, 0
    %v755 = vsel %vm185, %v702, 0
    %v758 = vsel %vm185, %v703, 0
    %v760 = vsel %vm185, %v721, 0
    %v762 = vsel %vm185, %v723, 0
    %v764 = vsel %vm185, %v725, 0
    %v766 = vsel %vm185, %v727, 0
    %v768 = vsel %vm185, %v729, 0
    %v770 = vsel %vm185, %v731, 0
    %v772 = vsel %vm185, %v733, 0
    %v774 = vsel %vm185, %v735, 0
    %776 = vmatpush.xpose.msra.mxu0 0.0
    %777 = vmatpush.xpose.msra.mxu0 0.0
    %778 = vmatpush.xpose.msra.mxu0 0.0
    %779 = vmatpush.xpose.msra.mxu0 0.0
    %780 = vmatpush.xpose.msra.mxu0 0.0
    %781 = vmatpush.xpose.msra.mxu0 0.0
    %782 = vmatpush.xpose.msra.mxu0 0.0
    %783 = vmatpush.xpose.msra.mxu0 0.0
    %784 = vmatpush.xpose.msra.mxu0 %v774
    %785 = vmatpush.xpose.msra.mxu0 %v772
    %786 = vmatpush.xpose.msra.mxu0 %v770
    %787 = vmatpush.xpose.msra.mxu0 %v768
    %788 = vmatpush.xpose.msra.mxu0 %v766
    %789 = vmatpush.xpose.msra.mxu0 %v764
    %790 = vmatpush.xpose.msra.mxu0 %v762
    %791 = vmatpush.xpose.msra.mxu0 %v760
    %792 = vmatmul.f32.gmra.mxu0 %v737
    %v793 = vpop.f32.mrf.mxu0
    %v794 = vadd.f32 0.0, %v793
    %795 = vmatmul.f32.gmra.mxu0 %v740
    %v796 = vpop.f32.mrf.mxu0
    %v797 = vadd.f32 0.0, %v796
    %798 = vmatmul.f32.gmra.mxu0 %v743
    %v799 = vpop.f32.mrf.mxu0
    %v800 = vadd.f32 0.0, %v799
    %801 = vmatmul.f32.gmra.mxu0 %v746
    %v802 = vpop.f32.mrf.mxu0
    %v803 = vadd.f32 0.0, %v802
    %804 = vmatmul.f32.gmra.mxu0 %v749
    %v805 = vpop.f32.mrf.mxu0
    %v806 = vadd.f32 0.0, %v805
    %807 = vmatmul.f32.gmra.mxu0 %v752
    %v808 = vpop.f32.mrf.mxu0
    %v809 = vadd.f32 0.0, %v808
    %810 = vmatmul.f32.gmra.mxu0 %v755
    %v811 = vpop.f32.mrf.mxu0
    %v812 = vadd.f32 0.0, %v811
    %813 = vmatmul.f32.gmra.mxu0 %v758
    %v814 = vpop.f32.mrf.mxu0
    %v815 = vadd.f32 0.0, %v814
    %816 = vdwg.mxu0
    %825 = vrot.lane.b32.xlu0 %v673, 96
    %v826 = vpop.permute.xlu0 %825
    %827 = vrot.lane.b32.xlu0 %v676, 96
    %v828 = vpop.permute.xlu0 %827
    %829 = vrot.lane.b32.xlu0 %v679, 96
    %v830 = vpop.permute.xlu0 %829
    %831 = vrot.lane.b32.xlu0 %v682, 96
    %v832 = vpop.permute.xlu0 %831
    %833 = vrot.lane.b32.xlu0 %v685, 96
    %v834 = vpop.permute.xlu0 %833
    %835 = vrot.lane.b32.xlu0 %v688, 96
    %v836 = vpop.permute.xlu0 %835
    %837 = vrot.lane.b32.xlu0 %v691, 96
    %v838 = vpop.permute.xlu0 %837
    %839 = vrot.lane.b32.xlu0 %v694, 96
    %v840 = vpop.permute.xlu0 %839
    %v842 = vsel %vm185, %v704, 0
    %v845 = vsel %vm185, %v705, 0
    %v848 = vsel %vm185, %v706, 0
    %v851 = vsel %vm185, %v707, 0
    %v854 = vsel %vm185, %v708, 0
    %v857 = vsel %vm185, %v709, 0
    %v860 = vsel %vm185, %v710, 0
    %v863 = vsel %vm185, %v711, 0
    %v865 = vsel %vm185, %v826, 0
    %v867 = vsel %vm185, %v828, 0
    %v869 = vsel %vm185, %v830, 0
    %v871 = vsel %vm185, %v832, 0
    %v873 = vsel %vm185, %v834, 0
    %v875 = vsel %vm185, %v836, 0
    %v877 = vsel %vm185, %v838, 0
    %v879 = vsel %vm185, %v840, 0
    %881 = vmatpush.xpose.msra.mxu0 0.0
    %882 = vmatpush.xpose.msra.mxu0 0.0
    %883 = vmatpush.xpose.msra.mxu0 0.0
    %884 = vmatpush.xpose.msra.mxu0 0.0
    %885 = vmatpush.xpose.msra.mxu0 0.0
    %886 = vmatpush.xpose.msra.mxu0 0.0
    %887 = vmatpush.xpose.msra.mxu0 0.0
    %888 = vmatpush.xpose.msra.mxu0 0.0
    %889 = vmatpush.xpose.msra.mxu0 %v879
    %890 = vmatpush.xpose.msra.mxu0 %v877
    %891 = vmatpush.xpose.msra.mxu0 %v875
    %892 = vmatpush.xpose.msra.mxu0 %v873
    %893 = vmatpush.xpose.msra.mxu0 %v871
    %894 = vmatpush.xpose.msra.mxu0 %v869
    %895 = vmatpush.xpose.msra.mxu0 %v867
    %896 = vmatpush.xpose.msra.mxu0 %v865
    %897 = vmatmul.f32.gmra.mxu0 %v842
    %v898 = vpop.f32.mrf.mxu0
    %v899 = vadd.f32 0.0, %v898
    %900 = vmatmul.f32.gmra.mxu0 %v845
    %v901 = vpop.f32.mrf.mxu0
    %v902 = vadd.f32 0.0, %v901
    %903 = vmatmul.f32.gmra.mxu0 %v848
    %v904 = vpop.f32.mrf.mxu0
    %v905 = vadd.f32 0.0, %v904
    %906 = vmatmul.f32.gmra.mxu0 %v851
    %v907 = vpop.f32.mrf.mxu0
    %v908 = vadd.f32 0.0, %v907
    %909 = vmatmul.f32.gmra.mxu0 %v854
    %v910 = vpop.f32.mrf.mxu0
    %v911 = vadd.f32 0.0, %v910
    %912 = vmatmul.f32.gmra.mxu0 %v857
    %v913 = vpop.f32.mrf.mxu0
    %v914 = vadd.f32 0.0, %v913
    %915 = vmatmul.f32.gmra.mxu0 %v860
    %v916 = vpop.f32.mrf.mxu0
    %v917 = vadd.f32 0.0, %v916
    %918 = vmatmul.f32.gmra.mxu0 %v863
    %v919 = vpop.f32.mrf.mxu0
    %v920 = vadd.f32 0.0, %v919
    %921 = vdwg.mxu0
    %vm922 = vcmask 523264
    %v923 = vsel %vm922, %v794, -inf
    %924 = vmax.xlane.f32.xlu0 %v923
    %v925 = vpop.xlane.xlu0 %924
    %v926 = vsel %vm922, %v797, -inf
    %927 = vmax.xlane.f32.xlu0 %v926
    %v928 = vpop.xlane.xlu0 %927
    %v929 = vsel %vm922, %v800, -inf
    %930 = vmax.xlane.f32.xlu0 %v929
    %v931 = vpop.xlane.xlu0 %930
    %v932 = vsel %vm922, %v803, -inf
    %933 = vmax.xlane.f32.xlu0 %v932
    %v934 = vpop.xlane.xlu0 %933
    %v935 = vsel %vm922, %v806, -inf
    %936 = vmax.xlane.f32.xlu0 %v935
    %v937 = vpop.xlane.xlu0 %936
    %v938 = vsel %vm922, %v809, -inf
    %939 = vmax.xlane.f32.xlu0 %v938
    %v940 = vpop.xlane.xlu0 %939
    %v941 = vsel %vm922, %v812, -inf
    %942 = vmax.xlane.f32.xlu0 %v941
    %v943 = vpop.xlane.xlu0 %942
    %v944 = vsel %vm922, %v815, -inf
    %945 = vmax.xlane.f32.xlu0 %v944
    %v946 = vpop.xlane.xlu0 %945
    %v947 = vsel %vm922, %v899, -inf
    %948 = vmax.xlane.f32.xlu0 %v947
    %v949 = vpop.xlane.xlu0 %948
    %v950 = vsel %vm922, %v902, -inf
    %951 = vmax.xlane.f32.xlu0 %v950
    %v952 = vpop.xlane.xlu0 %951
    %v953 = vsel %vm922, %v905, -inf
    %954 = vmax.xlane.f32.xlu0 %v953
    %v955 = vpop.xlane.xlu0 %954
    %v956 = vsel %vm922, %v908, -inf
    %957 = vmax.xlane.f32.xlu0 %v956
    %v958 = vpop.xlane.xlu0 %957
    %v959 = vsel %vm922, %v911, -inf
    %960 = vmax.xlane.f32.xlu0 %v959
    %v961 = vpop.xlane.xlu0 %960
    %v962 = vsel %vm922, %v914, -inf
    %963 = vmax.xlane.f32.xlu0 %v962
    %v964 = vpop.xlane.xlu0 %963
    %v965 = vsel %vm922, %v917, -inf
    %966 = vmax.xlane.f32.xlu0 %v965
    %v967 = vpop.xlane.xlu0 %966
    %v968 = vsel %vm922, %v920, -inf
    %969 = vmax.xlane.f32.xlu0 %v968
    %v970 = vpop.xlane.xlu0 %969
    %v971 = vsub.f32 %v794, %v925
    %v972 = vsub.f32 %v797, %v928
    %v973 = vsub.f32 %v800, %v931
    %v974 = vsub.f32 %v803, %v934
    %v975 = vsub.f32 %v806, %v937
    %v976 = vsub.f32 %v809, %v940
    %v977 = vsub.f32 %v812, %v943
    %v978 = vsub.f32 %v815, %v946
    %v979 = vsub.f32 %v899, %v949
    %v980 = vsub.f32 %v902, %v952
    %v981 = vsub.f32 %v905, %v955
    %v982 = vsub.f32 %v908, %v958
    %v983 = vsub.f32 %v911, %v961
    %v984 = vsub.f32 %v914, %v964
    %v985 = vsub.f32 %v917, %v967
    %v986 = vsub.f32 %v920, %v970
    %v987 = vmul.f32 %v971, 1.442695
    %v988 = vpow.pop %v987
    %v989 = vmul.f32 %v972, 1.442695
    %v990 = vpow.pop %v989
    %v991 = vmul.f32 %v973, 1.442695
    %v992 = vpow.pop %v991
    %v993 = vmul.f32 %v974, 1.442695
    %v994 = vpow.pop %v993
    %v995 = vmul.f32 %v975, 1.442695
    %v996 = vpow.pop %v995
    %v997 = vmul.f32 %v976, 1.442695
    %v998 = vpow.pop %v997
    %v999 = vmul.f32 %v977, 1.442695
    %v1000 = vpow.pop %v999
    %v1001 = vmul.f32 %v978, 1.442695
    %v1002 = vpow.pop %v1001
    %v1003 = vmul.f32 %v979, 1.442695
    %v1004 = vpow.pop %v1003
    %v1005 = vmul.f32 %v980, 1.442695
    %v1006 = vpow.pop %v1005
    %v1007 = vmul.f32 %v981, 1.442695
    %v1008 = vpow.pop %v1007
    %v1009 = vmul.f32 %v982, 1.442695
    %v1010 = vpow.pop %v1009
    %v1011 = vmul.f32 %v983, 1.442695
    %v1012 = vpow.pop %v1011
    %v1013 = vmul.f32 %v984, 1.442695
    %v1014 = vpow.pop %v1013
    %v1015 = vmul.f32 %v985, 1.442695
    %v1016 = vpow.pop %v1015
    %v1017 = vmul.f32 %v986, 1.442695
    %v1018 = vpow.pop %v1017
    %v1019 = vsel %vm922, %v988, 0.0
    %1020 = vadd.xlane.f32.xlu0 %v1019
    %v1021 = vpop.xlane.xlu0 %1020
    %v1022 = vsel %vm922, %v990, 0.0
    %1023 = vadd.xlane.f32.xlu0 %v1022
    %v1024 = vpop.xlane.xlu0 %1023
    %v1025 = vsel %vm922, %v992, 0.0
    %1026 = vadd.xlane.f32.xlu0 %v1025
    %v1027 = vpop.xlane.xlu0 %1026
    %v1028 = vsel %vm922, %v994, 0.0
    %1029 = vadd.xlane.f32.xlu0 %v1028
    %v1030 = vpop.xlane.xlu0 %1029
    %v1031 = vsel %vm922, %v996, 0.0
    %1032 = vadd.xlane.f32.xlu0 %v1031
    %v1033 = vpop.xlane.xlu0 %1032
    %v1034 = vsel %vm922, %v998, 0.0
    %1035 = vadd.xlane.f32.xlu0 %v1034
    %v1036 = vpop.xlane.xlu0 %1035
    %v1037 = vsel %vm922, %v1000, 0.0
    %1038 = vadd.xlane.f32.xlu0 %v1037
    %v1039 = vpop.xlane.xlu0 %1038
    %v1040 = vsel %vm922, %v1002, 0.0
    %1041 = vadd.xlane.f32.xlu0 %v1040
    %v1042 = vpop.xlane.xlu0 %1041
    %v1043 = vsel %vm922, %v1004, 0.0
    %1044 = vadd.xlane.f32.xlu0 %v1043
    %v1045 = vpop.xlane.xlu0 %1044
    %v1046 = vsel %vm922, %v1006, 0.0
    %1047 = vadd.xlane.f32.xlu0 %v1046
    %v1048 = vpop.xlane.xlu0 %1047
    %v1049 = vsel %vm922, %v1008, 0.0
    %1050 = vadd.xlane.f32.xlu0 %v1049
    %v1051 = vpop.xlane.xlu0 %1050
    %v1052 = vsel %vm922, %v1010, 0.0
    %1053 = vadd.xlane.f32.xlu0 %v1052
    %v1054 = vpop.xlane.xlu0 %1053
    %v1055 = vsel %vm922, %v1012, 0.0
    %1056 = vadd.xlane.f32.xlu0 %v1055
    %v1057 = vpop.xlane.xlu0 %1056
    %v1058 = vsel %vm922, %v1014, 0.0
    %1059 = vadd.xlane.f32.xlu0 %v1058
    %v1060 = vpop.xlane.xlu0 %1059
    %v1061 = vsel %vm922, %v1016, 0.0
    %1062 = vadd.xlane.f32.xlu0 %v1061
    %v1063 = vpop.xlane.xlu0 %1062
    %v1064 = vsel %vm922, %v1018, 0.0
    %1065 = vadd.xlane.f32.xlu0 %v1064
    %v1066 = vpop.xlane.xlu0 %1065
    %v1067 = vrcp.pop %v1021
    %v1068 = vrcp.pop %v1024
    %v1069 = vrcp.pop %v1027
    %v1070 = vrcp.pop %v1030
    %v1071 = vrcp.pop %v1033
    %v1072 = vrcp.pop %v1036
    %v1073 = vrcp.pop %v1039
    %v1074 = vrcp.pop %v1042
    %v1075 = vrcp.pop %v1045
    %v1076 = vrcp.pop %v1048
    %v1077 = vrcp.pop %v1051
    %v1078 = vrcp.pop %v1054
    %v1079 = vrcp.pop %v1057
    %v1080 = vrcp.pop %v1060
    %v1081 = vrcp.pop %v1063
    %v1082 = vrcp.pop %v1066
    %v1083 = vmul.f32 %v988, %v1067
    %v1084 = vmul.f32 %v990, %v1068
    %v1085 = vmul.f32 %v992, %v1069
    %v1086 = vmul.f32 %v994, %v1070
    %v1087 = vmul.f32 %v996, %v1071
    %v1088 = vmul.f32 %v998, %v1072
    %v1089 = vmul.f32 %v1000, %v1073
    %v1090 = vmul.f32 %v1002, %v1074
    %v1091 = vmul.f32 %v1004, %v1075
    %v1092 = vmul.f32 %v1006, %v1076
    %v1093 = vmul.f32 %v1008, %v1077
    %v1094 = vmul.f32 %v1010, %v1078
    %v1095 = vmul.f32 %v1012, %v1079
    %v1096 = vmul.f32 %v1014, %v1080
    %v1097 = vmul.f32 %v1016, %v1081
    %v1098 = vmul.f32 %v1018, %v1082
    %1099 = vrot.lane.b32.xlu0 %v649, 64
    %v1100 = vpop.permute.xlu0 %1099
    %1101 = vrot.lane.b32.xlu0 %v652, 64
    %v1102 = vpop.permute.xlu0 %1101
    %1103 = vrot.lane.b32.xlu0 %v655, 64
    %v1104 = vpop.permute.xlu0 %1103
    %1105 = vrot.lane.b32.xlu0 %v658, 64
    %v1106 = vpop.permute.xlu0 %1105
    %1107 = vrot.lane.b32.xlu0 %v661, 64
    %v1108 = vpop.permute.xlu0 %1107
    %1109 = vrot.lane.b32.xlu0 %v664, 64
    %v1110 = vpop.permute.xlu0 %1109
    %1111 = vrot.lane.b32.xlu0 %v667, 64
    %v1112 = vpop.permute.xlu0 %1111
    %1113 = vrot.lane.b32.xlu0 %v670, 64
    %v1114 = vpop.permute.xlu0 %1113
    %v1124 = vsel %vm922, %v1083, 0
    %v1127 = vsel %vm922, %v1084, 0
    %v1130 = vsel %vm922, %v1085, 0
    %v1133 = vsel %vm922, %v1086, 0
    %v1136 = vsel %vm922, %v1087, 0
    %v1139 = vsel %vm922, %v1088, 0
    %v1142 = vsel %vm922, %v1089, 0
    %v1145 = vsel %vm922, %v1090, 0
    %1147 = vmatpush.msra.mxu0 0.0
    %1148 = vmatpush.msra.mxu0 0.0
    %1149 = vmatpush.msra.mxu0 0.0
    %1150 = vmatpush.msra.mxu0 0.0
    %1151 = vmatpush.msra.mxu0 0.0
    %1152 = vmatpush.msra.mxu0 0.0
    %1153 = vmatpush.msra.mxu0 0.0
    %1154 = vmatpush.msra.mxu0 0.0
    %1155 = vmatpush.msra.mxu0 %v1114
    %1156 = vmatpush.msra.mxu0 %v1112
    %1157 = vmatpush.msra.mxu0 %v1110
    %1158 = vmatpush.msra.mxu0 %v1108
    %1159 = vmatpush.msra.mxu0 %v1106
    %1160 = vmatpush.msra.mxu0 %v1104
    %1161 = vmatpush.msra.mxu0 %v1102
    %1162 = vmatpush.msra.mxu0 %v1100
    %1163 = vmatmul.f32.gmra.mxu0 %v1124
    %v1164 = vpop.f32.mrf.mxu0
    %v1165 = vadd.f32 0.0, %v1164
    %1166 = vmatmul.f32.gmra.mxu0 %v1127
    %v1167 = vpop.f32.mrf.mxu0
    %v1168 = vadd.f32 0.0, %v1167
    %1169 = vmatmul.f32.gmra.mxu0 %v1130
    %v1170 = vpop.f32.mrf.mxu0
    %v1171 = vadd.f32 0.0, %v1170
    %1172 = vmatmul.f32.gmra.mxu0 %v1133
    %v1173 = vpop.f32.mrf.mxu0
    %v1174 = vadd.f32 0.0, %v1173
    %1175 = vmatmul.f32.gmra.mxu0 %v1136
    %v1176 = vpop.f32.mrf.mxu0
    %v1177 = vadd.f32 0.0, %v1176
    %1178 = vmatmul.f32.gmra.mxu0 %v1139
    %v1179 = vpop.f32.mrf.mxu0
    %v1180 = vadd.f32 0.0, %v1179
    %1181 = vmatmul.f32.gmra.mxu0 %v1142
    %v1182 = vpop.f32.mrf.mxu0
    %v1183 = vadd.f32 0.0, %v1182
    %1184 = vmatmul.f32.gmra.mxu0 %v1145
    %v1185 = vpop.f32.mrf.mxu0
    %v1186 = vadd.f32 0.0, %v1185
    %1187 = vdwg.mxu0
    %1188 = vrot.lane.b32.xlu0 %v673, 64
    %v1189 = vpop.permute.xlu0 %1188
    %1190 = vrot.lane.b32.xlu0 %v676, 64
    %v1191 = vpop.permute.xlu0 %1190
    %1192 = vrot.lane.b32.xlu0 %v679, 64
    %v1193 = vpop.permute.xlu0 %1192
    %1194 = vrot.lane.b32.xlu0 %v682, 64
    %v1195 = vpop.permute.xlu0 %1194
    %1196 = vrot.lane.b32.xlu0 %v685, 64
    %v1197 = vpop.permute.xlu0 %1196
    %1198 = vrot.lane.b32.xlu0 %v688, 64
    %v1199 = vpop.permute.xlu0 %1198
    %1200 = vrot.lane.b32.xlu0 %v691, 64
    %v1201 = vpop.permute.xlu0 %1200
    %1202 = vrot.lane.b32.xlu0 %v694, 64
    %v1203 = vpop.permute.xlu0 %1202
    %v1213 = vsel %vm922, %v1091, 0
    %v1216 = vsel %vm922, %v1092, 0
    %v1219 = vsel %vm922, %v1093, 0
    %v1222 = vsel %vm922, %v1094, 0
    %v1225 = vsel %vm922, %v1095, 0
    %v1228 = vsel %vm922, %v1096, 0
    %v1231 = vsel %vm922, %v1097, 0
    %v1234 = vsel %vm922, %v1098, 0
    %1236 = vmatpush.msra.mxu0 0.0
    %1237 = vmatpush.msra.mxu0 0.0
    %1238 = vmatpush.msra.mxu0 0.0
    %1239 = vmatpush.msra.mxu0 0.0
    %1240 = vmatpush.msra.mxu0 0.0
    %1241 = vmatpush.msra.mxu0 0.0
    %1242 = vmatpush.msra.mxu0 0.0
    %1243 = vmatpush.msra.mxu0 0.0
    %1244 = vmatpush.msra.mxu0 %v1203
    %1245 = vmatpush.msra.mxu0 %v1201
    %1246 = vmatpush.msra.mxu0 %v1199
    %1247 = vmatpush.msra.mxu0 %v1197
    %1248 = vmatpush.msra.mxu0 %v1195
    %1249 = vmatpush.msra.mxu0 %v1193
    %1250 = vmatpush.msra.mxu0 %v1191
    %1251 = vmatpush.msra.mxu0 %v1189
    %1252 = vmatmul.f32.gmra.mxu0 %v1213
    %v1253 = vpop.f32.mrf.mxu0
    %v1254 = vadd.f32 0.0, %v1253
    %1255 = vmatmul.f32.gmra.mxu0 %v1216
    %v1256 = vpop.f32.mrf.mxu0
    %v1257 = vadd.f32 0.0, %v1256
    %1258 = vmatmul.f32.gmra.mxu0 %v1219
    %v1259 = vpop.f32.mrf.mxu0
    %v1260 = vadd.f32 0.0, %v1259
    %1261 = vmatmul.f32.gmra.mxu0 %v1222
    %v1262 = vpop.f32.mrf.mxu0
    %v1263 = vadd.f32 0.0, %v1262
    %1264 = vmatmul.f32.gmra.mxu0 %v1225
    %v1265 = vpop.f32.mrf.mxu0
    %v1266 = vadd.f32 0.0, %v1265
    %1267 = vmatmul.f32.gmra.mxu0 %v1228
    %v1268 = vpop.f32.mrf.mxu0
    %v1269 = vadd.f32 0.0, %v1268
    %1270 = vmatmul.f32.gmra.mxu0 %v1231
    %v1271 = vpop.f32.mrf.mxu0
    %v1272 = vadd.f32 0.0, %v1271
    %1273 = vmatmul.f32.gmra.mxu0 %v1234
    %v1274 = vpop.f32.mrf.mxu0
    %v1275 = vadd.f32 0.0, %v1274
    %1276 = vdwg.mxu0
    %v1277 = vld [vmem:[%s2] sm:$0xff]
    %v1278 = vld [vmem:[%s2 + $0x10] sm:$0xff]
    %v1279 = vld [vmem:[%s2 + $0x20] sm:$0xff]
    %v1280 = vld [vmem:[%s2 + $0x30] sm:$0xff]
    %1285 = vrot.lane.b32.xlu0 %v1277, 32
    %v1286 = vpop.permute.xlu0 %1285
    %1287 = vrot.lane.b32.xlu0 %v1278, 32
    %v1288 = vpop.permute.xlu0 %1287
    %1289 = vrot.lane.b32.xlu0 %v1279, 32
    %v1290 = vpop.permute.xlu0 %1289
    %1291 = vrot.lane.b32.xlu0 %v1280, 32
    %v1292 = vpop.permute.xlu0 %1291
    %v1298 = vsel %vm185, %v1165, 0
    %v1301 = vsel %vm185, %v1168, 0
    %v1304 = vsel %vm185, %v1171, 0
    %v1307 = vsel %vm185, %v1174, 0
    %v1310 = vsel %vm185, %v1177, 0
    %v1313 = vsel %vm185, %v1180, 0
    %v1316 = vsel %vm185, %v1183, 0
    %v1319 = vsel %vm185, %v1186, 0
    %v1322 = vsel %vm185, %v1254, 0
    %v1325 = vsel %vm185, %v1257, 0
    %v1328 = vsel %vm185, %v1260, 0
    %v1331 = vsel %vm185, %v1263, 0
    %v1334 = vsel %vm185, %v1266, 0
    %v1337 = vsel %vm185, %v1269, 0
    %v1340 = vsel %vm185, %v1272, 0
    %v1343 = vsel %vm185, %v1275, 0
    %1345 = vmatpush.msra.mxu0 0.0
    %1346 = vmatpush.msra.mxu0 0.0
    %1347 = vmatpush.msra.mxu0 0.0
    %1348 = vmatpush.msra.mxu0 0.0
    %1349 = vmatpush.msra.mxu0 0.0
    %1350 = vmatpush.msra.mxu0 0.0
    %1351 = vmatpush.msra.mxu0 0.0
    %1352 = vmatpush.msra.mxu0 0.0
    %1353 = vmatpush.msra.mxu0 0.0
    %1354 = vmatpush.msra.mxu0 0.0
    %1355 = vmatpush.msra.mxu0 0.0
    %1356 = vmatpush.msra.mxu0 0.0
    %1357 = vmatpush.msra.mxu0 %v1292
    %1358 = vmatpush.msra.mxu0 %v1290
    %1359 = vmatpush.msra.mxu0 %v1288
    %1360 = vmatpush.msra.mxu0 %v1286
    %1361 = vmatmul.f32.gmra.mxu0 %v1298
    %v1362 = vpop.f32.mrf.mxu0
    %v1363 = vadd.f32 0.0, %v1362
    %1364 = vmatmul.f32.gmra.mxu0 %v1301
    %v1365 = vpop.f32.mrf.mxu0
    %v1366 = vadd.f32 0.0, %v1365
    %1367 = vmatmul.f32.gmra.mxu0 %v1304
    %v1368 = vpop.f32.mrf.mxu0
    %v1369 = vadd.f32 0.0, %v1368
    %1370 = vmatmul.f32.gmra.mxu0 %v1307
    %v1371 = vpop.f32.mrf.mxu0
    %v1372 = vadd.f32 0.0, %v1371
    %1373 = vmatmul.f32.gmra.mxu0 %v1310
    %v1374 = vpop.f32.mrf.mxu0
    %v1375 = vadd.f32 0.0, %v1374
    %1376 = vmatmul.f32.gmra.mxu0 %v1313
    %v1377 = vpop.f32.mrf.mxu0
    %v1378 = vadd.f32 0.0, %v1377
    %1379 = vmatmul.f32.gmra.mxu0 %v1316
    %v1380 = vpop.f32.mrf.mxu0
    %v1381 = vadd.f32 0.0, %v1380
    %1382 = vmatmul.f32.gmra.mxu0 %v1319
    %v1383 = vpop.f32.mrf.mxu0
    %v1384 = vadd.f32 0.0, %v1383
    %1385 = vmatmul.f32.gmra.mxu0 %v1322
    %v1386 = vpop.f32.mrf.mxu0
    %v1387 = vadd.f32 0.0, %v1386
    %1388 = vmatmul.f32.gmra.mxu0 %v1325
    %v1389 = vpop.f32.mrf.mxu0
    %v1390 = vadd.f32 0.0, %v1389
    %1391 = vmatmul.f32.gmra.mxu0 %v1328
    %v1392 = vpop.f32.mrf.mxu0
    %v1393 = vadd.f32 0.0, %v1392
    %1394 = vmatmul.f32.gmra.mxu0 %v1331
    %v1395 = vpop.f32.mrf.mxu0
    %v1396 = vadd.f32 0.0, %v1395
    %1397 = vmatmul.f32.gmra.mxu0 %v1334
    %v1398 = vpop.f32.mrf.mxu0
    %v1399 = vadd.f32 0.0, %v1398
    %1400 = vmatmul.f32.gmra.mxu0 %v1337
    %v1401 = vpop.f32.mrf.mxu0
    %v1402 = vadd.f32 0.0, %v1401
    %1403 = vmatmul.f32.gmra.mxu0 %v1340
    %v1404 = vpop.f32.mrf.mxu0
    %v1405 = vadd.f32 0.0, %v1404
    %1406 = vmatmul.f32.gmra.mxu0 %v1343
    %v1407 = vpop.f32.mrf.mxu0
    %v1408 = vadd.f32 0.0, %v1407
    %1409 = vdwg.mxu0
    %v1410 = vadd.f32 %v131, %v1363
    %v1411 = vadd.f32 %v134, %v1366
    %v1412 = vadd.f32 %v137, %v1369
    %v1413 = vadd.f32 %v140, %v1372
    %v1414 = vadd.f32 %v143, %v1375
    %v1415 = vadd.f32 %v146, %v1378
    %v1416 = vadd.f32 %v149, %v1381
    %v1417 = vadd.f32 %v152, %v1384
    %v1418 = vadd.f32 %v155, %v1387
    %v1419 = vadd.f32 %v158, %v1390
    %v1420 = vadd.f32 %v161, %v1393
    %v1421 = vadd.f32 %v164, %v1396
    %v1422 = vadd.f32 %v167, %v1399
    %v1423 = vadd.f32 %v170, %v1402
    %v1424 = vadd.f32 %v173, %v1405
    %v1425 = vadd.f32 %v176, %v1408
    %v1426 = vperm.slane %v180, 0
    %v1427 = vadd.f32 %v1410, %v1426
    %v1428 = vadd.f32 %v1411, %v1426
    %v1429 = vadd.f32 %v1412, %v1426
    %v1430 = vadd.f32 %v1413, %v1426
    %v1431 = vadd.f32 %v1414, %v1426
    %v1432 = vadd.f32 %v1415, %v1426
    %v1433 = vadd.f32 %v1416, %v1426
    %v1434 = vadd.f32 %v1417, %v1426
    %v1435 = vadd.f32 %v1418, %v1426
    %v1436 = vadd.f32 %v1419, %v1426
    %v1437 = vadd.f32 %v1420, %v1426
    %v1438 = vadd.f32 %v1421, %v1426
    %v1439 = vadd.f32 %v1422, %v1426
    %v1440 = vadd.f32 %v1423, %v1426
    %v1441 = vadd.f32 %v1424, %v1426
    %v1442 = vadd.f32 %v1425, %v1426
    %v1443 = vsel %vm185, %v1427, 0.0
    %1444 = vadd.xlane.f32.xlu0 %v1443
    %v1445 = vpop.xlane.xlu0 %1444
    %v1446 = vsel %vm185, %v1428, 0.0
    %1447 = vadd.xlane.f32.xlu0 %v1446
    %v1448 = vpop.xlane.xlu0 %1447
    %v1449 = vsel %vm185, %v1429, 0.0
    %1450 = vadd.xlane.f32.xlu0 %v1449
    %v1451 = vpop.xlane.xlu0 %1450
    %v1452 = vsel %vm185, %v1430, 0.0
    %1453 = vadd.xlane.f32.xlu0 %v1452
    %v1454 = vpop.xlane.xlu0 %1453
    %v1455 = vsel %vm185, %v1431, 0.0
    %1456 = vadd.xlane.f32.xlu0 %v1455
    %v1457 = vpop.xlane.xlu0 %1456
    %v1458 = vsel %vm185, %v1432, 0.0
    %1459 = vadd.xlane.f32.xlu0 %v1458
    %v1460 = vpop.xlane.xlu0 %1459
    %v1461 = vsel %vm185, %v1433, 0.0
    %1462 = vadd.xlane.f32.xlu0 %v1461
    %v1463 = vpop.xlane.xlu0 %1462
    %v1464 = vsel %vm185, %v1434, 0.0
    %1465 = vadd.xlane.f32.xlu0 %v1464
    %v1466 = vpop.xlane.xlu0 %1465
    %v1467 = vsel %vm185, %v1435, 0.0
    %1468 = vadd.xlane.f32.xlu0 %v1467
    %v1469 = vpop.xlane.xlu0 %1468
    %v1470 = vsel %vm185, %v1436, 0.0
    %1471 = vadd.xlane.f32.xlu0 %v1470
    %v1472 = vpop.xlane.xlu0 %1471
    %v1473 = vsel %vm185, %v1437, 0.0
    %1474 = vadd.xlane.f32.xlu0 %v1473
    %v1475 = vpop.xlane.xlu0 %1474
    %v1476 = vsel %vm185, %v1438, 0.0
    %1477 = vadd.xlane.f32.xlu0 %v1476
    %v1478 = vpop.xlane.xlu0 %1477
    %v1479 = vsel %vm185, %v1439, 0.0
    %1480 = vadd.xlane.f32.xlu0 %v1479
    %v1481 = vpop.xlane.xlu0 %1480
    %v1482 = vsel %vm185, %v1440, 0.0
    %1483 = vadd.xlane.f32.xlu0 %v1482
    %v1484 = vpop.xlane.xlu0 %1483
    %v1485 = vsel %vm185, %v1441, 0.0
    %1486 = vadd.xlane.f32.xlu0 %v1485
    %v1487 = vpop.xlane.xlu0 %1486
    %v1488 = vsel %vm185, %v1442, 0.0
    %1489 = vadd.xlane.f32.xlu0 %v1488
    %v1490 = vpop.xlane.xlu0 %1489
    %v1491 = vmul.f32 %v1445, %v240
    %v1492 = vmul.f32 %v1448, %v240
    %v1493 = vmul.f32 %v1451, %v240
    %v1494 = vmul.f32 %v1454, %v240
    %v1495 = vmul.f32 %v1457, %v240
    %v1496 = vmul.f32 %v1460, %v240
    %v1497 = vmul.f32 %v1463, %v240
    %v1498 = vmul.f32 %v1466, %v240
    %v1499 = vmul.f32 %v1469, %v240
    %v1500 = vmul.f32 %v1472, %v240
    %v1501 = vmul.f32 %v1475, %v240
    %v1502 = vmul.f32 %v1478, %v240
    %v1503 = vmul.f32 %v1481, %v240
    %v1504 = vmul.f32 %v1484, %v240
    %v1505 = vmul.f32 %v1487, %v240
    %v1506 = vmul.f32 %v1490, %v240
    %v1507 = vsub.f32 %v1427, %v1491
    %v1508 = vsub.f32 %v1428, %v1492
    %v1509 = vsub.f32 %v1429, %v1493
    %v1510 = vsub.f32 %v1430, %v1494
    %v1511 = vsub.f32 %v1431, %v1495
    %v1512 = vsub.f32 %v1432, %v1496
    %v1513 = vsub.f32 %v1433, %v1497
    %v1514 = vsub.f32 %v1434, %v1498
    %v1515 = vsub.f32 %v1435, %v1499
    %v1516 = vsub.f32 %v1436, %v1500
    %v1517 = vsub.f32 %v1437, %v1501
    %v1518 = vsub.f32 %v1438, %v1502
    %v1519 = vsub.f32 %v1439, %v1503
    %v1520 = vsub.f32 %v1440, %v1504
    %v1521 = vsub.f32 %v1441, %v1505
    %v1522 = vsub.f32 %v1442, %v1506
    %v1523 = vmul.f32 %v1507, %v1507
    %v1524 = vmul.f32 %v1508, %v1508
    %v1525 = vmul.f32 %v1509, %v1509
    %v1526 = vmul.f32 %v1510, %v1510
    %v1527 = vmul.f32 %v1511, %v1511
    %v1528 = vmul.f32 %v1512, %v1512
    %v1529 = vmul.f32 %v1513, %v1513
    %v1530 = vmul.f32 %v1514, %v1514
    %v1531 = vmul.f32 %v1515, %v1515
    %v1532 = vmul.f32 %v1516, %v1516
    %v1533 = vmul.f32 %v1517, %v1517
    %v1534 = vmul.f32 %v1518, %v1518
    %v1535 = vmul.f32 %v1519, %v1519
    %v1536 = vmul.f32 %v1520, %v1520
    %v1537 = vmul.f32 %v1521, %v1521
    %v1538 = vmul.f32 %v1522, %v1522
    %v1539 = vsel %vm185, %v1523, 0.0
    %1540 = vadd.xlane.f32.xlu0 %v1539
    %v1541 = vpop.xlane.xlu0 %1540
    %v1542 = vsel %vm185, %v1524, 0.0
    %1543 = vadd.xlane.f32.xlu0 %v1542
    %v1544 = vpop.xlane.xlu0 %1543
    %v1545 = vsel %vm185, %v1525, 0.0
    %1546 = vadd.xlane.f32.xlu0 %v1545
    %v1547 = vpop.xlane.xlu0 %1546
    %v1548 = vsel %vm185, %v1526, 0.0
    %1549 = vadd.xlane.f32.xlu0 %v1548
    %v1550 = vpop.xlane.xlu0 %1549
    %v1551 = vsel %vm185, %v1527, 0.0
    %1552 = vadd.xlane.f32.xlu0 %v1551
    %v1553 = vpop.xlane.xlu0 %1552
    %v1554 = vsel %vm185, %v1528, 0.0
    %1555 = vadd.xlane.f32.xlu0 %v1554
    %v1556 = vpop.xlane.xlu0 %1555
    %v1557 = vsel %vm185, %v1529, 0.0
    %1558 = vadd.xlane.f32.xlu0 %v1557
    %v1559 = vpop.xlane.xlu0 %1558
    %v1560 = vsel %vm185, %v1530, 0.0
    %1561 = vadd.xlane.f32.xlu0 %v1560
    %v1562 = vpop.xlane.xlu0 %1561
    %v1563 = vsel %vm185, %v1531, 0.0
    %1564 = vadd.xlane.f32.xlu0 %v1563
    %v1565 = vpop.xlane.xlu0 %1564
    %v1566 = vsel %vm185, %v1532, 0.0
    %1567 = vadd.xlane.f32.xlu0 %v1566
    %v1568 = vpop.xlane.xlu0 %1567
    %v1569 = vsel %vm185, %v1533, 0.0
    %1570 = vadd.xlane.f32.xlu0 %v1569
    %v1571 = vpop.xlane.xlu0 %1570
    %v1572 = vsel %vm185, %v1534, 0.0
    %1573 = vadd.xlane.f32.xlu0 %v1572
    %v1574 = vpop.xlane.xlu0 %1573
    %v1575 = vsel %vm185, %v1535, 0.0
    %1576 = vadd.xlane.f32.xlu0 %v1575
    %v1577 = vpop.xlane.xlu0 %1576
    %v1578 = vsel %vm185, %v1536, 0.0
    %1579 = vadd.xlane.f32.xlu0 %v1578
    %v1580 = vpop.xlane.xlu0 %1579
    %v1581 = vsel %vm185, %v1537, 0.0
    %1582 = vadd.xlane.f32.xlu0 %v1581
    %v1583 = vpop.xlane.xlu0 %1582
    %v1584 = vsel %vm185, %v1538, 0.0
    %1585 = vadd.xlane.f32.xlu0 %v1584
    %v1586 = vpop.xlane.xlu0 %1585
    %v1587 = vmul.f32 %v1541, %v240
    %v1588 = vmul.f32 %v1544, %v240
    %v1589 = vmul.f32 %v1547, %v240
    %v1590 = vmul.f32 %v1550, %v240
    %v1591 = vmul.f32 %v1553, %v240
    %v1592 = vmul.f32 %v1556, %v240
    %v1593 = vmul.f32 %v1559, %v240
    %v1594 = vmul.f32 %v1562, %v240
    %v1595 = vmul.f32 %v1565, %v240
    %v1596 = vmul.f32 %v1568, %v240
    %v1597 = vmul.f32 %v1571, %v240
    %v1598 = vmul.f32 %v1574, %v240
    %v1599 = vmul.f32 %v1577, %v240
    %v1600 = vmul.f32 %v1580, %v240
    %v1601 = vmul.f32 %v1583, %v240
    %v1602 = vmul.f32 %v1586, %v240
    %v1603 = vadd.f32 %v1587, 1e-05
    %v1604 = vadd.f32 %v1588, 1e-05
    %v1605 = vadd.f32 %v1589, 1e-05
    %v1606 = vadd.f32 %v1590, 1e-05
    %v1607 = vadd.f32 %v1591, 1e-05
    %v1608 = vadd.f32 %v1592, 1e-05
    %v1609 = vadd.f32 %v1593, 1e-05
    %v1610 = vadd.f32 %v1594, 1e-05
    %v1611 = vadd.f32 %v1595, 1e-05
    %v1612 = vadd.f32 %v1596, 1e-05
    %v1613 = vadd.f32 %v1597, 1e-05
    %v1614 = vadd.f32 %v1598, 1e-05
    %v1615 = vadd.f32 %v1599, 1e-05
    %v1616 = vadd.f32 %v1600, 1e-05
    %v1617 = vadd.f32 %v1601, 1e-05
    %v1618 = vadd.f32 %v1602, 1e-05
    %v1619 = vrsqrt.pop %v1603
    %v1620 = vmul.f32 %v1619, %v1603
    %v1621 = vmul.f32 %v1620, %v1619
    %v1622 = vmul.f32 0.5, %v1621
    %v1623 = vsub.f32 1.5, %v1622
    %v1624 = vmul.f32 %v1619, %v1623
    %vm1625 = vweird.f32 %v1603
    %vm1626 = vweird.f32 %v1619
    %vm1627 = vmor %vm1625, %vm1626
    %v1628 = vsel %vm1627, %v1619, %v1624
    %v1629 = vrsqrt.pop %v1604
    %v1630 = vmul.f32 %v1629, %v1604
    %v1631 = vmul.f32 %v1630, %v1629
    %v1632 = vmul.f32 0.5, %v1631
    %v1633 = vsub.f32 1.5, %v1632
    %v1634 = vmul.f32 %v1629, %v1633
    %vm1635 = vweird.f32 %v1604
    %vm1636 = vweird.f32 %v1629
    %vm1637 = vmor %vm1635, %vm1636
    %v1638 = vsel %vm1637, %v1629, %v1634
    %v1639 = vrsqrt.pop %v1605
    %v1640 = vmul.f32 %v1639, %v1605
    %v1641 = vmul.f32 %v1640, %v1639
    %v1642 = vmul.f32 0.5, %v1641
    %v1643 = vsub.f32 1.5, %v1642
    %v1644 = vmul.f32 %v1639, %v1643
    %vm1645 = vweird.f32 %v1605
    %vm1646 = vweird.f32 %v1639
    %vm1647 = vmor %vm1645, %vm1646
    %v1648 = vsel %vm1647, %v1639, %v1644
    %v1649 = vrsqrt.pop %v1606
    %v1650 = vmul.f32 %v1649, %v1606
    %v1651 = vmul.f32 %v1650, %v1649
    %v1652 = vmul.f32 0.5, %v1651
    %v1653 = vsub.f32 1.5, %v1652
    %v1654 = vmul.f32 %v1649, %v1653
    %vm1655 = vweird.f32 %v1606
    %vm1656 = vweird.f32 %v1649
    %vm1657 = vmor %vm1655, %vm1656
    %v1658 = vsel %vm1657, %v1649, %v1654
    %v1659 = vrsqrt.pop %v1607
    %v1660 = vmul.f32 %v1659, %v1607
    %v1661 = vmul.f32 %v1660, %v1659
    %v1662 = vmul.f32 0.5, %v1661
    %v1663 = vsub.f32 1.5, %v1662
    %v1664 = vmul.f32 %v1659, %v1663
    %vm1665 = vweird.f32 %v1607
    %vm1666 = vweird.f32 %v1659
    %vm1667 = vmor %vm1665, %vm1666
    %v1668 = vsel %vm1667, %v1659, %v1664
    %v1669 = vrsqrt.pop %v1608
    %v1670 = vmul.f32 %v1669, %v1608
    %v1671 = vmul.f32 %v1670, %v1669
    %v1672 = vmul.f32 0.5, %v1671
    %v1673 = vsub.f32 1.5, %v1672
    %v1674 = vmul.f32 %v1669, %v1673
    %vm1675 = vweird.f32 %v1608
    %vm1676 = vweird.f32 %v1669
    %vm1677 = vmor %vm1675, %vm1676
    %v1678 = vsel %vm1677, %v1669, %v1674
    %v1679 = vrsqrt.pop %v1609
    %v1680 = vmul.f32 %v1679, %v1609
    %v1681 = vmul.f32 %v1680, %v1679
    %v1682 = vmul.f32 0.5, %v1681
    %v1683 = vsub.f32 1.5, %v1682
    %v1684 = vmul.f32 %v1679, %v1683
    %vm1685 = vweird.f32 %v1609
    %vm1686 = vweird.f32 %v1679
    %vm1687 = vmor %vm1685, %vm1686
    %v1688 = vsel %vm1687, %v1679, %v1684
    %v1689 = vrsqrt.pop %v1610
    %v1690 = vmul.f32 %v1689, %v1610
    %v1691 = vmul.f32 %v1690, %v1689
    %v1692 = vmul.f32 0.5, %v1691
    %v1693 = vsub.f32 1.5, %v1692
    %v1694 = vmul.f32 %v1689, %v1693
    %vm1695 = vweird.f32 %v1610
    %vm1696 = vweird.f32 %v1689
    %vm1697 = vmor %vm1695, %vm1696
    %v1698 = vsel %vm1697, %v1689, %v1694
    %v1699 = vrsqrt.pop %v1611
    %v1700 = vmul.f32 %v1699, %v1611
    %v1701 = vmul.f32 %v1700, %v1699
    %v1702 = vmul.f32 0.5, %v1701
    %v1703 = vsub.f32 1.5, %v1702
    %v1704 = vmul.f32 %v1699, %v1703
    %vm1705 = vweird.f32 %v1611
    %vm1706 = vweird.f32 %v1699
    %vm1707 = vmor %vm1705, %vm1706
    %v1708 = vsel %vm1707, %v1699, %v1704
    %v1709 = vrsqrt.pop %v1612
    %v1710 = vmul.f32 %v1709, %v1612
    %v1711 = vmul.f32 %v1710, %v1709
    %v1712 = vmul.f32 0.5, %v1711
    %v1713 = vsub.f32 1.5, %v1712
    %v1714 = vmul.f32 %v1709, %v1713
    %vm1715 = vweird.f32 %v1612
    %vm1716 = vweird.f32 %v1709
    %vm1717 = vmor %vm1715, %vm1716
    %v1718 = vsel %vm1717, %v1709, %v1714
    %v1719 = vrsqrt.pop %v1613
    %v1720 = vmul.f32 %v1719, %v1613
    %v1721 = vmul.f32 %v1720, %v1719
    %v1722 = vmul.f32 0.5, %v1721
    %v1723 = vsub.f32 1.5, %v1722
    %v1724 = vmul.f32 %v1719, %v1723
    %vm1725 = vweird.f32 %v1613
    %vm1726 = vweird.f32 %v1719
    %vm1727 = vmor %vm1725, %vm1726
    %v1728 = vsel %vm1727, %v1719, %v1724
    %v1729 = vrsqrt.pop %v1614
    %v1730 = vmul.f32 %v1729, %v1614
    %v1731 = vmul.f32 %v1730, %v1729
    %v1732 = vmul.f32 0.5, %v1731
    %v1733 = vsub.f32 1.5, %v1732
    %v1734 = vmul.f32 %v1729, %v1733
    %vm1735 = vweird.f32 %v1614
    %vm1736 = vweird.f32 %v1729
    %vm1737 = vmor %vm1735, %vm1736
    %v1738 = vsel %vm1737, %v1729, %v1734
    %v1739 = vrsqrt.pop %v1615
    %v1740 = vmul.f32 %v1739, %v1615
    %v1741 = vmul.f32 %v1740, %v1739
    %v1742 = vmul.f32 0.5, %v1741
    %v1743 = vsub.f32 1.5, %v1742
    %v1744 = vmul.f32 %v1739, %v1743
    %vm1745 = vweird.f32 %v1615
    %vm1746 = vweird.f32 %v1739
    %vm1747 = vmor %vm1745, %vm1746
    %v1748 = vsel %vm1747, %v1739, %v1744
    %v1749 = vrsqrt.pop %v1616
    %v1750 = vmul.f32 %v1749, %v1616
    %v1751 = vmul.f32 %v1750, %v1749
    %v1752 = vmul.f32 0.5, %v1751
    %v1753 = vsub.f32 1.5, %v1752
    %v1754 = vmul.f32 %v1749, %v1753
    %vm1755 = vweird.f32 %v1616
    %vm1756 = vweird.f32 %v1749
    %vm1757 = vmor %vm1755, %vm1756
    %v1758 = vsel %vm1757, %v1749, %v1754
    %v1759 = vrsqrt.pop %v1617
    %v1760 = vmul.f32 %v1759, %v1617
    %v1761 = vmul.f32 %v1760, %v1759
    %v1762 = vmul.f32 0.5, %v1761
    %v1763 = vsub.f32 1.5, %v1762
    %v1764 = vmul.f32 %v1759, %v1763
    %vm1765 = vweird.f32 %v1617
    %vm1766 = vweird.f32 %v1759
    %vm1767 = vmor %vm1765, %vm1766
    %v1768 = vsel %vm1767, %v1759, %v1764
    %v1769 = vrsqrt.pop %v1618
    %v1770 = vmul.f32 %v1769, %v1618
    %v1771 = vmul.f32 %v1770, %v1769
    %v1772 = vmul.f32 0.5, %v1771
    %v1773 = vsub.f32 1.5, %v1772
    %v1774 = vmul.f32 %v1769, %v1773
    %vm1775 = vweird.f32 %v1618
    %vm1776 = vweird.f32 %v1769
    %vm1777 = vmor %vm1775, %vm1776
    %v1778 = vsel %vm1777, %v1769, %v1774
    %v1779 = vmul.f32 %v1507, %v1628
    %v1780 = vmul.f32 %v1508, %v1638
    %v1781 = vmul.f32 %v1509, %v1648
    %v1782 = vmul.f32 %v1510, %v1658
    %v1783 = vmul.f32 %v1511, %v1668
    %v1784 = vmul.f32 %v1512, %v1678
    %v1785 = vmul.f32 %v1513, %v1688
    %v1786 = vmul.f32 %v1514, %v1698
    %v1787 = vmul.f32 %v1515, %v1708
    %v1788 = vmul.f32 %v1516, %v1718
    %v1789 = vmul.f32 %v1517, %v1728
    %v1790 = vmul.f32 %v1518, %v1738
    %v1791 = vmul.f32 %v1519, %v1748
    %v1792 = vmul.f32 %v1520, %v1758
    %v1793 = vmul.f32 %v1521, %v1768
    %v1794 = vmul.f32 %v1522, %v1778
    %v1795 = vperm.slane %v181, 0
    %v1796 = vmul.f32 %v1779, %v1795
    %v1797 = vmul.f32 %v1780, %v1795
    %v1798 = vmul.f32 %v1781, %v1795
    %v1799 = vmul.f32 %v1782, %v1795
    %v1800 = vmul.f32 %v1783, %v1795
    %v1801 = vmul.f32 %v1784, %v1795
    %v1802 = vmul.f32 %v1785, %v1795
    %v1803 = vmul.f32 %v1786, %v1795
    %v1804 = vmul.f32 %v1787, %v1795
    %v1805 = vmul.f32 %v1788, %v1795
    %v1806 = vmul.f32 %v1789, %v1795
    %v1807 = vmul.f32 %v1790, %v1795
    %v1808 = vmul.f32 %v1791, %v1795
    %v1809 = vmul.f32 %v1792, %v1795
    %v1810 = vmul.f32 %v1793, %v1795
    %v1811 = vmul.f32 %v1794, %v1795
    %v1812 = vperm.slane %v182, 0
    %v1813 = vadd.f32 %v1796, %v1812
    %v1814 = vadd.f32 %v1797, %v1812
    %v1815 = vadd.f32 %v1798, %v1812
    %v1816 = vadd.f32 %v1799, %v1812
    %v1817 = vadd.f32 %v1800, %v1812
    %v1818 = vadd.f32 %v1801, %v1812
    %v1819 = vadd.f32 %v1802, %v1812
    %v1820 = vadd.f32 %v1803, %v1812
    %v1821 = vadd.f32 %v1804, %v1812
    %v1822 = vadd.f32 %v1805, %v1812
    %v1823 = vadd.f32 %v1806, %v1812
    %v1824 = vadd.f32 %v1807, %v1812
    %v1825 = vadd.f32 %v1808, %v1812
    %v1826 = vadd.f32 %v1809, %v1812
    %v1827 = vadd.f32 %v1810, %v1812
    %v1828 = vadd.f32 %v1811, %v1812
    %v1829 = vld [vmem:[%s2 + $0x8] sm:$0xff]
    %v1830 = vld [vmem:[%s2 + $0x18] sm:$0xff]
    %v1831 = vld [vmem:[%s2 + $0x28] sm:$0xff]
    %v1832 = vld [vmem:[%s2 + $0x38] sm:$0xff]
    %v1833 = vperm.slane %v183, 0
    %v1835 = vsel %vm185, %v1813, 0
    %v1838 = vsel %vm185, %v1814, 0
    %v1841 = vsel %vm185, %v1815, 0
    %v1844 = vsel %vm185, %v1816, 0
    %v1847 = vsel %vm185, %v1817, 0
    %v1850 = vsel %vm185, %v1818, 0
    %v1853 = vsel %vm185, %v1819, 0
    %v1856 = vsel %vm185, %v1820, 0
    %v1859 = vsel %vm185, %v1821, 0
    %v1862 = vsel %vm185, %v1822, 0
    %v1865 = vsel %vm185, %v1823, 0
    %v1868 = vsel %vm185, %v1824, 0
    %v1871 = vsel %vm185, %v1825, 0
    %v1874 = vsel %vm185, %v1826, 0
    %v1877 = vsel %vm185, %v1827, 0
    %v1880 = vsel %vm185, %v1828, 0
    %1882 = vmatpush.msra.mxu0 0.0
    %1883 = vmatpush.msra.mxu0 0.0
    %1884 = vmatpush.msra.mxu0 0.0
    %1885 = vmatpush.msra.mxu0 0.0
    %1886 = vmatpush.msra.mxu0 0.0
    %1887 = vmatpush.msra.mxu0 0.0
    %1888 = vmatpush.msra.mxu0 0.0
    %1889 = vmatpush.msra.mxu0 0.0
    %1890 = vmatpush.msra.mxu0 0.0
    %1891 = vmatpush.msra.mxu0 0.0
    %1892 = vmatpush.msra.mxu0 0.0
    %1893 = vmatpush.msra.mxu0 0.0
    %1894 = vmatpush.msra.mxu0 %v1832
    %1895 = vmatpush.msra.mxu0 %v1831
    %1896 = vmatpush.msra.mxu0 %v1830
    %1897 = vmatpush.msra.mxu0 %v1829
    %1898 = vmatmul.f32.gmra.mxu0 %v1835
    %v1899 = vpop.f32.mrf.mxu0
    %v1900 = vadd.f32 %v1833, %v1899
    %1901 = vmatmul.f32.gmra.mxu0 %v1838
    %v1902 = vpop.f32.mrf.mxu0
    %v1903 = vadd.f32 %v1833, %v1902
    %1904 = vmatmul.f32.gmra.mxu0 %v1841
    %v1905 = vpop.f32.mrf.mxu0
    %v1906 = vadd.f32 %v1833, %v1905
    %1907 = vmatmul.f32.gmra.mxu0 %v1844
    %v1908 = vpop.f32.mrf.mxu0
    %v1909 = vadd.f32 %v1833, %v1908
    %1910 = vmatmul.f32.gmra.mxu0 %v1847
    %v1911 = vpop.f32.mrf.mxu0
    %v1912 = vadd.f32 %v1833, %v1911
    %1913 = vmatmul.f32.gmra.mxu0 %v1850
    %v1914 = vpop.f32.mrf.mxu0
    %v1915 = vadd.f32 %v1833, %v1914
    %1916 = vmatmul.f32.gmra.mxu0 %v1853
    %v1917 = vpop.f32.mrf.mxu0
    %v1918 = vadd.f32 %v1833, %v1917
    %1919 = vmatmul.f32.gmra.mxu0 %v1856
    %v1920 = vpop.f32.mrf.mxu0
    %v1921 = vadd.f32 %v1833, %v1920
    %1922 = vmatmul.f32.gmra.mxu0 %v1859
    %v1923 = vpop.f32.mrf.mxu0
    %v1924 = vadd.f32 %v1833, %v1923
    %1925 = vmatmul.f32.gmra.mxu0 %v1862
    %v1926 = vpop.f32.mrf.mxu0
    %v1927 = vadd.f32 %v1833, %v1926
    %1928 = vmatmul.f32.gmra.mxu0 %v1865
    %v1929 = vpop.f32.mrf.mxu0
    %v1930 = vadd.f32 %v1833, %v1929
    %1931 = vmatmul.f32.gmra.mxu0 %v1868
    %v1932 = vpop.f32.mrf.mxu0
    %v1933 = vadd.f32 %v1833, %v1932
    %1934 = vmatmul.f32.gmra.mxu0 %v1871
    %v1935 = vpop.f32.mrf.mxu0
    %v1936 = vadd.f32 %v1833, %v1935
    %1937 = vmatmul.f32.gmra.mxu0 %v1874
    %v1938 = vpop.f32.mrf.mxu0
    %v1939 = vadd.f32 %v1833, %v1938
    %1940 = vmatmul.f32.gmra.mxu0 %v1877
    %v1941 = vpop.f32.mrf.mxu0
    %v1942 = vadd.f32 %v1833, %v1941
    %1943 = vmatmul.f32.gmra.mxu0 %v1880
    %v1944 = vpop.f32.mrf.mxu0
    %v1945 = vadd.f32 %v1833, %v1944
    %1946 = vdwg.mxu0
    %v1947 = vmul.f32 %v1900, 0.5
    %v1948 = vmul.f32 %v1903, 0.5
    %v1949 = vmul.f32 %v1906, 0.5
    %v1950 = vmul.f32 %v1909, 0.5
    %v1951 = vmul.f32 %v1912, 0.5
    %v1952 = vmul.f32 %v1915, 0.5
    %v1953 = vmul.f32 %v1918, 0.5
    %v1954 = vmul.f32 %v1921, 0.5
    %v1955 = vmul.f32 %v1924, 0.5
    %v1956 = vmul.f32 %v1927, 0.5
    %v1957 = vmul.f32 %v1930, 0.5
    %v1958 = vmul.f32 %v1933, 0.5
    %v1959 = vmul.f32 %v1936, 0.5
    %v1960 = vmul.f32 %v1939, 0.5
    %v1961 = vmul.f32 %v1942, 0.5
    %v1962 = vmul.f32 %v1945, 0.5
    %v1963 = vmul.f32 %v1900, 0.70710677
    %v1964 = vmul.f32 %v1903, 0.70710677
    %v1965 = vmul.f32 %v1906, 0.70710677
    %v1966 = vmul.f32 %v1909, 0.70710677
    %v1967 = vmul.f32 %v1912, 0.70710677
    %v1968 = vmul.f32 %v1915, 0.70710677
    %v1969 = vmul.f32 %v1918, 0.70710677
    %v1970 = vmul.f32 %v1921, 0.70710677
    %v1971 = vmul.f32 %v1924, 0.70710677
    %v1972 = vmul.f32 %v1927, 0.70710677
    %v1973 = vmul.f32 %v1930, 0.70710677
    %v1974 = vmul.f32 %v1933, 0.70710677
    %v1975 = vmul.f32 %v1936, 0.70710677
    %v1976 = vmul.f32 %v1939, 0.70710677
    %v1977 = vmul.f32 %v1942, 0.70710677
    %v1978 = vmul.f32 %v1945, 0.70710677
    %v1979 = vand.u32 2147483647, %v1963
    %v1980 = vand.u32 2147483647, %v1964
    %v1981 = vand.u32 2147483647, %v1965
    %v1982 = vand.u32 2147483647, %v1966
    %v1983 = vand.u32 2147483647, %v1967
    %v1984 = vand.u32 2147483647, %v1968
    %v1985 = vand.u32 2147483647, %v1969
    %v1986 = vand.u32 2147483647, %v1970
    %v1987 = vand.u32 2147483647, %v1971
    %v1988 = vand.u32 2147483647, %v1972
    %v1989 = vand.u32 2147483647, %v1973
    %v1990 = vand.u32 2147483647, %v1974
    %v1991 = vand.u32 2147483647, %v1975
    %v1992 = vand.u32 2147483647, %v1976
    %v1993 = vand.u32 2147483647, %v1977
    %v1994 = vand.u32 2147483647, %v1978
    %v1995 = vmul.f32 %v1979, 0.3275911
    %v1996 = vmul.f32 %v1980, 0.3275911
    %v1997 = vmul.f32 %v1981, 0.3275911
    %v1998 = vmul.f32 %v1982, 0.3275911
    %v1999 = vmul.f32 %v1983, 0.3275911
    %v2000 = vmul.f32 %v1984, 0.3275911
    %v2001 = vmul.f32 %v1985, 0.3275911
    %v2002 = vmul.f32 %v1986, 0.3275911
    %v2003 = vmul.f32 %v1987, 0.3275911
    %v2004 = vmul.f32 %v1988, 0.3275911
    %v2005 = vmul.f32 %v1989, 0.3275911
    %v2006 = vmul.f32 %v1990, 0.3275911
    %v2007 = vmul.f32 %v1991, 0.3275911
    %v2008 = vmul.f32 %v1992, 0.3275911
    %v2009 = vmul.f32 %v1993, 0.3275911
    %v2010 = vmul.f32 %v1994, 0.3275911
    %v2011 = vadd.f32 %v1995, 1.0
    %v2012 = vadd.f32 %v1996, 1.0
    %v2013 = vadd.f32 %v1997, 1.0
    %v2014 = vadd.f32 %v1998, 1.0
    %v2015 = vadd.f32 %v1999, 1.0
    %v2016 = vadd.f32 %v2000, 1.0
    %v2017 = vadd.f32 %v2001, 1.0
    %v2018 = vadd.f32 %v2002, 1.0
    %v2019 = vadd.f32 %v2003, 1.0
    %v2020 = vadd.f32 %v2004, 1.0
    %v2021 = vadd.f32 %v2005, 1.0
    %v2022 = vadd.f32 %v2006, 1.0
    %v2023 = vadd.f32 %v2007, 1.0
    %v2024 = vadd.f32 %v2008, 1.0
    %v2025 = vadd.f32 %v2009, 1.0
    %v2026 = vadd.f32 %v2010, 1.0
    %v2027 = vrcp.pop %v2011
    %v2028 = vmul.f32 %v2011, %v2027
    %v2029 = vsub.f32 1.0, %v2028
    %v2030 = vmul.f32 %v2027, %v2029
    %v2031 = vadd.f32 %v2027, %v2030
    %vm2032 = vweird.f32 %v2011
    %vm2033 = vweird.f32 %v2027
    %vm2034 = vmor %vm2032, %vm2033
    %v2035 = vsel %vm2034, %v2027, %v2031
    %v2036 = vand.u32 2147483647, %v2011
    %vm2037 = vcmp.eq.f32.partialorder %v2036, 8.507059e+37
    %v2038 = vand.u32 %v2011, 2147483648
    %v2039 = vor.u32 1.1754944e-38, %v2038
    %v2040 = vsel %vm2037, %v2039, %v2035
    %v2041 = vmul.f32 1.0, %v2040
    %v2042 = vrcp.pop %v2012
    %v2043 = vmul.f32 %v2012, %v2042
    %v2044 = vsub.f32 1.0, %v2043
    %v2045 = vmul.f32 %v2042, %v2044
    %v2046 = vadd.f32 %v2042, %v2045
    %vm2047 = vweird.f32 %v2012
    %vm2048 = vweird.f32 %v2042
    %vm2049 = vmor %vm2047, %vm2048
    %v2050 = vsel %vm2049, %v2042, %v2046
    %v2051 = vand.u32 2147483647, %v2012
    %vm2052 = vcmp.eq.f32.partialorder %v2051, 8.507059e+37
    %v2053 = vand.u32 %v2012, 2147483648
    %v2054 = vor.u32 1.1754944e-38, %v2053
    %v2055 = vsel %vm2052, %v2054, %v2050
    %v2056 = vmul.f32 1.0, %v2055
    %v2057 = vrcp.pop %v2013
    %v2058 = vmul.f32 %v2013, %v2057
    %v2059 = vsub.f32 1.0, %v2058
    %v2060 = vmul.f32 %v2057, %v2059
    %v2061 = vadd.f32 %v2057, %v2060
    %vm2062 = vweird.f32 %v2013
    %vm2063 = vweird.f32 %v2057
    %vm2064 = vmor %vm2062, %vm2063
    %v2065 = vsel %vm2064, %v2057, %v2061
    %v2066 = vand.u32 2147483647, %v2013
    %vm2067 = vcmp.eq.f32.partialorder %v2066, 8.507059e+37
    %v2068 = vand.u32 %v2013, 2147483648
    %v2069 = vor.u32 1.1754944e-38, %v2068
    %v2070 = vsel %vm2067, %v2069, %v2065
    %v2071 = vmul.f32 1.0, %v2070
    %v2072 = vrcp.pop %v2014
    %v2073 = vmul.f32 %v2014, %v2072
    %v2074 = vsub.f32 1.0, %v2073
    %v2075 = vmul.f32 %v2072, %v2074
    %v2076 = vadd.f32 %v2072, %v2075
    %vm2077 = vweird.f32 %v2014
    %vm2078 = vweird.f32 %v2072
    %vm2079 = vmor %vm2077, %vm2078
    %v2080 = vsel %vm2079, %v2072, %v2076
    %v2081 = vand.u32 2147483647, %v2014
    %vm2082 = vcmp.eq.f32.partialorder %v2081, 8.507059e+37
    %v2083 = vand.u32 %v2014, 2147483648
    %v2084 = vor.u32 1.1754944e-38, %v2083
    %v2085 = vsel %vm2082, %v2084, %v2080
    %v2086 = vmul.f32 1.0, %v2085
    %v2087 = vrcp.pop %v2015
    %v2088 = vmul.f32 %v2015, %v2087
    %v2089 = vsub.f32 1.0, %v2088
    %v2090 = vmul.f32 %v2087, %v2089
    %v2091 = vadd.f32 %v2087, %v2090
    %vm2092 = vweird.f32 %v2015
    %vm2093 = vweird.f32 %v2087
    %vm2094 = vmor %vm2092, %vm2093
    %v2095 = vsel %vm2094, %v2087, %v2091
    %v2096 = vand.u32 2147483647, %v2015
    %vm2097 = vcmp.eq.f32.partialorder %v2096, 8.507059e+37
    %v2098 = vand.u32 %v2015, 2147483648
    %v2099 = vor.u32 1.1754944e-38, %v2098
    %v2100 = vsel %vm2097, %v2099, %v2095
    %v2101 = vmul.f32 1.0, %v2100
    %v2102 = vrcp.pop %v2016
    %v2103 = vmul.f32 %v2016, %v2102
    %v2104 = vsub.f32 1.0, %v2103
    %v2105 = vmul.f32 %v2102, %v2104
    %v2106 = vadd.f32 %v2102, %v2105
    %vm2107 = vweird.f32 %v2016
    %vm2108 = vweird.f32 %v2102
    %vm2109 = vmor %vm2107, %vm2108
    %v2110 = vsel %vm2109, %v2102, %v2106
    %v2111 = vand.u32 2147483647, %v2016
    %vm2112 = vcmp.eq.f32.partialorder %v2111, 8.507059e+37
    %v2113 = vand.u32 %v2016, 2147483648
    %v2114 = vor.u32 1.1754944e-38, %v2113
    %v2115 = vsel %vm2112, %v2114, %v2110
    %v2116 = vmul.f32 1.0, %v2115
    %v2117 = vrcp.pop %v2017
    %v2118 = vmul.f32 %v2017, %v2117
    %v2119 = vsub.f32 1.0, %v2118
    %v2120 = vmul.f32 %v2117, %v2119
    %v2121 = vadd.f32 %v2117, %v2120
    %vm2122 = vweird.f32 %v2017
    %vm2123 = vweird.f32 %v2117
    %vm2124 = vmor %vm2122, %vm2123
    %v2125 = vsel %vm2124, %v2117, %v2121
    %v2126 = vand.u32 2147483647, %v2017
    %vm2127 = vcmp.eq.f32.partialorder %v2126, 8.507059e+37
    %v2128 = vand.u32 %v2017, 2147483648
    %v2129 = vor.u32 1.1754944e-38, %v2128
    %v2130 = vsel %vm2127, %v2129, %v2125
    %v2131 = vmul.f32 1.0, %v2130
    %v2132 = vrcp.pop %v2018
    %v2133 = vmul.f32 %v2018, %v2132
    %v2134 = vsub.f32 1.0, %v2133
    %v2135 = vmul.f32 %v2132, %v2134
    %v2136 = vadd.f32 %v2132, %v2135
    %vm2137 = vweird.f32 %v2018
    %vm2138 = vweird.f32 %v2132
    %vm2139 = vmor %vm2137, %vm2138
    %v2140 = vsel %vm2139, %v2132, %v2136
    %v2141 = vand.u32 2147483647, %v2018
    %vm2142 = vcmp.eq.f32.partialorder %v2141, 8.507059e+37
    %v2143 = vand.u32 %v2018, 2147483648
    %v2144 = vor.u32 1.1754944e-38, %v2143
    %v2145 = vsel %vm2142, %v2144, %v2140
    %v2146 = vmul.f32 1.0, %v2145
    %v2147 = vrcp.pop %v2019
    %v2148 = vmul.f32 %v2019, %v2147
    %v2149 = vsub.f32 1.0, %v2148
    %v2150 = vmul.f32 %v2147, %v2149
    %v2151 = vadd.f32 %v2147, %v2150
    %vm2152 = vweird.f32 %v2019
    %vm2153 = vweird.f32 %v2147
    %vm2154 = vmor %vm2152, %vm2153
    %v2155 = vsel %vm2154, %v2147, %v2151
    %v2156 = vand.u32 2147483647, %v2019
    %vm2157 = vcmp.eq.f32.partialorder %v2156, 8.507059e+37
    %v2158 = vand.u32 %v2019, 2147483648
    %v2159 = vor.u32 1.1754944e-38, %v2158
    %v2160 = vsel %vm2157, %v2159, %v2155
    %v2161 = vmul.f32 1.0, %v2160
    %v2162 = vrcp.pop %v2020
    %v2163 = vmul.f32 %v2020, %v2162
    %v2164 = vsub.f32 1.0, %v2163
    %v2165 = vmul.f32 %v2162, %v2164
    %v2166 = vadd.f32 %v2162, %v2165
    %vm2167 = vweird.f32 %v2020
    %vm2168 = vweird.f32 %v2162
    %vm2169 = vmor %vm2167, %vm2168
    %v2170 = vsel %vm2169, %v2162, %v2166
    %v2171 = vand.u32 2147483647, %v2020
    %vm2172 = vcmp.eq.f32.partialorder %v2171, 8.507059e+37
    %v2173 = vand.u32 %v2020, 2147483648
    %v2174 = vor.u32 1.1754944e-38, %v2173
    %v2175 = vsel %vm2172, %v2174, %v2170
    %v2176 = vmul.f32 1.0, %v2175
    %v2177 = vrcp.pop %v2021
    %v2178 = vmul.f32 %v2021, %v2177
    %v2179 = vsub.f32 1.0, %v2178
    %v2180 = vmul.f32 %v2177, %v2179
    %v2181 = vadd.f32 %v2177, %v2180
    %vm2182 = vweird.f32 %v2021
    %vm2183 = vweird.f32 %v2177
    %vm2184 = vmor %vm2182, %vm2183
    %v2185 = vsel %vm2184, %v2177, %v2181
    %v2186 = vand.u32 2147483647, %v2021
    %vm2187 = vcmp.eq.f32.partialorder %v2186, 8.507059e+37
    %v2188 = vand.u32 %v2021, 2147483648
    %v2189 = vor.u32 1.1754944e-38, %v2188
    %v2190 = vsel %vm2187, %v2189, %v2185
    %v2191 = vmul.f32 1.0, %v2190
    %v2192 = vrcp.pop %v2022
    %v2193 = vmul.f32 %v2022, %v2192
    %v2194 = vsub.f32 1.0, %v2193
    %v2195 = vmul.f32 %v2192, %v2194
    %v2196 = vadd.f32 %v2192, %v2195
    %vm2197 = vweird.f32 %v2022
    %vm2198 = vweird.f32 %v2192
    %vm2199 = vmor %vm2197, %vm2198
    %v2200 = vsel %vm2199, %v2192, %v2196
    %v2201 = vand.u32 2147483647, %v2022
    %vm2202 = vcmp.eq.f32.partialorder %v2201, 8.507059e+37
    %v2203 = vand.u32 %v2022, 2147483648
    %v2204 = vor.u32 1.1754944e-38, %v2203
    %v2205 = vsel %vm2202, %v2204, %v2200
    %v2206 = vmul.f32 1.0, %v2205
    %v2207 = vrcp.pop %v2023
    %v2208 = vmul.f32 %v2023, %v2207
    %v2209 = vsub.f32 1.0, %v2208
    %v2210 = vmul.f32 %v2207, %v2209
    %v2211 = vadd.f32 %v2207, %v2210
    %vm2212 = vweird.f32 %v2023
    %vm2213 = vweird.f32 %v2207
    %vm2214 = vmor %vm2212, %vm2213
    %v2215 = vsel %vm2214, %v2207, %v2211
    %v2216 = vand.u32 2147483647, %v2023
    %vm2217 = vcmp.eq.f32.partialorder %v2216, 8.507059e+37
    %v2218 = vand.u32 %v2023, 2147483648
    %v2219 = vor.u32 1.1754944e-38, %v2218
    %v2220 = vsel %vm2217, %v2219, %v2215
    %v2221 = vmul.f32 1.0, %v2220
    %v2222 = vrcp.pop %v2024
    %v2223 = vmul.f32 %v2024, %v2222
    %v2224 = vsub.f32 1.0, %v2223
    %v2225 = vmul.f32 %v2222, %v2224
    %v2226 = vadd.f32 %v2222, %v2225
    %vm2227 = vweird.f32 %v2024
    %vm2228 = vweird.f32 %v2222
    %vm2229 = vmor %vm2227, %vm2228
    %v2230 = vsel %vm2229, %v2222, %v2226
    %v2231 = vand.u32 2147483647, %v2024
    %vm2232 = vcmp.eq.f32.partialorder %v2231, 8.507059e+37
    %v2233 = vand.u32 %v2024, 2147483648
    %v2234 = vor.u32 1.1754944e-38, %v2233
    %v2235 = vsel %vm2232, %v2234, %v2230
    %v2236 = vmul.f32 1.0, %v2235
    %v2237 = vrcp.pop %v2025
    %v2238 = vmul.f32 %v2025, %v2237
    %v2239 = vsub.f32 1.0, %v2238
    %v2240 = vmul.f32 %v2237, %v2239
    %v2241 = vadd.f32 %v2237, %v2240
    %vm2242 = vweird.f32 %v2025
    %vm2243 = vweird.f32 %v2237
    %vm2244 = vmor %vm2242, %vm2243
    %v2245 = vsel %vm2244, %v2237, %v2241
    %v2246 = vand.u32 2147483647, %v2025
    %vm2247 = vcmp.eq.f32.partialorder %v2246, 8.507059e+37
    %v2248 = vand.u32 %v2025, 2147483648
    %v2249 = vor.u32 1.1754944e-38, %v2248
    %v2250 = vsel %vm2247, %v2249, %v2245
    %v2251 = vmul.f32 1.0, %v2250
    %v2252 = vrcp.pop %v2026
    %v2253 = vmul.f32 %v2026, %v2252
    %v2254 = vsub.f32 1.0, %v2253
    %v2255 = vmul.f32 %v2252, %v2254
    %v2256 = vadd.f32 %v2252, %v2255
    %vm2257 = vweird.f32 %v2026
    %vm2258 = vweird.f32 %v2252
    %vm2259 = vmor %vm2257, %vm2258
    %v2260 = vsel %vm2259, %v2252, %v2256
    %v2261 = vand.u32 2147483647, %v2026
    %vm2262 = vcmp.eq.f32.partialorder %v2261, 8.507059e+37
    %v2263 = vand.u32 %v2026, 2147483648
    %v2264 = vor.u32 1.1754944e-38, %v2263
    %v2265 = vsel %vm2262, %v2264, %v2260
    %v2266 = vmul.f32 1.0, %v2265
    %v2267 = vmul.f32 %v2041, 1.0614054
    %v2268 = vmul.f32 %v2056, 1.0614054
    %v2269 = vmul.f32 %v2071, 1.0614054
    %v2270 = vmul.f32 %v2086, 1.0614054
    %v2271 = vmul.f32 %v2101, 1.0614054
    %v2272 = vmul.f32 %v2116, 1.0614054
    %v2273 = vmul.f32 %v2131, 1.0614054
    %v2274 = vmul.f32 %v2146, 1.0614054
    %v2275 = vmul.f32 %v2161, 1.0614054
    %v2276 = vmul.f32 %v2176, 1.0614054
    %v2277 = vmul.f32 %v2191, 1.0614054
    %v2278 = vmul.f32 %v2206, 1.0614054
    %v2279 = vmul.f32 %v2221, 1.0614054
    %v2280 = vmul.f32 %v2236, 1.0614054
    %v2281 = vmul.f32 %v2251, 1.0614054
    %v2282 = vmul.f32 %v2266, 1.0614054
    %v2283 = vadd.f32 %v2267, -1.4531521
    %v2284 = vadd.f32 %v2268, -1.4531521
    %v2285 = vadd.f32 %v2269, -1.4531521
    %v2286 = vadd.f32 %v2270, -1.4531521
    %v2287 = vadd.f32 %v2271, -1.4531521
    %v2288 = vadd.f32 %v2272, -1.4531521
    %v2289 = vadd.f32 %v2273, -1.4531521
    %v2290 = vadd.f32 %v2274, -1.4531521
    %v2291 = vadd.f32 %v2275, -1.4531521
    %v2292 = vadd.f32 %v2276, -1.4531521
    %v2293 = vadd.f32 %v2277, -1.4531521
    %v2294 = vadd.f32 %v2278, -1.4531521
    %v2295 = vadd.f32 %v2279, -1.4531521
    %v2296 = vadd.f32 %v2280, -1.4531521
    %v2297 = vadd.f32 %v2281, -1.4531521
    %v2298 = vadd.f32 %v2282, -1.4531521
    %v2299 = vmul.f32 %v2283, %v2041
    %v2300 = vmul.f32 %v2284, %v2056
    %v2301 = vmul.f32 %v2285, %v2071
    %v2302 = vmul.f32 %v2286, %v2086
    %v2303 = vmul.f32 %v2287, %v2101
    %v2304 = vmul.f32 %v2288, %v2116
    %v2305 = vmul.f32 %v2289, %v2131
    %v2306 = vmul.f32 %v2290, %v2146
    %v2307 = vmul.f32 %v2291, %v2161
    %v2308 = vmul.f32 %v2292, %v2176
    %v2309 = vmul.f32 %v2293, %v2191
    %v2310 = vmul.f32 %v2294, %v2206
    %v2311 = vmul.f32 %v2295, %v2221
    %v2312 = vmul.f32 %v2296, %v2236
    %v2313 = vmul.f32 %v2297, %v2251
    %v2314 = vmul.f32 %v2298, %v2266
    %v2315 = vadd.f32 %v2299, 1.4214138
    %v2316 = vadd.f32 %v2300, 1.4214138
    %v2317 = vadd.f32 %v2301, 1.4214138
    %v2318 = vadd.f32 %v2302, 1.4214138
    %v2319 = vadd.f32 %v2303, 1.4214138
    %v2320 = vadd.f32 %v2304, 1.4214138
    %v2321 = vadd.f32 %v2305, 1.4214138
    %v2322 = vadd.f32 %v2306, 1.4214138
    %v2323 = vadd.f32 %v2307, 1.4214138
    %v2324 = vadd.f32 %v2308, 1.4214138
    %v2325 = vadd.f32 %v2309, 1.4214138
    %v2326 = vadd.f32 %v2310, 1.4214138
    %v2327 = vadd.f32 %v2311, 1.4214138
    %v2328 = vadd.f32 %v2312, 1.4214138
    %v2329 = vadd.f32 %v2313, 1.4214138
    %v2330 = vadd.f32 %v2314, 1.4214138
    %v2331 = vmul.f32 %v2315, %v2041
    %v2332 = vmul.f32 %v2316, %v2056
    %v2333 = vmul.f32 %v2317, %v2071
    %v2334 = vmul.f32 %v2318, %v2086
    %v2335 = vmul.f32 %v2319, %v2101
    %v2336 = vmul.f32 %v2320, %v2116
    %v2337 = vmul.f32 %v2321, %v2131
    %v2338 = vmul.f32 %v2322, %v2146
    %v2339 = vmul.f32 %v2323, %v2161
    %v2340 = vmul.f32 %v2324, %v2176
    %v2341 = vmul.f32 %v2325, %v2191
    %v2342 = vmul.f32 %v2326, %v2206
    %v2343 = vmul.f32 %v2327, %v2221
    %v2344 = vmul.f32 %v2328, %v2236
    %v2345 = vmul.f32 %v2329, %v2251
    %v2346 = vmul.f32 %v2330, %v2266
    %v2347 = vadd.f32 %v2331, -0.28449672
    %v2348 = vadd.f32 %v2332, -0.28449672
    %v2349 = vadd.f32 %v2333, -0.28449672
    %v2350 = vadd.f32 %v2334, -0.28449672
    %v2351 = vadd.f32 %v2335, -0.28449672
    %v2352 = vadd.f32 %v2336, -0.28449672
    %v2353 = vadd.f32 %v2337, -0.28449672
    %v2354 = vadd.f32 %v2338, -0.28449672
    %v2355 = vadd.f32 %v2339, -0.28449672
    %v2356 = vadd.f32 %v2340, -0.28449672
    %v2357 = vadd.f32 %v2341, -0.28449672
    %v2358 = vadd.f32 %v2342, -0.28449672
    %v2359 = vadd.f32 %v2343, -0.28449672
    %v2360 = vadd.f32 %v2344, -0.28449672
    %v2361 = vadd.f32 %v2345, -0.28449672
    %v2362 = vadd.f32 %v2346, -0.28449672
    %v2363 = vmul.f32 %v2347, %v2041
    %v2364 = vmul.f32 %v2348, %v2056
    %v2365 = vmul.f32 %v2349, %v2071
    %v2366 = vmul.f32 %v2350, %v2086
    %v2367 = vmul.f32 %v2351, %v2101
    %v2368 = vmul.f32 %v2352, %v2116
    %v2369 = vmul.f32 %v2353, %v2131
    %v2370 = vmul.f32 %v2354, %v2146
    %v2371 = vmul.f32 %v2355, %v2161
    %v2372 = vmul.f32 %v2356, %v2176
    %v2373 = vmul.f32 %v2357, %v2191
    %v2374 = vmul.f32 %v2358, %v2206
    %v2375 = vmul.f32 %v2359, %v2221
    %v2376 = vmul.f32 %v2360, %v2236
    %v2377 = vmul.f32 %v2361, %v2251
    %v2378 = vmul.f32 %v2362, %v2266
    %v2379 = vadd.f32 %v2363, 0.2548296
    %v2380 = vadd.f32 %v2364, 0.2548296
    %v2381 = vadd.f32 %v2365, 0.2548296
    %v2382 = vadd.f32 %v2366, 0.2548296
    %v2383 = vadd.f32 %v2367, 0.2548296
    %v2384 = vadd.f32 %v2368, 0.2548296
    %v2385 = vadd.f32 %v2369, 0.2548296
    %v2386 = vadd.f32 %v2370, 0.2548296
    %v2387 = vadd.f32 %v2371, 0.2548296
    %v2388 = vadd.f32 %v2372, 0.2548296
    %v2389 = vadd.f32 %v2373, 0.2548296
    %v2390 = vadd.f32 %v2374, 0.2548296
    %v2391 = vadd.f32 %v2375, 0.2548296
    %v2392 = vadd.f32 %v2376, 0.2548296
    %v2393 = vadd.f32 %v2377, 0.2548296
    %v2394 = vadd.f32 %v2378, 0.2548296
    %v2395 = vmul.f32 %v2379, %v2041
    %v2396 = vmul.f32 %v2380, %v2056
    %v2397 = vmul.f32 %v2381, %v2071
    %v2398 = vmul.f32 %v2382, %v2086
    %v2399 = vmul.f32 %v2383, %v2101
    %v2400 = vmul.f32 %v2384, %v2116
    %v2401 = vmul.f32 %v2385, %v2131
    %v2402 = vmul.f32 %v2386, %v2146
    %v2403 = vmul.f32 %v2387, %v2161
    %v2404 = vmul.f32 %v2388, %v2176
    %v2405 = vmul.f32 %v2389, %v2191
    %v2406 = vmul.f32 %v2390, %v2206
    %v2407 = vmul.f32 %v2391, %v2221
    %v2408 = vmul.f32 %v2392, %v2236
    %v2409 = vmul.f32 %v2393, %v2251
    %v2410 = vmul.f32 %v2394, %v2266
    %v2411 = vsub.f32 0.0, %v1979
    %v2412 = vsub.f32 0.0, %v1980
    %v2413 = vsub.f32 0.0, %v1981
    %v2414 = vsub.f32 0.0, %v1982
    %v2415 = vsub.f32 0.0, %v1983
    %v2416 = vsub.f32 0.0, %v1984
    %v2417 = vsub.f32 0.0, %v1985
    %v2418 = vsub.f32 0.0, %v1986
    %v2419 = vsub.f32 0.0, %v1987
    %v2420 = vsub.f32 0.0, %v1988
    %v2421 = vsub.f32 0.0, %v1989
    %v2422 = vsub.f32 0.0, %v1990
    %v2423 = vsub.f32 0.0, %v1991
    %v2424 = vsub.f32 0.0, %v1992
    %v2425 = vsub.f32 0.0, %v1993
    %v2426 = vsub.f32 0.0, %v1994
    %v2427 = vmul.f32 %v2411, %v1979
    %v2428 = vmul.f32 %v2412, %v1980
    %v2429 = vmul.f32 %v2413, %v1981
    %v2430 = vmul.f32 %v2414, %v1982
    %v2431 = vmul.f32 %v2415, %v1983
    %v2432 = vmul.f32 %v2416, %v1984
    %v2433 = vmul.f32 %v2417, %v1985
    %v2434 = vmul.f32 %v2418, %v1986
    %v2435 = vmul.f32 %v2419, %v1987
    %v2436 = vmul.f32 %v2420, %v1988
    %v2437 = vmul.f32 %v2421, %v1989
    %v2438 = vmul.f32 %v2422, %v1990
    %v2439 = vmul.f32 %v2423, %v1991
    %v2440 = vmul.f32 %v2424, %v1992
    %v2441 = vmul.f32 %v2425, %v1993
    %v2442 = vmul.f32 %v2426, %v1994
    %v2443 = vmul.f32 %v2427, 1.442695
    %v2444 = vpow.pop %v2443
    %v2445 = vmul.f32 %v2428, 1.442695
    %v2446 = vpow.pop %v2445
    %v2447 = vmul.f32 %v2429, 1.442695
    %v2448 = vpow.pop %v2447
    %v2449 = vmul.f32 %v2430, 1.442695
    %v2450 = vpow.pop %v2449
    %v2451 = vmul.f32 %v2431, 1.442695
    %v2452 = vpow.pop %v2451
    %v2453 = vmul.f32 %v2432, 1.442695
    %v2454 = vpow.pop %v2453
    %v2455 = vmul.f32 %v2433, 1.442695
    %v2456 = vpow.pop %v2455
    %v2457 = vmul.f32 %v2434, 1.442695
    %v2458 = vpow.pop %v2457
    %v2459 = vmul.f32 %v2435, 1.442695
    %v2460 = vpow.pop %v2459
    %v2461 = vmul.f32 %v2436, 1.442695
    %v2462 = vpow.pop %v2461
    %v2463 = vmul.f32 %v2437, 1.442695
    %v2464 = vpow.pop %v2463
    %v2465 = vmul.f32 %v2438, 1.442695
    %v2466 = vpow.pop %v2465
    %v2467 = vmul.f32 %v2439, 1.442695
    %v2468 = vpow.pop %v2467
    %v2469 = vmul.f32 %v2440, 1.442695
    %v2470 = vpow.pop %v2469
    %v2471 = vmul.f32 %v2441, 1.442695
    %v2472 = vpow.pop %v2471
    %v2473 = vmul.f32 %v2442, 1.442695
    %v2474 = vpow.pop %v2473
    %v2475 = vmul.f32 %v2395, %v2444
    %v2476 = vmul.f32 %v2396, %v2446
    %v2477 = vmul.f32 %v2397, %v2448
    %v2478 = vmul.f32 %v2398, %v2450
    %v2479 = vmul.f32 %v2399, %v2452
    %v2480 = vmul.f32 %v2400, %v2454
    %v2481 = vmul.f32 %v2401, %v2456
    %v2482 = vmul.f32 %v2402, %v2458
    %v2483 = vmul.f32 %v2403, %v2460
    %v2484 = vmul.f32 %v2404, %v2462
    %v2485 = vmul.f32 %v2405, %v2464
    %v2486 = vmul.f32 %v2406, %v2466
    %v2487 = vmul.f32 %v2407, %v2468
    %v2488 = vmul.f32 %v2408, %v2470
    %v2489 = vmul.f32 %v2409, %v2472
    %v2490 = vmul.f32 %v2410, %v2474
    %v2491 = vsub.f32 1.0, %v2475
    %v2492 = vsub.f32 1.0, %v2476
    %v2493 = vsub.f32 1.0, %v2477
    %v2494 = vsub.f32 1.0, %v2478
    %v2495 = vsub.f32 1.0, %v2479
    %v2496 = vsub.f32 1.0, %v2480
    %v2497 = vsub.f32 1.0, %v2481
    %v2498 = vsub.f32 1.0, %v2482
    %v2499 = vsub.f32 1.0, %v2483
    %v2500 = vsub.f32 1.0, %v2484
    %v2501 = vsub.f32 1.0, %v2485
    %v2502 = vsub.f32 1.0, %v2486
    %v2503 = vsub.f32 1.0, %v2487
    %v2504 = vsub.f32 1.0, %v2488
    %v2505 = vsub.f32 1.0, %v2489
    %v2506 = vsub.f32 1.0, %v2490
    %vm2507 = vcmp.ge.f32.partialorder %v1963, 0.0
    %vm2508 = vcmp.ge.f32.partialorder %v1964, 0.0
    %vm2509 = vcmp.ge.f32.partialorder %v1965, 0.0
    %vm2510 = vcmp.ge.f32.partialorder %v1966, 0.0
    %vm2511 = vcmp.ge.f32.partialorder %v1967, 0.0
    %vm2512 = vcmp.ge.f32.partialorder %v1968, 0.0
    %vm2513 = vcmp.ge.f32.partialorder %v1969, 0.0
    %vm2514 = vcmp.ge.f32.partialorder %v1970, 0.0
    %vm2515 = vcmp.ge.f32.partialorder %v1971, 0.0
    %vm2516 = vcmp.ge.f32.partialorder %v1972, 0.0
    %vm2517 = vcmp.ge.f32.partialorder %v1973, 0.0
    %vm2518 = vcmp.ge.f32.partialorder %v1974, 0.0
    %vm2519 = vcmp.ge.f32.partialorder %v1975, 0.0
    %vm2520 = vcmp.ge.f32.partialorder %v1976, 0.0
    %vm2521 = vcmp.ge.f32.partialorder %v1977, 0.0
    %vm2522 = vcmp.ge.f32.partialorder %v1978, 0.0
    %v2523 = vsub.f32 0.0, %v2491
    %v2524 = vsub.f32 0.0, %v2492
    %v2525 = vsub.f32 0.0, %v2493
    %v2526 = vsub.f32 0.0, %v2494
    %v2527 = vsub.f32 0.0, %v2495
    %v2528 = vsub.f32 0.0, %v2496
    %v2529 = vsub.f32 0.0, %v2497
    %v2530 = vsub.f32 0.0, %v2498
    %v2531 = vsub.f32 0.0, %v2499
    %v2532 = vsub.f32 0.0, %v2500
    %v2533 = vsub.f32 0.0, %v2501
    %v2534 = vsub.f32 0.0, %v2502
    %v2535 = vsub.f32 0.0, %v2503
    %v2536 = vsub.f32 0.0, %v2504
    %v2537 = vsub.f32 0.0, %v2505
    %v2538 = vsub.f32 0.0, %v2506
    %v2539 = vsel %vm2507, %v2491, %v2523
    %v2540 = vsel %vm2508, %v2492, %v2524
    %v2541 = vsel %vm2509, %v2493, %v2525
    %v2542 = vsel %vm2510, %v2494, %v2526
    %v2543 = vsel %vm2511, %v2495, %v2527
    %v2544 = vsel %vm2512, %v2496, %v2528
    %v2545 = vsel %vm2513, %v2497, %v2529
    %v2546 = vsel %vm2514, %v2498, %v2530
    %v2547 = vsel %vm2515, %v2499, %v2531
    %v2548 = vsel %vm2516, %v2500, %v2532
    %v2549 = vsel %vm2517, %v2501, %v2533
    %v2550 = vsel %vm2518, %v2502, %v2534
    %v2551 = vsel %vm2519, %v2503, %v2535
    %v2552 = vsel %vm2520, %v2504, %v2536
    %v2553 = vsel %vm2521, %v2505, %v2537
    %v2554 = vsel %vm2522, %v2506, %v2538
    %v2555 = vadd.f32 %v2539, 1.0
    %v2556 = vadd.f32 %v2540, 1.0
    %v2557 = vadd.f32 %v2541, 1.0
    %v2558 = vadd.f32 %v2542, 1.0
    %v2559 = vadd.f32 %v2543, 1.0
    %v2560 = vadd.f32 %v2544, 1.0
    %v2561 = vadd.f32 %v2545, 1.0
    %v2562 = vadd.f32 %v2546, 1.0
    %v2563 = vadd.f32 %v2547, 1.0
    %v2564 = vadd.f32 %v2548, 1.0
    %v2565 = vadd.f32 %v2549, 1.0
    %v2566 = vadd.f32 %v2550, 1.0
    %v2567 = vadd.f32 %v2551, 1.0
    %v2568 = vadd.f32 %v2552, 1.0
    %v2569 = vadd.f32 %v2553, 1.0
    %v2570 = vadd.f32 %v2554, 1.0
    %v2571 = vmul.f32 %v1947, %v2555
    %v2572 = vmul.f32 %v1948, %v2556
    %v2573 = vmul.f32 %v1949, %v2557
    %v2574 = vmul.f32 %v1950, %v2558
    %v2575 = vmul.f32 %v1951, %v2559
    %v2576 = vmul.f32 %v1952, %v2560
    %v2577 = vmul.f32 %v1953, %v2561
    %v2578 = vmul.f32 %v1954, %v2562
    %v2579 = vmul.f32 %v1955, %v2563
    %v2580 = vmul.f32 %v1956, %v2564
    %v2581 = vmul.f32 %v1957, %v2565
    %v2582 = vmul.f32 %v1958, %v2566
    %v2583 = vmul.f32 %v1959, %v2567
    %v2584 = vmul.f32 %v1960, %v2568
    %v2585 = vmul.f32 %v1961, %v2569
    %v2586 = vmul.f32 %v1962, %v2570
    %v2587 = vperm.slane %v184, 0
    %2592 = vrot.lane.b32.xlu0 %v1829, 96
    %v2593 = vpop.permute.xlu0 %2592
    %2594 = vrot.lane.b32.xlu0 %v1830, 96
    %v2595 = vpop.permute.xlu0 %2594
    %2596 = vrot.lane.b32.xlu0 %v1831, 96
    %v2597 = vpop.permute.xlu0 %2596
    %2598 = vrot.lane.b32.xlu0 %v1832, 96
    %v2599 = vpop.permute.xlu0 %2598
    %v2605 = vsel %vm185, %v2571, 0
    %v2608 = vsel %vm185, %v2572, 0
    %v2611 = vsel %vm185, %v2573, 0
    %v2614 = vsel %vm185, %v2574, 0
    %v2617 = vsel %vm185, %v2575, 0
    %v2620 = vsel %vm185, %v2576, 0
    %v2623 = vsel %vm185, %v2577, 0
    %v2626 = vsel %vm185, %v2578, 0
    %v2629 = vsel %vm185, %v2579, 0
    %v2632 = vsel %vm185, %v2580, 0
    %v2635 = vsel %vm185, %v2581, 0
    %v2638 = vsel %vm185, %v2582, 0
    %v2641 = vsel %vm185, %v2583, 0
    %v2644 = vsel %vm185, %v2584, 0
    %v2647 = vsel %vm185, %v2585, 0
    %v2650 = vsel %vm185, %v2586, 0
    %2652 = vmatpush.msra.mxu0 0.0
    %2653 = vmatpush.msra.mxu0 0.0
    %2654 = vmatpush.msra.mxu0 0.0
    %2655 = vmatpush.msra.mxu0 0.0
    %2656 = vmatpush.msra.mxu0 0.0
    %2657 = vmatpush.msra.mxu0 0.0
    %2658 = vmatpush.msra.mxu0 0.0
    %2659 = vmatpush.msra.mxu0 0.0
    %2660 = vmatpush.msra.mxu0 0.0
    %2661 = vmatpush.msra.mxu0 0.0
    %2662 = vmatpush.msra.mxu0 0.0
    %2663 = vmatpush.msra.mxu0 0.0
    %2664 = vmatpush.msra.mxu0 %v2599
    %2665 = vmatpush.msra.mxu0 %v2597
    %2666 = vmatpush.msra.mxu0 %v2595
    %2667 = vmatpush.msra.mxu0 %v2593
    %2668 = vmatmul.f32.gmra.mxu0 %v2605
    %v2669 = vpop.f32.mrf.mxu0
    %v2670 = vadd.f32 %v2587, %v2669
    %2671 = vmatmul.f32.gmra.mxu0 %v2608
    %v2672 = vpop.f32.mrf.mxu0
    %v2673 = vadd.f32 %v2587, %v2672
    %2674 = vmatmul.f32.gmra.mxu0 %v2611
    %v2675 = vpop.f32.mrf.mxu0
    %v2676 = vadd.f32 %v2587, %v2675
    %2677 = vmatmul.f32.gmra.mxu0 %v2614
    %v2678 = vpop.f32.mrf.mxu0
    %v2679 = vadd.f32 %v2587, %v2678
    %2680 = vmatmul.f32.gmra.mxu0 %v2617
    %v2681 = vpop.f32.mrf.mxu0
    %v2682 = vadd.f32 %v2587, %v2681
    %2683 = vmatmul.f32.gmra.mxu0 %v2620
    %v2684 = vpop.f32.mrf.mxu0
    %v2685 = vadd.f32 %v2587, %v2684
    %2686 = vmatmul.f32.gmra.mxu0 %v2623
    %v2687 = vpop.f32.mrf.mxu0
    %v2688 = vadd.f32 %v2587, %v2687
    %2689 = vmatmul.f32.gmra.mxu0 %v2626
    %v2690 = vpop.f32.mrf.mxu0
    %v2691 = vadd.f32 %v2587, %v2690
    %2692 = vmatmul.f32.gmra.mxu0 %v2629
    %v2693 = vpop.f32.mrf.mxu0
    %v2694 = vadd.f32 %v2587, %v2693
    %2695 = vmatmul.f32.gmra.mxu0 %v2632
    %v2696 = vpop.f32.mrf.mxu0
    %v2697 = vadd.f32 %v2587, %v2696
    %2698 = vmatmul.f32.gmra.mxu0 %v2635
    %v2699 = vpop.f32.mrf.mxu0
    %v2700 = vadd.f32 %v2587, %v2699
    %2701 = vmatmul.f32.gmra.mxu0 %v2638
    %v2702 = vpop.f32.mrf.mxu0
    %v2703 = vadd.f32 %v2587, %v2702
    %2704 = vmatmul.f32.gmra.mxu0 %v2641
    %v2705 = vpop.f32.mrf.mxu0
    %v2706 = vadd.f32 %v2587, %v2705
    %2707 = vmatmul.f32.gmra.mxu0 %v2644
    %v2708 = vpop.f32.mrf.mxu0
    %v2709 = vadd.f32 %v2587, %v2708
    %2710 = vmatmul.f32.gmra.mxu0 %v2647
    %v2711 = vpop.f32.mrf.mxu0
    %v2712 = vadd.f32 %v2587, %v2711
    %2713 = vmatmul.f32.gmra.mxu0 %v2650
    %v2714 = vpop.f32.mrf.mxu0
    %v2715 = vadd.f32 %v2587, %v2714
    %2716 = vdwg.mxu0
    %v2717 = vadd.f32 %v1427, %v2670
    %v2718 = vadd.f32 %v1428, %v2673
    %v2719 = vadd.f32 %v1429, %v2676
    %v2720 = vadd.f32 %v1430, %v2679
    %v2721 = vadd.f32 %v1431, %v2682
    %v2722 = vadd.f32 %v1432, %v2685
    %v2723 = vadd.f32 %v1433, %v2688
    %v2724 = vadd.f32 %v1434, %v2691
    %v2725 = vadd.f32 %v1435, %v2694
    %v2726 = vadd.f32 %v1436, %v2697
    %v2727 = vadd.f32 %v1437, %v2700
    %v2728 = vadd.f32 %v1438, %v2703
    %v2729 = vadd.f32 %v1439, %v2706
    %v2730 = vadd.f32 %v1440, %v2709
    %v2731 = vadd.f32 %v1441, %v2712
    %v2732 = vadd.f32 %v1442, %v2715
    %v2733 = vld [vmem:[%s10 + $0x1] sm:$0x1]
    %v2734 = vld [vmem:[%s5] sm:$0xff]
    %v2735 = vld [vmem:[%s5 + $0x8] sm:$0xff]
    %v2736 = vld [vmem:[%s5 + $0x10] sm:$0xff]
    %v2737 = vld [vmem:[%s5 + $0x18] sm:$0xff]
    %v2738 = vld [vmem:[%s5 + $0x20] sm:$0xff]
    %v2739 = vld [vmem:[%s5 + $0x28] sm:$0xff]
    %v2740 = vld [vmem:[%s5 + $0x30] sm:$0xff]
    %v2741 = vld [vmem:[%s5 + $0x38] sm:$0xff]
    %v2742 = vld [vmem:[%s5 + $0x40] sm:$0xff]
    %v2743 = vld [vmem:[%s5 + $0x48] sm:$0xff]
    %v2744 = vld [vmem:[%s5 + $0x50] sm:$0xff]
    %v2745 = vld [vmem:[%s5 + $0x58] sm:$0xff]
    %v2747 = vsel %vm185, %v2717, 0
    %v2750 = vsel %vm185, %v2718, 0
    %v2753 = vsel %vm185, %v2719, 0
    %v2756 = vsel %vm185, %v2720, 0
    %v2759 = vsel %vm185, %v2721, 0
    %v2762 = vsel %vm185, %v2722, 0
    %v2765 = vsel %vm185, %v2723, 0
    %v2768 = vsel %vm185, %v2724, 0
    %v2771 = vsel %vm185, %v2725, 0
    %v2774 = vsel %vm185, %v2726, 0
    %v2777 = vsel %vm185, %v2727, 0
    %v2780 = vsel %vm185, %v2728, 0
    %v2783 = vsel %vm185, %v2729, 0
    %v2786 = vsel %vm185, %v2730, 0
    %v2789 = vsel %vm185, %v2731, 0
    %v2792 = vsel %vm185, %v2732, 0
    %2794 = vmatpush.msra.mxu0 0.0
    %2795 = vmatpush.msra.mxu0 0.0
    %2796 = vmatpush.msra.mxu0 0.0
    %2797 = vmatpush.msra.mxu0 0.0
    %2798 = vmatpush.msra.mxu0 0.0
    %2799 = vmatpush.msra.mxu0 0.0
    %2800 = vmatpush.msra.mxu0 0.0
    %2801 = vmatpush.msra.mxu0 0.0
    %2802 = vmatpush.msra.mxu0 0.0
    %2803 = vmatpush.msra.mxu0 0.0
    %2804 = vmatpush.msra.mxu0 0.0
    %2805 = vmatpush.msra.mxu0 0.0
    %2806 = vmatpush.msra.mxu0 %v2743
    %2807 = vmatpush.msra.mxu0 %v2740
    %2808 = vmatpush.msra.mxu0 %v2737
    %2809 = vmatpush.msra.mxu0 %v2734
    %2810 = vmatmul.f32.gmra.mxu0 %v2747
    %v2811 = vpop.f32.mrf.mxu0
    %v2812 = vadd.f32 0.0, %v2811
    %2813 = vmatmul.f32.gmra.mxu0 %v2750
    %v2814 = vpop.f32.mrf.mxu0
    %v2815 = vadd.f32 0.0, %v2814
    %2816 = vmatmul.f32.gmra.mxu0 %v2753
    %v2817 = vpop.f32.mrf.mxu0
    %v2818 = vadd.f32 0.0, %v2817
    %2819 = vmatmul.f32.gmra.mxu0 %v2756
    %v2820 = vpop.f32.mrf.mxu0
    %v2821 = vadd.f32 0.0, %v2820
    %2822 = vmatmul.f32.gmra.mxu0 %v2759
    %v2823 = vpop.f32.mrf.mxu0
    %v2824 = vadd.f32 0.0, %v2823
    %2825 = vmatmul.f32.gmra.mxu0 %v2762
    %v2826 = vpop.f32.mrf.mxu0
    %v2827 = vadd.f32 0.0, %v2826
    %2828 = vmatmul.f32.gmra.mxu0 %v2765
    %v2829 = vpop.f32.mrf.mxu0
    %v2830 = vadd.f32 0.0, %v2829
    %2831 = vmatmul.f32.gmra.mxu0 %v2768
    %v2832 = vpop.f32.mrf.mxu0
    %v2833 = vadd.f32 0.0, %v2832
    %2834 = vmatmul.f32.gmra.mxu0 %v2771
    %v2835 = vpop.f32.mrf.mxu0
    %v2836 = vadd.f32 0.0, %v2835
    %2837 = vmatmul.f32.gmra.mxu0 %v2774
    %v2838 = vpop.f32.mrf.mxu0
    %v2839 = vadd.f32 0.0, %v2838
    %2840 = vmatmul.f32.gmra.mxu0 %v2777
    %v2841 = vpop.f32.mrf.mxu0
    %v2842 = vadd.f32 0.0, %v2841
    %2843 = vmatmul.f32.gmra.mxu0 %v2780
    %v2844 = vpop.f32.mrf.mxu0
    %v2845 = vadd.f32 0.0, %v2844
    %2846 = vmatmul.f32.gmra.mxu0 %v2783
    %v2847 = vpop.f32.mrf.mxu0
    %v2848 = vadd.f32 0.0, %v2847
    %2849 = vmatmul.f32.gmra.mxu0 %v2786
    %v2850 = vpop.f32.mrf.mxu0
    %v2851 = vadd.f32 0.0, %v2850
    %2852 = vmatmul.f32.gmra.mxu0 %v2789
    %v2853 = vpop.f32.mrf.mxu0
    %v2854 = vadd.f32 0.0, %v2853
    %2855 = vmatmul.f32.gmra.mxu0 %v2792
    %v2856 = vpop.f32.mrf.mxu0
    %v2857 = vadd.f32 0.0, %v2856
    %2858 = vdwg.mxu0
    %2859 = vmatpush.msra.mxu0 0.0
    %2860 = vmatpush.msra.mxu0 0.0
    %2861 = vmatpush.msra.mxu0 0.0
    %2862 = vmatpush.msra.mxu0 0.0
    %2863 = vmatpush.msra.mxu0 0.0
    %2864 = vmatpush.msra.mxu0 0.0
    %2865 = vmatpush.msra.mxu0 0.0
    %2866 = vmatpush.msra.mxu0 0.0
    %2867 = vmatpush.msra.mxu0 0.0
    %2868 = vmatpush.msra.mxu0 0.0
    %2869 = vmatpush.msra.mxu0 0.0
    %2870 = vmatpush.msra.mxu0 0.0
    %2871 = vmatpush.msra.mxu0 %v2744
    %2872 = vmatpush.msra.mxu0 %v2741
    %2873 = vmatpush.msra.mxu0 %v2738
    %2874 = vmatpush.msra.mxu0 %v2735
    %2875 = vmatmul.f32.gmra.mxu0 %v2747
    %v2876 = vpop.f32.mrf.mxu0
    %v2877 = vadd.f32 0.0, %v2876
    %2878 = vmatmul.f32.gmra.mxu0 %v2750
    %v2879 = vpop.f32.mrf.mxu0
    %v2880 = vadd.f32 0.0, %v2879
    %2881 = vmatmul.f32.gmra.mxu0 %v2753
    %v2882 = vpop.f32.mrf.mxu0
    %v2883 = vadd.f32 0.0, %v2882
    %2884 = vmatmul.f32.gmra.mxu0 %v2756
    %v2885 = vpop.f32.mrf.mxu0
    %v2886 = vadd.f32 0.0, %v2885
    %2887 = vmatmul.f32.gmra.mxu0 %v2759
    %v2888 = vpop.f32.mrf.mxu0
    %v2889 = vadd.f32 0.0, %v2888
    %2890 = vmatmul.f32.gmra.mxu0 %v2762
    %v2891 = vpop.f32.mrf.mxu0
    %v2892 = vadd.f32 0.0, %v2891
    %2893 = vmatmul.f32.gmra.mxu0 %v2765
    %v2894 = vpop.f32.mrf.mxu0
    %v2895 = vadd.f32 0.0, %v2894
    %2896 = vmatmul.f32.gmra.mxu0 %v2768
    %v2897 = vpop.f32.mrf.mxu0
    %v2898 = vadd.f32 0.0, %v2897
    %2899 = vmatmul.f32.gmra.mxu0 %v2771
    %v2900 = vpop.f32.mrf.mxu0
    %v2901 = vadd.f32 0.0, %v2900
    %2902 = vmatmul.f32.gmra.mxu0 %v2774
    %v2903 = vpop.f32.mrf.mxu0
    %v2904 = vadd.f32 0.0, %v2903
    %2905 = vmatmul.f32.gmra.mxu0 %v2777
    %v2906 = vpop.f32.mrf.mxu0
    %v2907 = vadd.f32 0.0, %v2906
    %2908 = vmatmul.f32.gmra.mxu0 %v2780
    %v2909 = vpop.f32.mrf.mxu0
    %v2910 = vadd.f32 0.0, %v2909
    %2911 = vmatmul.f32.gmra.mxu0 %v2783
    %v2912 = vpop.f32.mrf.mxu0
    %v2913 = vadd.f32 0.0, %v2912
    %2914 = vmatmul.f32.gmra.mxu0 %v2786
    %v2915 = vpop.f32.mrf.mxu0
    %v2916 = vadd.f32 0.0, %v2915
    %2917 = vmatmul.f32.gmra.mxu0 %v2789
    %v2918 = vpop.f32.mrf.mxu0
    %v2919 = vadd.f32 0.0, %v2918
    %2920 = vmatmul.f32.gmra.mxu0 %v2792
    %v2921 = vpop.f32.mrf.mxu0
    %v2922 = vadd.f32 0.0, %v2921
    %2923 = vdwg.mxu0
    %2924 = vmatpush.msra.mxu0 0.0
    %2925 = vmatpush.msra.mxu0 0.0
    %2926 = vmatpush.msra.mxu0 0.0
    %2927 = vmatpush.msra.mxu0 0.0
    %2928 = vmatpush.msra.mxu0 0.0
    %2929 = vmatpush.msra.mxu0 0.0
    %2930 = vmatpush.msra.mxu0 0.0
    %2931 = vmatpush.msra.mxu0 0.0
    %2932 = vmatpush.msra.mxu0 0.0
    %2933 = vmatpush.msra.mxu0 0.0
    %2934 = vmatpush.msra.mxu0 0.0
    %2935 = vmatpush.msra.mxu0 0.0
    %2936 = vmatpush.msra.mxu0 %v2745
    %2937 = vmatpush.msra.mxu0 %v2742
    %2938 = vmatpush.msra.mxu0 %v2739
    %2939 = vmatpush.msra.mxu0 %v2736
    %2940 = vmatmul.f32.gmra.mxu0 %v2747
    %v2941 = vpop.f32.mrf.mxu0
    %v2942 = vadd.f32 0.0, %v2941
    %2943 = vmatmul.f32.gmra.mxu0 %v2750
    %v2944 = vpop.f32.mrf.mxu0
    %v2945 = vadd.f32 0.0, %v2944
    %2946 = vmatmul.f32.gmra.mxu0 %v2753
    %v2947 = vpop.f32.mrf.mxu0
    %v2948 = vadd.f32 0.0, %v2947
    %2949 = vmatmul.f32.gmra.mxu0 %v2756
    %v2950 = vpop.f32.mrf.mxu0
    %v2951 = vadd.f32 0.0, %v2950
    %2952 = vmatmul.f32.gmra.mxu0 %v2759
    %v2953 = vpop.f32.mrf.mxu0
    %v2954 = vadd.f32 0.0, %v2953
    %2955 = vmatmul.f32.gmra.mxu0 %v2762
    %v2956 = vpop.f32.mrf.mxu0
    %v2957 = vadd.f32 0.0, %v2956
    %2958 = vmatmul.f32.gmra.mxu0 %v2765
    %v2959 = vpop.f32.mrf.mxu0
    %v2960 = vadd.f32 0.0, %v2959
    %2961 = vmatmul.f32.gmra.mxu0 %v2768
    %v2962 = vpop.f32.mrf.mxu0
    %v2963 = vadd.f32 0.0, %v2962
    %2964 = vmatmul.f32.gmra.mxu0 %v2771
    %v2965 = vpop.f32.mrf.mxu0
    %v2966 = vadd.f32 0.0, %v2965
    %2967 = vmatmul.f32.gmra.mxu0 %v2774
    %v2968 = vpop.f32.mrf.mxu0
    %v2969 = vadd.f32 0.0, %v2968
    %2970 = vmatmul.f32.gmra.mxu0 %v2777
    %v2971 = vpop.f32.mrf.mxu0
    %v2972 = vadd.f32 0.0, %v2971
    %2973 = vmatmul.f32.gmra.mxu0 %v2780
    %v2974 = vpop.f32.mrf.mxu0
    %v2975 = vadd.f32 0.0, %v2974
    %2976 = vmatmul.f32.gmra.mxu0 %v2783
    %v2977 = vpop.f32.mrf.mxu0
    %v2978 = vadd.f32 0.0, %v2977
    %2979 = vmatmul.f32.gmra.mxu0 %v2786
    %v2980 = vpop.f32.mrf.mxu0
    %v2981 = vadd.f32 0.0, %v2980
    %2982 = vmatmul.f32.gmra.mxu0 %v2789
    %v2983 = vpop.f32.mrf.mxu0
    %v2984 = vadd.f32 0.0, %v2983
    %2985 = vmatmul.f32.gmra.mxu0 %v2792
    %v2986 = vpop.f32.mrf.mxu0
    %v2987 = vadd.f32 0.0, %v2986
    %2988 = vdwg.mxu0
    %v2989 = vld [vmem:[%s4] sm:$0xff]
    %v2990 = vld [vmem:[%s4 + $0x8] sm:$0xff]
    %v2991 = vld [vmem:[%s4 + $0x10] sm:$0xff]
    %v2992 = vld [vmem:[%s4 + $0x18] sm:$0xff]
    %s2993 = scalar_lea.vmem %s4, 32
    %v2994 = vld [vmem:[%s2993] sm:$0xff]
    %v2995 = vld [vmem:[%s2993 + $0x8] sm:$0xff]
    %v2996 = vld [vmem:[%s2993 + $0x10] sm:$0xff]
    %v2997 = vld [vmem:[%s2993 + $0x18] sm:$0xff]
    %3014 = vrot.lane.b32.xlu0 %v2812, 96
    %v3015 = vpop.permute.xlu0 %3014
    %3016 = vrot.lane.b32.xlu0 %v2815, 96
    %v3017 = vpop.permute.xlu0 %3016
    %3018 = vrot.lane.b32.xlu0 %v2818, 96
    %v3019 = vpop.permute.xlu0 %3018
    %3020 = vrot.lane.b32.xlu0 %v2821, 96
    %v3021 = vpop.permute.xlu0 %3020
    %3022 = vrot.lane.b32.xlu0 %v2824, 96
    %v3023 = vpop.permute.xlu0 %3022
    %3024 = vrot.lane.b32.xlu0 %v2827, 96
    %v3025 = vpop.permute.xlu0 %3024
    %3026 = vrot.lane.b32.xlu0 %v2830, 96
    %v3027 = vpop.permute.xlu0 %3026
    %3028 = vrot.lane.b32.xlu0 %v2833, 96
    %v3029 = vpop.permute.xlu0 %3028
    %3030 = vrot.lane.b32.xlu0 %v2836, 96
    %v3031 = vpop.permute.xlu0 %3030
    %3032 = vrot.lane.b32.xlu0 %v2839, 96
    %v3033 = vpop.permute.xlu0 %3032
    %3034 = vrot.lane.b32.xlu0 %v2842, 96
    %v3035 = vpop.permute.xlu0 %3034
    %3036 = vrot.lane.b32.xlu0 %v2845, 96
    %v3037 = vpop.permute.xlu0 %3036
    %3038 = vrot.lane.b32.xlu0 %v2848, 96
    %v3039 = vpop.permute.xlu0 %3038
    %3040 = vrot.lane.b32.xlu0 %v2851, 96
    %v3041 = vpop.permute.xlu0 %3040
    %3042 = vrot.lane.b32.xlu0 %v2854, 96
    %v3043 = vpop.permute.xlu0 %3042
    %3044 = vrot.lane.b32.xlu0 %v2857, 96
    %v3045 = vpop.permute.xlu0 %3044
    %3062 = vmatpush.msra.mxu0 %v3045
    %3063 = vmatpush.msra.mxu0 %v3043
    %3064 = vmatpush.msra.mxu0 %v3041
    %3065 = vmatpush.msra.mxu0 %v3039
    %3066 = vmatpush.msra.mxu0 %v3037
    %3067 = vmatpush.msra.mxu0 %v3035
    %3068 = vmatpush.msra.mxu0 %v3033
    %3069 = vmatpush.msra.mxu0 %v3031
    %3070 = vmatpush.msra.mxu0 %v3029
    %3071 = vmatpush.msra.mxu0 %v3027
    %3072 = vmatpush.msra.mxu0 %v3025
    %3073 = vmatpush.msra.mxu0 %v3023
    %3074 = vmatpush.msra.mxu0 %v3021
    %3075 = vmatpush.msra.mxu0 %v3019
    %3076 = vmatpush.msra.mxu0 %v3017
    %3077 = vmatpush.msra.mxu0 %v3015
    %3078 = vmatmul.f32.gmra.mxu0 %v2994
    %v3079 = vpop.f32.mrf.mxu0
    %v3080 = vadd.f32 0.0, %v3079
    %3081 = vmatmul.f32.gmra.mxu0 %v2995
    %v3082 = vpop.f32.mrf.mxu0
    %v3083 = vadd.f32 0.0, %v3082
    %3084 = vmatmul.f32.gmra.mxu0 %v2996
    %v3085 = vpop.f32.mrf.mxu0
    %v3086 = vadd.f32 0.0, %v3085
    %3087 = vmatmul.f32.gmra.mxu0 %v2997
    %v3088 = vpop.f32.mrf.mxu0
    %v3089 = vadd.f32 0.0, %v3088
    %3090 = vdwg.mxu0
    %3091 = vmatpush.msra.mxu0 %v2857
    %3092 = vmatpush.msra.mxu0 %v2854
    %3093 = vmatpush.msra.mxu0 %v2851
    %3094 = vmatpush.msra.mxu0 %v2848
    %3095 = vmatpush.msra.mxu0 %v2845
    %3096 = vmatpush.msra.mxu0 %v2842
    %3097 = vmatpush.msra.mxu0 %v2839
    %3098 = vmatpush.msra.mxu0 %v2836
    %3099 = vmatpush.msra.mxu0 %v2833
    %3100 = vmatpush.msra.mxu0 %v2830
    %3101 = vmatpush.msra.mxu0 %v2827
    %3102 = vmatpush.msra.mxu0 %v2824
    %3103 = vmatpush.msra.mxu0 %v2821
    %3104 = vmatpush.msra.mxu0 %v2818
    %3105 = vmatpush.msra.mxu0 %v2815
    %3106 = vmatpush.msra.mxu0 %v2812
    %3107 = vmatmul.f32.gmra.mxu0 %v2989
    %v3108 = vpop.f32.mrf.mxu0
    %v3109 = vadd.f32 %v3080, %v3108
    %3110 = vmatmul.f32.gmra.mxu0 %v2990
    %v3111 = vpop.f32.mrf.mxu0
    %v3112 = vadd.f32 %v3083, %v3111
    %3113 = vmatmul.f32.gmra.mxu0 %v2991
    %v3114 = vpop.f32.mrf.mxu0
    %v3115 = vadd.f32 %v3086, %v3114
    %3116 = vmatmul.f32.gmra.mxu0 %v2992
    %v3117 = vpop.f32.mrf.mxu0
    %v3118 = vadd.f32 %v3089, %v3117
    %3119 = vdwg.mxu0
    %s3120 = scalar_lea.vmem %s4, 64
    %v3121 = vld [vmem:[%s3120] sm:$0xff]
    %v3122 = vld [vmem:[%s3120 + $0x8] sm:$0xff]
    %v3123 = vld [vmem:[%s3120 + $0x10] sm:$0xff]
    %v3124 = vld [vmem:[%s3120 + $0x18] sm:$0xff]
    %3125 = vrot.lane.b32.xlu0 %v2812, 64
    %v3126 = vpop.permute.xlu0 %3125
    %3127 = vrot.lane.b32.xlu0 %v2815, 64
    %v3128 = vpop.permute.xlu0 %3127
    %3129 = vrot.lane.b32.xlu0 %v2818, 64
    %v3130 = vpop.permute.xlu0 %3129
    %3131 = vrot.lane.b32.xlu0 %v2821, 64
    %v3132 = vpop.permute.xlu0 %3131
    %3133 = vrot.lane.b32.xlu0 %v2824, 64
    %v3134 = vpop.permute.xlu0 %3133
    %3135 = vrot.lane.b32.xlu0 %v2827, 64
    %v3136 = vpop.permute.xlu0 %3135
    %3137 = vrot.lane.b32.xlu0 %v2830, 64
    %v3138 = vpop.permute.xlu0 %3137
    %3139 = vrot.lane.b32.xlu0 %v2833, 64
    %v3140 = vpop.permute.xlu0 %3139
    %3141 = vrot.lane.b32.xlu0 %v2836, 64
    %v3142 = vpop.permute.xlu0 %3141
    %3143 = vrot.lane.b32.xlu0 %v2839, 64
    %v3144 = vpop.permute.xlu0 %3143
    %3145 = vrot.lane.b32.xlu0 %v2842, 64
    %v3146 = vpop.permute.xlu0 %3145
    %3147 = vrot.lane.b32.xlu0 %v2845, 64
    %v3148 = vpop.permute.xlu0 %3147
    %3149 = vrot.lane.b32.xlu0 %v2848, 64
    %v3150 = vpop.permute.xlu0 %3149
    %3151 = vrot.lane.b32.xlu0 %v2851, 64
    %v3152 = vpop.permute.xlu0 %3151
    %3153 = vrot.lane.b32.xlu0 %v2854, 64
    %v3154 = vpop.permute.xlu0 %3153
    %3155 = vrot.lane.b32.xlu0 %v2857, 64
    %v3156 = vpop.permute.xlu0 %3155
    %3173 = vmatpush.msra.mxu0 %v3156
    %3174 = vmatpush.msra.mxu0 %v3154
    %3175 = vmatpush.msra.mxu0 %v3152
    %3176 = vmatpush.msra.mxu0 %v3150
    %3177 = vmatpush.msra.mxu0 %v3148
    %3178 = vmatpush.msra.mxu0 %v3146
    %3179 = vmatpush.msra.mxu0 %v3144
    %3180 = vmatpush.msra.mxu0 %v3142
    %3181 = vmatpush.msra.mxu0 %v3140
    %3182 = vmatpush.msra.mxu0 %v3138
    %3183 = vmatpush.msra.mxu0 %v3136
    %3184 = vmatpush.msra.mxu0 %v3134
    %3185 = vmatpush.msra.mxu0 %v3132
    %3186 = vmatpush.msra.mxu0 %v3130
    %3187 = vmatpush.msra.mxu0 %v3128
    %3188 = vmatpush.msra.mxu0 %v3126
    %3189 = vmatmul.f32.gmra.mxu0 %v3121
    %v3190 = vpop.f32.mrf.mxu0
    %v3191 = vadd.f32 0.0, %v3190
    %3192 = vmatmul.f32.gmra.mxu0 %v3122
    %v3193 = vpop.f32.mrf.mxu0
    %v3194 = vadd.f32 0.0, %v3193
    %3195 = vmatmul.f32.gmra.mxu0 %v3123
    %v3196 = vpop.f32.mrf.mxu0
    %v3197 = vadd.f32 0.0, %v3196
    %3198 = vmatmul.f32.gmra.mxu0 %v3124
    %v3199 = vpop.f32.mrf.mxu0
    %v3200 = vadd.f32 0.0, %v3199
    %3201 = vdwg.mxu0
    %v3202 = vadd.f32 %v3109, %v3191
    %v3203 = vadd.f32 %v3112, %v3194
    %v3204 = vadd.f32 %v3115, %v3197
    %v3205 = vadd.f32 %v3118, %v3200
    %s3206 = scalar_lea.vmem %s4, 96
    %v3207 = vld [vmem:[%s3206] sm:$0xff]
    %v3208 = vld [vmem:[%s3206 + $0x8] sm:$0xff]
    %v3209 = vld [vmem:[%s3206 + $0x10] sm:$0xff]
    %v3210 = vld [vmem:[%s3206 + $0x18] sm:$0xff]
    %3211 = vrot.lane.b32.xlu0 %v2812, 32
    %v3212 = vpop.permute.xlu0 %3211
    %3213 = vrot.lane.b32.xlu0 %v2815, 32
    %v3214 = vpop.permute.xlu0 %3213
    %3215 = vrot.lane.b32.xlu0 %v2818, 32
    %v3216 = vpop.permute.xlu0 %3215
    %3217 = vrot.lane.b32.xlu0 %v2821, 32
    %v3218 = vpop.permute.xlu0 %3217
    %3219 = vrot.lane.b32.xlu0 %v2824, 32
    %v3220 = vpop.permute.xlu0 %3219
    %3221 = vrot.lane.b32.xlu0 %v2827, 32
    %v3222 = vpop.permute.xlu0 %3221
    %3223 = vrot.lane.b32.xlu0 %v2830, 32
    %v3224 = vpop.permute.xlu0 %3223
    %3225 = vrot.lane.b32.xlu0 %v2833, 32
    %v3226 = vpop.permute.xlu0 %3225
    %3227 = vrot.lane.b32.xlu0 %v2836, 32
    %v3228 = vpop.permute.xlu0 %3227
    %3229 = vrot.lane.b32.xlu0 %v2839, 32
    %v3230 = vpop.permute.xlu0 %3229
    %3231 = vrot.lane.b32.xlu0 %v2842, 32
    %v3232 = vpop.permute.xlu0 %3231
    %3233 = vrot.lane.b32.xlu0 %v2845, 32
    %v3234 = vpop.permute.xlu0 %3233
    %3235 = vrot.lane.b32.xlu0 %v2848, 32
    %v3236 = vpop.permute.xlu0 %3235
    %3237 = vrot.lane.b32.xlu0 %v2851, 32
    %v3238 = vpop.permute.xlu0 %3237
    %3239 = vrot.lane.b32.xlu0 %v2854, 32
    %v3240 = vpop.permute.xlu0 %3239
    %3241 = vrot.lane.b32.xlu0 %v2857, 32
    %v3242 = vpop.permute.xlu0 %3241
    %3259 = vmatpush.msra.mxu0 %v3242
    %3260 = vmatpush.msra.mxu0 %v3240
    %3261 = vmatpush.msra.mxu0 %v3238
    %3262 = vmatpush.msra.mxu0 %v3236
    %3263 = vmatpush.msra.mxu0 %v3234
    %3264 = vmatpush.msra.mxu0 %v3232
    %3265 = vmatpush.msra.mxu0 %v3230
    %3266 = vmatpush.msra.mxu0 %v3228
    %3267 = vmatpush.msra.mxu0 %v3226
    %3268 = vmatpush.msra.mxu0 %v3224
    %3269 = vmatpush.msra.mxu0 %v3222
    %3270 = vmatpush.msra.mxu0 %v3220
    %3271 = vmatpush.msra.mxu0 %v3218
    %3272 = vmatpush.msra.mxu0 %v3216
    %3273 = vmatpush.msra.mxu0 %v3214
    %3274 = vmatpush.msra.mxu0 %v3212
    %3275 = vmatmul.f32.gmra.mxu0 %v3207
    %v3276 = vpop.f32.mrf.mxu0
    %v3277 = vadd.f32 0.0, %v3276
    %3278 = vmatmul.f32.gmra.mxu0 %v3208
    %v3279 = vpop.f32.mrf.mxu0
    %v3280 = vadd.f32 0.0, %v3279
    %3281 = vmatmul.f32.gmra.mxu0 %v3209
    %v3282 = vpop.f32.mrf.mxu0
    %v3283 = vadd.f32 0.0, %v3282
    %3284 = vmatmul.f32.gmra.mxu0 %v3210
    %v3285 = vpop.f32.mrf.mxu0
    %v3286 = vadd.f32 0.0, %v3285
    %3287 = vdwg.mxu0
    %v3288 = vadd.f32 %v3202, %v3277
    %v3289 = vadd.f32 %v3203, %v3280
    %v3290 = vadd.f32 %v3204, %v3283
    %v3291 = vadd.f32 %v3205, %v3286
    %s3292 = scalar_lea.vmem %s4, 128
    %v3293 = vld [vmem:[%s3292] sm:$0xff]
    %v3294 = vld [vmem:[%s3292 + $0x8] sm:$0xff]
    %v3295 = vld [vmem:[%s3292 + $0x10] sm:$0xff]
    %v3296 = vld [vmem:[%s3292 + $0x18] sm:$0xff]
    %3297 = vmatpush.msra.mxu0 %v2922
    %3298 = vmatpush.msra.mxu0 %v2919
    %3299 = vmatpush.msra.mxu0 %v2916
    %3300 = vmatpush.msra.mxu0 %v2913
    %3301 = vmatpush.msra.mxu0 %v2910
    %3302 = vmatpush.msra.mxu0 %v2907
    %3303 = vmatpush.msra.mxu0 %v2904
    %3304 = vmatpush.msra.mxu0 %v2901
    %3305 = vmatpush.msra.mxu0 %v2898
    %3306 = vmatpush.msra.mxu0 %v2895
    %3307 = vmatpush.msra.mxu0 %v2892
    %3308 = vmatpush.msra.mxu0 %v2889
    %3309 = vmatpush.msra.mxu0 %v2886
    %3310 = vmatpush.msra.mxu0 %v2883
    %3311 = vmatpush.msra.mxu0 %v2880
    %3312 = vmatpush.msra.mxu0 %v2877
    %3313 = vmatmul.f32.gmra.mxu0 %v3293
    %v3314 = vpop.f32.mrf.mxu0
    %v3315 = vadd.f32 0.0, %v3314
    %3316 = vmatmul.f32.gmra.mxu0 %v3294
    %v3317 = vpop.f32.mrf.mxu0
    %v3318 = vadd.f32 0.0, %v3317
    %3319 = vmatmul.f32.gmra.mxu0 %v3295
    %v3320 = vpop.f32.mrf.mxu0
    %v3321 = vadd.f32 0.0, %v3320
    %3322 = vmatmul.f32.gmra.mxu0 %v3296
    %v3323 = vpop.f32.mrf.mxu0
    %v3324 = vadd.f32 0.0, %v3323
    %3325 = vdwg.mxu0
    %v3326 = vadd.f32 %v3288, %v3315
    %v3327 = vadd.f32 %v3289, %v3318
    %v3328 = vadd.f32 %v3290, %v3321
    %v3329 = vadd.f32 %v3291, %v3324
    %s3330 = scalar_lea.vmem %s4, 160
    %v3331 = vld [vmem:[%s3330] sm:$0xff]
    %v3332 = vld [vmem:[%s3330 + $0x8] sm:$0xff]
    %v3333 = vld [vmem:[%s3330 + $0x10] sm:$0xff]
    %v3334 = vld [vmem:[%s3330 + $0x18] sm:$0xff]
    %3351 = vrot.lane.b32.xlu0 %v2877, 96
    %v3352 = vpop.permute.xlu0 %3351
    %3353 = vrot.lane.b32.xlu0 %v2880, 96
    %v3354 = vpop.permute.xlu0 %3353
    %3355 = vrot.lane.b32.xlu0 %v2883, 96
    %v3356 = vpop.permute.xlu0 %3355
    %3357 = vrot.lane.b32.xlu0 %v2886, 96
    %v3358 = vpop.permute.xlu0 %3357
    %3359 = vrot.lane.b32.xlu0 %v2889, 96
    %v3360 = vpop.permute.xlu0 %3359
    %3361 = vrot.lane.b32.xlu0 %v2892, 96
    %v3362 = vpop.permute.xlu0 %3361
    %3363 = vrot.lane.b32.xlu0 %v2895, 96
    %v3364 = vpop.permute.xlu0 %3363
    %3365 = vrot.lane.b32.xlu0 %v2898, 96
    %v3366 = vpop.permute.xlu0 %3365
    %3367 = vrot.lane.b32.xlu0 %v2901, 96
    %v3368 = vpop.permute.xlu0 %3367
    %3369 = vrot.lane.b32.xlu0 %v2904, 96
    %v3370 = vpop.permute.xlu0 %3369
    %3371 = vrot.lane.b32.xlu0 %v2907, 96
    %v3372 = vpop.permute.xlu0 %3371
    %3373 = vrot.lane.b32.xlu0 %v2910, 96
    %v3374 = vpop.permute.xlu0 %3373
    %3375 = vrot.lane.b32.xlu0 %v2913, 96
    %v3376 = vpop.permute.xlu0 %3375
    %3377 = vrot.lane.b32.xlu0 %v2916, 96
    %v3378 = vpop.permute.xlu0 %3377
    %3379 = vrot.lane.b32.xlu0 %v2919, 96
    %v3380 = vpop.permute.xlu0 %3379
    %3381 = vrot.lane.b32.xlu0 %v2922, 96
    %v3382 = vpop.permute.xlu0 %3381
    %3399 = vmatpush.msra.mxu0 %v3382
    %3400 = vmatpush.msra.mxu0 %v3380
    %3401 = vmatpush.msra.mxu0 %v3378
    %3402 = vmatpush.msra.mxu0 %v3376
    %3403 = vmatpush.msra.mxu0 %v3374
    %3404 = vmatpush.msra.mxu0 %v3372
    %3405 = vmatpush.msra.mxu0 %v3370
    %3406 = vmatpush.msra.mxu0 %v3368
    %3407 = vmatpush.msra.mxu0 %v3366
    %3408 = vmatpush.msra.mxu0 %v3364
    %3409 = vmatpush.msra.mxu0 %v3362
    %3410 = vmatpush.msra.mxu0 %v3360
    %3411 = vmatpush.msra.mxu0 %v3358
    %3412 = vmatpush.msra.mxu0 %v3356
    %3413 = vmatpush.msra.mxu0 %v3354
    %3414 = vmatpush.msra.mxu0 %v3352
    %3415 = vmatmul.f32.gmra.mxu0 %v3331
    %v3416 = vpop.f32.mrf.mxu0
    %v3417 = vadd.f32 0.0, %v3416
    %3418 = vmatmul.f32.gmra.mxu0 %v3332
    %v3419 = vpop.f32.mrf.mxu0
    %v3420 = vadd.f32 0.0, %v3419
    %3421 = vmatmul.f32.gmra.mxu0 %v3333
    %v3422 = vpop.f32.mrf.mxu0
    %v3423 = vadd.f32 0.0, %v3422
    %3424 = vmatmul.f32.gmra.mxu0 %v3334
    %v3425 = vpop.f32.mrf.mxu0
    %v3426 = vadd.f32 0.0, %v3425
    %3427 = vdwg.mxu0
    %v3428 = vadd.f32 %v3326, %v3417
    %v3429 = vadd.f32 %v3327, %v3420
    %v3430 = vadd.f32 %v3328, %v3423
    %v3431 = vadd.f32 %v3329, %v3426
    %s3432 = scalar_lea.vmem %s4, 192
    %v3433 = vld [vmem:[%s3432] sm:$0xff]
    %v3434 = vld [vmem:[%s3432 + $0x8] sm:$0xff]
    %v3435 = vld [vmem:[%s3432 + $0x10] sm:$0xff]
    %v3436 = vld [vmem:[%s3432 + $0x18] sm:$0xff]
    %3437 = vrot.lane.b32.xlu0 %v2877, 64
    %v3438 = vpop.permute.xlu0 %3437
    %3439 = vrot.lane.b32.xlu0 %v2880, 64
    %v3440 = vpop.permute.xlu0 %3439
    %3441 = vrot.lane.b32.xlu0 %v2883, 64
    %v3442 = vpop.permute.xlu0 %3441
    %3443 = vrot.lane.b32.xlu0 %v2886, 64
    %v3444 = vpop.permute.xlu0 %3443
    %3445 = vrot.lane.b32.xlu0 %v2889, 64
    %v3446 = vpop.permute.xlu0 %3445
    %3447 = vrot.lane.b32.xlu0 %v2892, 64
    %v3448 = vpop.permute.xlu0 %3447
    %3449 = vrot.lane.b32.xlu0 %v2895, 64
    %v3450 = vpop.permute.xlu0 %3449
    %3451 = vrot.lane.b32.xlu0 %v2898, 64
    %v3452 = vpop.permute.xlu0 %3451
    %3453 = vrot.lane.b32.xlu0 %v2901, 64
    %v3454 = vpop.permute.xlu0 %3453
    %3455 = vrot.lane.b32.xlu0 %v2904, 64
    %v3456 = vpop.permute.xlu0 %3455
    %3457 = vrot.lane.b32.xlu0 %v2907, 64
    %v3458 = vpop.permute.xlu0 %3457
    %3459 = vrot.lane.b32.xlu0 %v2910, 64
    %v3460 = vpop.permute.xlu0 %3459
    %3461 = vrot.lane.b32.xlu0 %v2913, 64
    %v3462 = vpop.permute.xlu0 %3461
    %3463 = vrot.lane.b32.xlu0 %v2916, 64
    %v3464 = vpop.permute.xlu0 %3463
    %3465 = vrot.lane.b32.xlu0 %v2919, 64
    %v3466 = vpop.permute.xlu0 %3465
    %3467 = vrot.lane.b32.xlu0 %v2922, 64
    %v3468 = vpop.permute.xlu0 %3467
    %3485 = vmatpush.msra.mxu0 %v3468
    %3486 = vmatpush.msra.mxu0 %v3466
    %3487 = vmatpush.msra.mxu0 %v3464
    %3488 = vmatpush.msra.mxu0 %v3462
    %3489 = vmatpush.msra.mxu0 %v3460
    %3490 = vmatpush.msra.mxu0 %v3458
    %3491 = vmatpush.msra.mxu0 %v3456
    %3492 = vmatpush.msra.mxu0 %v3454
    %3493 = vmatpush.msra.mxu0 %v3452
    %3494 = vmatpush.msra.mxu0 %v3450
    %3495 = vmatpush.msra.mxu0 %v3448
    %3496 = vmatpush.msra.mxu0 %v3446
    %3497 = vmatpush.msra.mxu0 %v3444
    %3498 = vmatpush.msra.mxu0 %v3442
    %3499 = vmatpush.msra.mxu0 %v3440
    %3500 = vmatpush.msra.mxu0 %v3438
    %3501 = vmatmul.f32.gmra.mxu0 %v3433
    %v3502 = vpop.f32.mrf.mxu0
    %v3503 = vadd.f32 0.0, %v3502
    %3504 = vmatmul.f32.gmra.mxu0 %v3434
    %v3505 = vpop.f32.mrf.mxu0
    %v3506 = vadd.f32 0.0, %v3505
    %3507 = vmatmul.f32.gmra.mxu0 %v3435
    %v3508 = vpop.f32.mrf.mxu0
    %v3509 = vadd.f32 0.0, %v3508
    %3510 = vmatmul.f32.gmra.mxu0 %v3436
    %v3511 = vpop.f32.mrf.mxu0
    %v3512 = vadd.f32 0.0, %v3511
    %3513 = vdwg.mxu0
    %v3514 = vadd.f32 %v3428, %v3503
    %v3515 = vadd.f32 %v3429, %v3506
    %v3516 = vadd.f32 %v3430, %v3509
    %v3517 = vadd.f32 %v3431, %v3512
    %s3518 = scalar_lea.vmem %s4, 224
    %v3519 = vld [vmem:[%s3518] sm:$0xff]
    %v3520 = vld [vmem:[%s3518 + $0x8] sm:$0xff]
    %v3521 = vld [vmem:[%s3518 + $0x10] sm:$0xff]
    %v3522 = vld [vmem:[%s3518 + $0x18] sm:$0xff]
    %3523 = vrot.lane.b32.xlu0 %v2877, 32
    %v3524 = vpop.permute.xlu0 %3523
    %3525 = vrot.lane.b32.xlu0 %v2880, 32
    %v3526 = vpop.permute.xlu0 %3525
    %3527 = vrot.lane.b32.xlu0 %v2883, 32
    %v3528 = vpop.permute.xlu0 %3527
    %3529 = vrot.lane.b32.xlu0 %v2886, 32
    %v3530 = vpop.permute.xlu0 %3529
    %3531 = vrot.lane.b32.xlu0 %v2889, 32
    %v3532 = vpop.permute.xlu0 %3531
    %3533 = vrot.lane.b32.xlu0 %v2892, 32
    %v3534 = vpop.permute.xlu0 %3533
    %3535 = vrot.lane.b32.xlu0 %v2895, 32
    %v3536 = vpop.permute.xlu0 %3535
    %3537 = vrot.lane.b32.xlu0 %v2898, 32
    %v3538 = vpop.permute.xlu0 %3537
    %3539 = vrot.lane.b32.xlu0 %v2901, 32
    %v3540 = vpop.permute.xlu0 %3539
    %3541 = vrot.lane.b32.xlu0 %v2904, 32
    %v3542 = vpop.permute.xlu0 %3541
    %3543 = vrot.lane.b32.xlu0 %v2907, 32
    %v3544 = vpop.permute.xlu0 %3543
    %3545 = vrot.lane.b32.xlu0 %v2910, 32
    %v3546 = vpop.permute.xlu0 %3545
    %3547 = vrot.lane.b32.xlu0 %v2913, 32
    %v3548 = vpop.permute.xlu0 %3547
    %3549 = vrot.lane.b32.xlu0 %v2916, 32
    %v3550 = vpop.permute.xlu0 %3549
    %3551 = vrot.lane.b32.xlu0 %v2919, 32
    %v3552 = vpop.permute.xlu0 %3551
    %3553 = vrot.lane.b32.xlu0 %v2922, 32
    %v3554 = vpop.permute.xlu0 %3553
    %3571 = vmatpush.msra.mxu0 %v3554
    %3572 = vmatpush.msra.mxu0 %v3552
    %3573 = vmatpush.msra.mxu0 %v3550
    %3574 = vmatpush.msra.mxu0 %v3548
    %3575 = vmatpush.msra.mxu0 %v3546
    %3576 = vmatpush.msra.mxu0 %v3544
    %3577 = vmatpush.msra.mxu0 %v3542
    %3578 = vmatpush.msra.mxu0 %v3540
    %3579 = vmatpush.msra.mxu0 %v3538
    %3580 = vmatpush.msra.mxu0 %v3536
    %3581 = vmatpush.msra.mxu0 %v3534
    %3582 = vmatpush.msra.mxu0 %v3532
    %3583 = vmatpush.msra.mxu0 %v3530
    %3584 = vmatpush.msra.mxu0 %v3528
    %3585 = vmatpush.msra.mxu0 %v3526
    %3586 = vmatpush.msra.mxu0 %v3524
    %3587 = vmatmul.f32.gmra.mxu0 %v3519
    %v3588 = vpop.f32.mrf.mxu0
    %v3589 = vadd.f32 0.0, %v3588
    %3590 = vmatmul.f32.gmra.mxu0 %v3520
    %v3591 = vpop.f32.mrf.mxu0
    %v3592 = vadd.f32 0.0, %v3591
    %3593 = vmatmul.f32.gmra.mxu0 %v3521
    %v3594 = vpop.f32.mrf.mxu0
    %v3595 = vadd.f32 0.0, %v3594
    %3596 = vmatmul.f32.gmra.mxu0 %v3522
    %v3597 = vpop.f32.mrf.mxu0
    %v3598 = vadd.f32 0.0, %v3597
    %3599 = vdwg.mxu0
    %v3600 = vadd.f32 %v3514, %v3589
    %v3601 = vadd.f32 %v3515, %v3592
    %v3602 = vadd.f32 %v3516, %v3595
    %v3603 = vadd.f32 %v3517, %v3598
    %s3604 = scalar_lea.vmem %s4, 256
    %v3605 = vld [vmem:[%s3604] sm:$0xff]
    %v3606 = vld [vmem:[%s3604 + $0x8] sm:$0xff]
    %v3607 = vld [vmem:[%s3604 + $0x10] sm:$0xff]
    %v3608 = vld [vmem:[%s3604 + $0x18] sm:$0xff]
    %3609 = vmatpush.msra.mxu0 %v2987
    %3610 = vmatpush.msra.mxu0 %v2984
    %3611 = vmatpush.msra.mxu0 %v2981
    %3612 = vmatpush.msra.mxu0 %v2978
    %3613 = vmatpush.msra.mxu0 %v2975
    %3614 = vmatpush.msra.mxu0 %v2972
    %3615 = vmatpush.msra.mxu0 %v2969
    %3616 = vmatpush.msra.mxu0 %v2966
    %3617 = vmatpush.msra.mxu0 %v2963
    %3618 = vmatpush.msra.mxu0 %v2960
    %3619 = vmatpush.msra.mxu0 %v2957
    %3620 = vmatpush.msra.mxu0 %v2954
    %3621 = vmatpush.msra.mxu0 %v2951
    %3622 = vmatpush.msra.mxu0 %v2948
    %3623 = vmatpush.msra.mxu0 %v2945
    %3624 = vmatpush.msra.mxu0 %v2942
    %3625 = vmatmul.f32.gmra.mxu0 %v3605
    %v3626 = vpop.f32.mrf.mxu0
    %v3627 = vadd.f32 0.0, %v3626
    %3628 = vmatmul.f32.gmra.mxu0 %v3606
    %v3629 = vpop.f32.mrf.mxu0
    %v3630 = vadd.f32 0.0, %v3629
    %3631 = vmatmul.f32.gmra.mxu0 %v3607
    %v3632 = vpop.f32.mrf.mxu0
    %v3633 = vadd.f32 0.0, %v3632
    %3634 = vmatmul.f32.gmra.mxu0 %v3608
    %v3635 = vpop.f32.mrf.mxu0
    %v3636 = vadd.f32 0.0, %v3635
    %3637 = vdwg.mxu0
    %v3638 = vadd.f32 %v3600, %v3627
    %v3639 = vadd.f32 %v3601, %v3630
    %v3640 = vadd.f32 %v3602, %v3633
    %v3641 = vadd.f32 %v3603, %v3636
    %v3642 = vperm.slane %v2733, 0
    %v3643 = vadd.f32 %v3638, %v3642
    %v3644 = vadd.f32 %v3639, %v3642
    %v3645 = vadd.f32 %v3640, %v3642
    %v3646 = vadd.f32 %v3641, %v3642
    %v3647 = vld [vmem:[%s7] sm:$0x1]
    %v3648 = vld [vmem:[%s7 + $0x1] sm:$0x1]
    %v3649 = vld [vmem:[%s7 + $0x2] sm:$0x1]
    %v3650 = vld [vmem:[%s7 + $0x3] sm:$0x1]
    %v3651 = vld [vmem:[%s7 + $0x4] sm:$0x1]
    %v3652 = vld [vmem:[%s7 + $0x5] sm:$0x1]
    %v3653 = vld [vmem:[%s7 + $0x6] sm:$0x1]
    %v3654 = vsel %vm185, %v3643, 0.0
    %3655 = vadd.xlane.f32.xlu0 %v3654
    %v3656 = vpop.xlane.xlu0 %3655
    %v3657 = vsel %vm185, %v3644, 0.0
    %3658 = vadd.xlane.f32.xlu0 %v3657
    %v3659 = vpop.xlane.xlu0 %3658
    %v3660 = vsel %vm185, %v3645, 0.0
    %3661 = vadd.xlane.f32.xlu0 %v3660
    %v3662 = vpop.xlane.xlu0 %3661
    %v3663 = vsel %vm185, %v3646, 0.0
    %3664 = vadd.xlane.f32.xlu0 %v3663
    %v3665 = vpop.xlane.xlu0 %3664
    %v3666 = vmul.f32 %v3656, %v240
    %v3667 = vmul.f32 %v3659, %v240
    %v3668 = vmul.f32 %v3662, %v240
    %v3669 = vmul.f32 %v3665, %v240
    %v3670 = vsub.f32 %v3643, %v3666
    %v3671 = vsub.f32 %v3644, %v3667
    %v3672 = vsub.f32 %v3645, %v3668
    %v3673 = vsub.f32 %v3646, %v3669
    %v3674 = vmul.f32 %v3670, %v3670
    %v3675 = vmul.f32 %v3671, %v3671
    %v3676 = vmul.f32 %v3672, %v3672
    %v3677 = vmul.f32 %v3673, %v3673
    %v3678 = vsel %vm185, %v3674, 0.0
    %3679 = vadd.xlane.f32.xlu0 %v3678
    %v3680 = vpop.xlane.xlu0 %3679
    %v3681 = vsel %vm185, %v3675, 0.0
    %3682 = vadd.xlane.f32.xlu0 %v3681
    %v3683 = vpop.xlane.xlu0 %3682
    %v3684 = vsel %vm185, %v3676, 0.0
    %3685 = vadd.xlane.f32.xlu0 %v3684
    %v3686 = vpop.xlane.xlu0 %3685
    %v3687 = vsel %vm185, %v3677, 0.0
    %3688 = vadd.xlane.f32.xlu0 %v3687
    %v3689 = vpop.xlane.xlu0 %3688
    %v3690 = vmul.f32 %v3680, %v240
    %v3691 = vmul.f32 %v3683, %v240
    %v3692 = vmul.f32 %v3686, %v240
    %v3693 = vmul.f32 %v3689, %v240
    %v3694 = vadd.f32 %v3690, 1e-05
    %v3695 = vadd.f32 %v3691, 1e-05
    %v3696 = vadd.f32 %v3692, 1e-05
    %v3697 = vadd.f32 %v3693, 1e-05
    %v3698 = vrsqrt.pop %v3694
    %v3699 = vmul.f32 %v3698, %v3694
    %v3700 = vmul.f32 %v3699, %v3698
    %v3701 = vmul.f32 0.5, %v3700
    %v3702 = vsub.f32 1.5, %v3701
    %v3703 = vmul.f32 %v3698, %v3702
    %vm3704 = vweird.f32 %v3694
    %vm3705 = vweird.f32 %v3698
    %vm3706 = vmor %vm3704, %vm3705
    %v3707 = vsel %vm3706, %v3698, %v3703
    %v3708 = vrsqrt.pop %v3695
    %v3709 = vmul.f32 %v3708, %v3695
    %v3710 = vmul.f32 %v3709, %v3708
    %v3711 = vmul.f32 0.5, %v3710
    %v3712 = vsub.f32 1.5, %v3711
    %v3713 = vmul.f32 %v3708, %v3712
    %vm3714 = vweird.f32 %v3695
    %vm3715 = vweird.f32 %v3708
    %vm3716 = vmor %vm3714, %vm3715
    %v3717 = vsel %vm3716, %v3708, %v3713
    %v3718 = vrsqrt.pop %v3696
    %v3719 = vmul.f32 %v3718, %v3696
    %v3720 = vmul.f32 %v3719, %v3718
    %v3721 = vmul.f32 0.5, %v3720
    %v3722 = vsub.f32 1.5, %v3721
    %v3723 = vmul.f32 %v3718, %v3722
    %vm3724 = vweird.f32 %v3696
    %vm3725 = vweird.f32 %v3718
    %vm3726 = vmor %vm3724, %vm3725
    %v3727 = vsel %vm3726, %v3718, %v3723
    %v3728 = vrsqrt.pop %v3697
    %v3729 = vmul.f32 %v3728, %v3697
    %v3730 = vmul.f32 %v3729, %v3728
    %v3731 = vmul.f32 0.5, %v3730
    %v3732 = vsub.f32 1.5, %v3731
    %v3733 = vmul.f32 %v3728, %v3732
    %vm3734 = vweird.f32 %v3697
    %vm3735 = vweird.f32 %v3728
    %vm3736 = vmor %vm3734, %vm3735
    %v3737 = vsel %vm3736, %v3728, %v3733
    %v3738 = vmul.f32 %v3670, %v3707
    %v3739 = vmul.f32 %v3671, %v3717
    %v3740 = vmul.f32 %v3672, %v3727
    %v3741 = vmul.f32 %v3673, %v3737
    %v3742 = vperm.slane %v3647, 0
    %v3743 = vmul.f32 %v3738, %v3742
    %v3744 = vmul.f32 %v3739, %v3742
    %v3745 = vmul.f32 %v3740, %v3742
    %v3746 = vmul.f32 %v3741, %v3742
    %v3747 = vperm.slane %v3648, 0
    %v3748 = vadd.f32 %v3743, %v3747
    %v3749 = vadd.f32 %v3744, %v3747
    %v3750 = vadd.f32 %v3745, %v3747
    %v3751 = vadd.f32 %v3746, %v3747
    %v3752 = vld [vmem:[%s6] sm:$0xff]
    %v3753 = vld [vmem:[%s6 + $0x10] sm:$0xff]
    %v3754 = vld [vmem:[%s6 + $0x20] sm:$0xff]
    %v3755 = vld [vmem:[%s6 + $0x30] sm:$0xff]
    %v3757 = vsel %vm185, %v3748, 0
    %v3760 = vsel %vm185, %v3749, 0
    %v3763 = vsel %vm185, %v3750, 0
    %v3766 = vsel %vm185, %v3751, 0
    %3768 = vmatpush.msra.mxu0 0.0
    %3769 = vmatpush.msra.mxu0 0.0
    %3770 = vmatpush.msra.mxu0 0.0
    %3771 = vmatpush.msra.mxu0 0.0
    %3772 = vmatpush.msra.mxu0 0.0
    %3773 = vmatpush.msra.mxu0 0.0
    %3774 = vmatpush.msra.mxu0 0.0
    %3775 = vmatpush.msra.mxu0 0.0
    %3776 = vmatpush.msra.mxu0 0.0
    %3777 = vmatpush.msra.mxu0 0.0
    %3778 = vmatpush.msra.mxu0 0.0
    %3779 = vmatpush.msra.mxu0 0.0
    %3780 = vmatpush.msra.mxu0 %v3755
    %3781 = vmatpush.msra.mxu0 %v3754
    %3782 = vmatpush.msra.mxu0 %v3753
    %3783 = vmatpush.msra.mxu0 %v3752
    %3784 = vmatmul.f32.gmra.mxu0 %v3757
    %v3785 = vpop.f32.mrf.mxu0
    %v3786 = vadd.f32 0.0, %v3785
    %3787 = vmatmul.f32.gmra.mxu0 %v3760
    %v3788 = vpop.f32.mrf.mxu0
    %v3789 = vadd.f32 0.0, %v3788
    %3790 = vmatmul.f32.gmra.mxu0 %v3763
    %v3791 = vpop.f32.mrf.mxu0
    %v3792 = vadd.f32 0.0, %v3791
    %3793 = vmatmul.f32.gmra.mxu0 %v3766
    %v3794 = vpop.f32.mrf.mxu0
    %v3795 = vadd.f32 0.0, %v3794
    %3796 = vdwg.mxu0
    %v3797 = vmul.f32 %v3786, 0.17677669
    %v3798 = vmul.f32 %v3789, 0.17677669
    %v3799 = vmul.f32 %v3792, 0.17677669
    %v3800 = vmul.f32 %v3795, 0.17677669
    %3803 = vrot.lane.b32.xlu0 %v3786, 96
    %v3804 = vpop.permute.xlu0 %3803
    %3805 = vrot.lane.b32.xlu0 %v3789, 96
    %v3806 = vpop.permute.xlu0 %3805
    %v3808 = vsel %vm185, %v3797, 0
    %v3811 = vsel %vm185, %v3798, 0
    %v3813 = vsel %vm185, %v3804, 0
    %v3815 = vsel %vm185, %v3806, 0
    %3817 = vmatpush.xpose.msra.mxu0 0.0
    %3818 = vmatpush.xpose.msra.mxu0 0.0
    %3819 = vmatpush.xpose.msra.mxu0 0.0
    %3820 = vmatpush.xpose.msra.mxu0 0.0
    %3821 = vmatpush.xpose.msra.mxu0 0.0
    %3822 = vmatpush.xpose.msra.mxu0 0.0
    %3823 = vmatpush.xpose.msra.mxu0 0.0
    %3824 = vmatpush.xpose.msra.mxu0 0.0
    %3825 = vmatpush.xpose.msra.mxu0 0.0
    %3826 = vmatpush.xpose.msra.mxu0 0.0
    %3827 = vmatpush.xpose.msra.mxu0 0.0
    %3828 = vmatpush.xpose.msra.mxu0 0.0
    %3829 = vmatpush.xpose.msra.mxu0 0.0
    %3830 = vmatpush.xpose.msra.mxu0 0.0
    %3831 = vmatpush.xpose.msra.mxu0 %v3815
    %3832 = vmatpush.xpose.msra.mxu0 %v3813
    %3833 = vmatmul.f32.gmra.mxu0 %v3808
    %v3834 = vpop.f32.mrf.mxu0
    %v3835 = vadd.f32 0.0, %v3834
    %3836 = vmatmul.f32.gmra.mxu0 %v3811
    %v3837 = vpop.f32.mrf.mxu0
    %v3838 = vadd.f32 0.0, %v3837
    %3839 = vdwg.mxu0
    %3842 = vrot.lane.b32.xlu0 %v3792, 96
    %v3843 = vpop.permute.xlu0 %3842
    %3844 = vrot.lane.b32.xlu0 %v3795, 96
    %v3845 = vpop.permute.xlu0 %3844
    %v3847 = vsel %vm185, %v3799, 0
    %v3850 = vsel %vm185, %v3800, 0
    %v3852 = vsel %vm185, %v3843, 0
    %v3854 = vsel %vm185, %v3845, 0
    %3856 = vmatpush.xpose.msra.mxu0 0.0
    %3857 = vmatpush.xpose.msra.mxu0 0.0
    %3858 = vmatpush.xpose.msra.mxu0 0.0
    %3859 = vmatpush.xpose.msra.mxu0 0.0
    %3860 = vmatpush.xpose.msra.mxu0 0.0
    %3861 = vmatpush.xpose.msra.mxu0 0.0
    %3862 = vmatpush.xpose.msra.mxu0 0.0
    %3863 = vmatpush.xpose.msra.mxu0 0.0
    %3864 = vmatpush.xpose.msra.mxu0 0.0
    %3865 = vmatpush.xpose.msra.mxu0 0.0
    %3866 = vmatpush.xpose.msra.mxu0 0.0
    %3867 = vmatpush.xpose.msra.mxu0 0.0
    %3868 = vmatpush.xpose.msra.mxu0 0.0
    %3869 = vmatpush.xpose.msra.mxu0 0.0
    %3870 = vmatpush.xpose.msra.mxu0 %v3854
    %3871 = vmatpush.xpose.msra.mxu0 %v3852
    %3872 = vmatmul.f32.gmra.mxu0 %v3847
    %v3873 = vpop.f32.mrf.mxu0
    %v3874 = vadd.f32 0.0, %v3873
    %3875 = vmatmul.f32.gmra.mxu0 %v3850
    %v3876 = vpop.f32.mrf.mxu0
    %v3877 = vadd.f32 0.0, %v3876
    %3878 = vdwg.mxu0
    %vm3879 = vcmask 130048
    %v3880 = vsel %vm3879, %v3835, -inf
    %3881 = vmax.xlane.f32.xlu0 %v3880
    %v3882 = vpop.xlane.xlu0 %3881
    %v3883 = vsel %vm3879, %v3838, -inf
    %3884 = vmax.xlane.f32.xlu0 %v3883
    %v3885 = vpop.xlane.xlu0 %3884
    %v3886 = vsel %vm3879, %v3874, -inf
    %3887 = vmax.xlane.f32.xlu0 %v3886
    %v3888 = vpop.xlane.xlu0 %3887
    %v3889 = vsel %vm3879, %v3877, -inf
    %3890 = vmax.xlane.f32.xlu0 %v3889
    %v3891 = vpop.xlane.xlu0 %3890
    %v3892 = vsub.f32 %v3835, %v3882
    %v3893 = vsub.f32 %v3838, %v3885
    %v3894 = vsub.f32 %v3874, %v3888
    %v3895 = vsub.f32 %v3877, %v3891
    %v3896 = vmul.f32 %v3892, 1.442695
    %v3897 = vpow.pop %v3896
    %v3898 = vmul.f32 %v3893, 1.442695
    %v3899 = vpow.pop %v3898
    %v3900 = vmul.f32 %v3894, 1.442695
    %v3901 = vpow.pop %v3900
    %v3902 = vmul.f32 %v3895, 1.442695
    %v3903 = vpow.pop %v3902
    %v3904 = vsel %vm3879, %v3897, 0.0
    %3905 = vadd.xlane.f32.xlu0 %v3904
    %v3906 = vpop.xlane.xlu0 %3905
    %v3907 = vsel %vm3879, %v3899, 0.0
    %3908 = vadd.xlane.f32.xlu0 %v3907
    %v3909 = vpop.xlane.xlu0 %3908
    %v3910 = vsel %vm3879, %v3901, 0.0
    %3911 = vadd.xlane.f32.xlu0 %v3910
    %v3912 = vpop.xlane.xlu0 %3911
    %v3913 = vsel %vm3879, %v3903, 0.0
    %3914 = vadd.xlane.f32.xlu0 %v3913
    %v3915 = vpop.xlane.xlu0 %3914
    %v3916 = vrcp.pop %v3906
    %v3917 = vrcp.pop %v3909
    %v3918 = vrcp.pop %v3912
    %v3919 = vrcp.pop %v3915
    %v3920 = vmul.f32 %v3897, %v3916
    %v3921 = vmul.f32 %v3899, %v3917
    %v3922 = vmul.f32 %v3901, %v3918
    %v3923 = vmul.f32 %v3903, %v3919
    %3924 = vrot.lane.b32.xlu0 %v3786, 64
    %v3925 = vpop.permute.xlu0 %3924
    %3926 = vrot.lane.b32.xlu0 %v3789, 64
    %v3927 = vpop.permute.xlu0 %3926
    %v3931 = vsel %vm3879, %v3920, 0
    %v3934 = vsel %vm3879, %v3921, 0
    %3936 = vmatpush.msra.mxu0 0.0
    %3937 = vmatpush.msra.mxu0 0.0
    %3938 = vmatpush.msra.mxu0 0.0
    %3939 = vmatpush.msra.mxu0 0.0
    %3940 = vmatpush.msra.mxu0 0.0
    %3941 = vmatpush.msra.mxu0 0.0
    %3942 = vmatpush.msra.mxu0 0.0
    %3943 = vmatpush.msra.mxu0 0.0
    %3944 = vmatpush.msra.mxu0 0.0
    %3945 = vmatpush.msra.mxu0 0.0
    %3946 = vmatpush.msra.mxu0 0.0
    %3947 = vmatpush.msra.mxu0 0.0
    %3948 = vmatpush.msra.mxu0 0.0
    %3949 = vmatpush.msra.mxu0 0.0
    %3950 = vmatpush.msra.mxu0 %v3927
    %3951 = vmatpush.msra.mxu0 %v3925
    %3952 = vmatmul.f32.gmra.mxu0 %v3931
    %v3953 = vpop.f32.mrf.mxu0
    %v3954 = vadd.f32 0.0, %v3953
    %3955 = vmatmul.f32.gmra.mxu0 %v3934
    %v3956 = vpop.f32.mrf.mxu0
    %v3957 = vadd.f32 0.0, %v3956
    %3958 = vdwg.mxu0
    %3959 = vrot.lane.b32.xlu0 %v3792, 64
    %v3960 = vpop.permute.xlu0 %3959
    %3961 = vrot.lane.b32.xlu0 %v3795, 64
    %v3962 = vpop.permute.xlu0 %3961
    %v3966 = vsel %vm3879, %v3922, 0
    %v3969 = vsel %vm3879, %v3923, 0
    %3971 = vmatpush.msra.mxu0 0.0
    %3972 = vmatpush.msra.mxu0 0.0
    %3973 = vmatpush.msra.mxu0 0.0
    %3974 = vmatpush.msra.mxu0 0.0
    %3975 = vmatpush.msra.mxu0 0.0
    %3976 = vmatpush.msra.mxu0 0.0
    %3977 = vmatpush.msra.mxu0 0.0
    %3978 = vmatpush.msra.mxu0 0.0
    %3979 = vmatpush.msra.mxu0 0.0
    %3980 = vmatpush.msra.mxu0 0.0
    %3981 = vmatpush.msra.mxu0 0.0
    %3982 = vmatpush.msra.mxu0 0.0
    %3983 = vmatpush.msra.mxu0 0.0
    %3984 = vmatpush.msra.mxu0 0.0
    %3985 = vmatpush.msra.mxu0 %v3962
    %3986 = vmatpush.msra.mxu0 %v3960
    %3987 = vmatmul.f32.gmra.mxu0 %v3966
    %v3988 = vpop.f32.mrf.mxu0
    %v3989 = vadd.f32 0.0, %v3988
    %3990 = vmatmul.f32.gmra.mxu0 %v3969
    %v3991 = vpop.f32.mrf.mxu0
    %v3992 = vadd.f32 0.0, %v3991
    %3993 = vdwg.mxu0
    %v3994 = vld [vmem:[%s6] sm:$0xff]
    %v3995 = vld [vmem:[%s6 + $0x10] sm:$0xff]
    %v3996 = vld [vmem:[%s6 + $0x20] sm:$0xff]
    %v3997 = vld [vmem:[%s6 + $0x30] sm:$0xff]
    %4002 = vrot.lane.b32.xlu0 %v3994, 32
    %v4003 = vpop.permute.xlu0 %4002
    %4004 = vrot.lane.b32.xlu0 %v3995, 32
    %v4005 = vpop.permute.xlu0 %4004
    %4006 = vrot.lane.b32.xlu0 %v3996, 32
    %v4007 = vpop.permute.xlu0 %4006
    %4008 = vrot.lane.b32.xlu0 %v3997, 32
    %v4009 = vpop.permute.xlu0 %4008
    %v4015 = vsel %vm185, %v3954, 0
    %v4018 = vsel %vm185, %v3957, 0
    %v4021 = vsel %vm185, %v3989, 0
    %v4024 = vsel %vm185, %v3992, 0
    %4026 = vmatpush.msra.mxu0 0.0
    %4027 = vmatpush.msra.mxu0 0.0
    %4028 = vmatpush.msra.mxu0 0.0
    %4029 = vmatpush.msra.mxu0 0.0
    %4030 = vmatpush.msra.mxu0 0.0
    %4031 = vmatpush.msra.mxu0 0.0
    %4032 = vmatpush.msra.mxu0 0.0
    %4033 = vmatpush.msra.mxu0 0.0
    %4034 = vmatpush.msra.mxu0 0.0
    %4035 = vmatpush.msra.mxu0 0.0
    %4036 = vmatpush.msra.mxu0 0.0
    %4037 = vmatpush.msra.mxu0 0.0
    %4038 = vmatpush.msra.mxu0 %v4009
    %4039 = vmatpush.msra.mxu0 %v4007
    %4040 = vmatpush.msra.mxu0 %v4005
    %4041 = vmatpush.msra.mxu0 %v4003
    %4042 = vmatmul.f32.gmra.mxu0 %v4015
    %v4043 = vpop.f32.mrf.mxu0
    %v4044 = vadd.f32 0.0, %v4043
    %4045 = vmatmul.f32.gmra.mxu0 %v4018
    %v4046 = vpop.f32.mrf.mxu0
    %v4047 = vadd.f32 0.0, %v4046
    %4048 = vmatmul.f32.gmra.mxu0 %v4021
    %v4049 = vpop.f32.mrf.mxu0
    %v4050 = vadd.f32 0.0, %v4049
    %4051 = vmatmul.f32.gmra.mxu0 %v4024
    %v4052 = vpop.f32.mrf.mxu0
    %v4053 = vadd.f32 0.0, %v4052
    %4054 = vdwg.mxu0
    %v4055 = vadd.f32 %v3643, %v4044
    %v4056 = vadd.f32 %v3644, %v4047
    %v4057 = vadd.f32 %v3645, %v4050
    %v4058 = vadd.f32 %v3646, %v4053
    %v4059 = vperm.slane %v3649, 0
    %v4060 = vadd.f32 %v4055, %v4059
    %v4061 = vadd.f32 %v4056, %v4059
    %v4062 = vadd.f32 %v4057, %v4059
    %v4063 = vadd.f32 %v4058, %v4059
    %v4064 = vsel %vm185, %v4060, 0.0
    %4065 = vadd.xlane.f32.xlu0 %v4064
    %v4066 = vpop.xlane.xlu0 %4065
    %v4067 = vsel %vm185, %v4061, 0.0
    %4068 = vadd.xlane.f32.xlu0 %v4067
    %v4069 = vpop.xlane.xlu0 %4068
    %v4070 = vsel %vm185, %v4062, 0.0
    %4071 = vadd.xlane.f32.xlu0 %v4070
    %v4072 = vpop.xlane.xlu0 %4071
    %v4073 = vsel %vm185, %v4063, 0.0
    %4074 = vadd.xlane.f32.xlu0 %v4073
    %v4075 = vpop.xlane.xlu0 %4074
    %v4076 = vmul.f32 %v4066, %v240
    %v4077 = vmul.f32 %v4069, %v240
    %v4078 = vmul.f32 %v4072, %v240
    %v4079 = vmul.f32 %v4075, %v240
    %v4080 = vsub.f32 %v4060, %v4076
    %v4081 = vsub.f32 %v4061, %v4077
    %v4082 = vsub.f32 %v4062, %v4078
    %v4083 = vsub.f32 %v4063, %v4079
    %v4084 = vmul.f32 %v4080, %v4080
    %v4085 = vmul.f32 %v4081, %v4081
    %v4086 = vmul.f32 %v4082, %v4082
    %v4087 = vmul.f32 %v4083, %v4083
    %v4088 = vsel %vm185, %v4084, 0.0
    %4089 = vadd.xlane.f32.xlu0 %v4088
    %v4090 = vpop.xlane.xlu0 %4089
    %v4091 = vsel %vm185, %v4085, 0.0
    %4092 = vadd.xlane.f32.xlu0 %v4091
    %v4093 = vpop.xlane.xlu0 %4092
    %v4094 = vsel %vm185, %v4086, 0.0
    %4095 = vadd.xlane.f32.xlu0 %v4094
    %v4096 = vpop.xlane.xlu0 %4095
    %v4097 = vsel %vm185, %v4087, 0.0
    %4098 = vadd.xlane.f32.xlu0 %v4097
    %v4099 = vpop.xlane.xlu0 %4098
    %v4100 = vmul.f32 %v4090, %v240
    %v4101 = vmul.f32 %v4093, %v240
    %v4102 = vmul.f32 %v4096, %v240
    %v4103 = vmul.f32 %v4099, %v240
    %v4104 = vadd.f32 %v4100, 1e-05
    %v4105 = vadd.f32 %v4101, 1e-05
    %v4106 = vadd.f32 %v4102, 1e-05
    %v4107 = vadd.f32 %v4103, 1e-05
    %v4108 = vrsqrt.pop %v4104
    %v4109 = vmul.f32 %v4108, %v4104
    %v4110 = vmul.f32 %v4109, %v4108
    %v4111 = vmul.f32 0.5, %v4110
    %v4112 = vsub.f32 1.5, %v4111
    %v4113 = vmul.f32 %v4108, %v4112
    %vm4114 = vweird.f32 %v4104
    %vm4115 = vweird.f32 %v4108
    %vm4116 = vmor %vm4114, %vm4115
    %v4117 = vsel %vm4116, %v4108, %v4113
    %v4118 = vrsqrt.pop %v4105
    %v4119 = vmul.f32 %v4118, %v4105
    %v4120 = vmul.f32 %v4119, %v4118
    %v4121 = vmul.f32 0.5, %v4120
    %v4122 = vsub.f32 1.5, %v4121
    %v4123 = vmul.f32 %v4118, %v4122
    %vm4124 = vweird.f32 %v4105
    %vm4125 = vweird.f32 %v4118
    %vm4126 = vmor %vm4124, %vm4125
    %v4127 = vsel %vm4126, %v4118, %v4123
    %v4128 = vrsqrt.pop %v4106
    %v4129 = vmul.f32 %v4128, %v4106
    %v4130 = vmul.f32 %v4129, %v4128
    %v4131 = vmul.f32 0.5, %v4130
    %v4132 = vsub.f32 1.5, %v4131
    %v4133 = vmul.f32 %v4128, %v4132
    %vm4134 = vweird.f32 %v4106
    %vm4135 = vweird.f32 %v4128
    %vm4136 = vmor %vm4134, %vm4135
    %v4137 = vsel %vm4136, %v4128, %v4133
    %v4138 = vrsqrt.pop %v4107
    %v4139 = vmul.f32 %v4138, %v4107
    %v4140 = vmul.f32 %v4139, %v4138
    %v4141 = vmul.f32 0.5, %v4140
    %v4142 = vsub.f32 1.5, %v4141
    %v4143 = vmul.f32 %v4138, %v4142
    %vm4144 = vweird.f32 %v4107
    %vm4145 = vweird.f32 %v4138
    %vm4146 = vmor %vm4144, %vm4145
    %v4147 = vsel %vm4146, %v4138, %v4143
    %v4148 = vmul.f32 %v4080, %v4117
    %v4149 = vmul.f32 %v4081, %v4127
    %v4150 = vmul.f32 %v4082, %v4137
    %v4151 = vmul.f32 %v4083, %v4147
    %v4152 = vperm.slane %v3650, 0
    %v4153 = vmul.f32 %v4148, %v4152
    %v4154 = vmul.f32 %v4149, %v4152
    %v4155 = vmul.f32 %v4150, %v4152
    %v4156 = vmul.f32 %v4151, %v4152
    %v4157 = vperm.slane %v3651, 0
    %v4158 = vadd.f32 %v4153, %v4157
    %v4159 = vadd.f32 %v4154, %v4157
    %v4160 = vadd.f32 %v4155, %v4157
    %v4161 = vadd.f32 %v4156, %v4157
    %v4162 = vld [vmem:[%s6 + $0x8] sm:$0xff]
    %v4163 = vld [vmem:[%s6 + $0x18] sm:$0xff]
    %v4164 = vld [vmem:[%s6 + $0x28] sm:$0xff]
    %v4165 = vld [vmem:[%s6 + $0x38] sm:$0xff]
    %v4166 = vperm.slane %v3652, 0
    %v4168 = vsel %vm185, %v4158, 0
    %v4171 = vsel %vm185, %v4159, 0
    %v4174 = vsel %vm185, %v4160, 0
    %v4177 = vsel %vm185, %v4161, 0
    %4179 = vmatpush.msra.mxu0 0.0
    %4180 = vmatpush.msra.mxu0 0.0
    %4181 = vmatpush.msra.mxu0 0.0
    %4182 = vmatpush.msra.mxu0 0.0
    %4183 = vmatpush.msra.mxu0 0.0
    %4184 = vmatpush.msra.mxu0 0.0
    %4185 = vmatpush.msra.mxu0 0.0
    %4186 = vmatpush.msra.mxu0 0.0
    %4187 = vmatpush.msra.mxu0 0.0
    %4188 = vmatpush.msra.mxu0 0.0
    %4189 = vmatpush.msra.mxu0 0.0
    %4190 = vmatpush.msra.mxu0 0.0
    %4191 = vmatpush.msra.mxu0 %v4165
    %4192 = vmatpush.msra.mxu0 %v4164
    %4193 = vmatpush.msra.mxu0 %v4163
    %4194 = vmatpush.msra.mxu0 %v4162
    %4195 = vmatmul.f32.gmra.mxu0 %v4168
    %v4196 = vpop.f32.mrf.mxu0
    %v4197 = vadd.f32 %v4166, %v4196
    %4198 = vmatmul.f32.gmra.mxu0 %v4171
    %v4199 = vpop.f32.mrf.mxu0
    %v4200 = vadd.f32 %v4166, %v4199
    %4201 = vmatmul.f32.gmra.mxu0 %v4174
    %v4202 = vpop.f32.mrf.mxu0
    %v4203 = vadd.f32 %v4166, %v4202
    %4204 = vmatmul.f32.gmra.mxu0 %v4177
    %v4205 = vpop.f32.mrf.mxu0
    %v4206 = vadd.f32 %v4166, %v4205
    %4207 = vdwg.mxu0
    %v4208 = vmul.f32 %v4197, 0.5
    %v4209 = vmul.f32 %v4200, 0.5
    %v4210 = vmul.f32 %v4203, 0.5
    %v4211 = vmul.f32 %v4206, 0.5
    %v4212 = vmul.f32 %v4197, 0.70710677
    %v4213 = vmul.f32 %v4200, 0.70710677
    %v4214 = vmul.f32 %v4203, 0.70710677
    %v4215 = vmul.f32 %v4206, 0.70710677
    %v4216 = vand.u32 2147483647, %v4212
    %v4217 = vand.u32 2147483647, %v4213
    %v4218 = vand.u32 2147483647, %v4214
    %v4219 = vand.u32 2147483647, %v4215
    %v4220 = vmul.f32 %v4216, 0.3275911
    %v4221 = vmul.f32 %v4217, 0.3275911
    %v4222 = vmul.f32 %v4218, 0.3275911
    %v4223 = vmul.f32 %v4219, 0.3275911
    %v4224 = vadd.f32 %v4220, 1.0
    %v4225 = vadd.f32 %v4221, 1.0
    %v4226 = vadd.f32 %v4222, 1.0
    %v4227 = vadd.f32 %v4223, 1.0
    %v4228 = vrcp.pop %v4224
    %v4229 = vmul.f32 %v4224, %v4228
    %v4230 = vsub.f32 1.0, %v4229
    %v4231 = vmul.f32 %v4228, %v4230
    %v4232 = vadd.f32 %v4228, %v4231
    %vm4233 = vweird.f32 %v4224
    %vm4234 = vweird.f32 %v4228
    %vm4235 = vmor %vm4233, %vm4234
    %v4236 = vsel %vm4235, %v4228, %v4232
    %v4237 = vand.u32 2147483647, %v4224
    %vm4238 = vcmp.eq.f32.partialorder %v4237, 8.507059e+37
    %v4239 = vand.u32 %v4224, 2147483648
    %v4240 = vor.u32 1.1754944e-38, %v4239
    %v4241 = vsel %vm4238, %v4240, %v4236
    %v4242 = vmul.f32 1.0, %v4241
    %v4243 = vrcp.pop %v4225
    %v4244 = vmul.f32 %v4225, %v4243
    %v4245 = vsub.f32 1.0, %v4244
    %v4246 = vmul.f32 %v4243, %v4245
    %v4247 = vadd.f32 %v4243, %v4246
    %vm4248 = vweird.f32 %v4225
    %vm4249 = vweird.f32 %v4243
    %vm4250 = vmor %vm4248, %vm4249
    %v4251 = vsel %vm4250, %v4243, %v4247
    %v4252 = vand.u32 2147483647, %v4225
    %vm4253 = vcmp.eq.f32.partialorder %v4252, 8.507059e+37
    %v4254 = vand.u32 %v4225, 2147483648
    %v4255 = vor.u32 1.1754944e-38, %v4254
    %v4256 = vsel %vm4253, %v4255, %v4251
    %v4257 = vmul.f32 1.0, %v4256
    %v4258 = vrcp.pop %v4226
    %v4259 = vmul.f32 %v4226, %v4258
    %v4260 = vsub.f32 1.0, %v4259
    %v4261 = vmul.f32 %v4258, %v4260
    %v4262 = vadd.f32 %v4258, %v4261
    %vm4263 = vweird.f32 %v4226
    %vm4264 = vweird.f32 %v4258
    %vm4265 = vmor %vm4263, %vm4264
    %v4266 = vsel %vm4265, %v4258, %v4262
    %v4267 = vand.u32 2147483647, %v4226
    %vm4268 = vcmp.eq.f32.partialorder %v4267, 8.507059e+37
    %v4269 = vand.u32 %v4226, 2147483648
    %v4270 = vor.u32 1.1754944e-38, %v4269
    %v4271 = vsel %vm4268, %v4270, %v4266
    %v4272 = vmul.f32 1.0, %v4271
    %v4273 = vrcp.pop %v4227
    %v4274 = vmul.f32 %v4227, %v4273
    %v4275 = vsub.f32 1.0, %v4274
    %v4276 = vmul.f32 %v4273, %v4275
    %v4277 = vadd.f32 %v4273, %v4276
    %vm4278 = vweird.f32 %v4227
    %vm4279 = vweird.f32 %v4273
    %vm4280 = vmor %vm4278, %vm4279
    %v4281 = vsel %vm4280, %v4273, %v4277
    %v4282 = vand.u32 2147483647, %v4227
    %vm4283 = vcmp.eq.f32.partialorder %v4282, 8.507059e+37
    %v4284 = vand.u32 %v4227, 2147483648
    %v4285 = vor.u32 1.1754944e-38, %v4284
    %v4286 = vsel %vm4283, %v4285, %v4281
    %v4287 = vmul.f32 1.0, %v4286
    %v4288 = vmul.f32 %v4242, 1.0614054
    %v4289 = vmul.f32 %v4257, 1.0614054
    %v4290 = vmul.f32 %v4272, 1.0614054
    %v4291 = vmul.f32 %v4287, 1.0614054
    %v4292 = vadd.f32 %v4288, -1.4531521
    %v4293 = vadd.f32 %v4289, -1.4531521
    %v4294 = vadd.f32 %v4290, -1.4531521
    %v4295 = vadd.f32 %v4291, -1.4531521
    %v4296 = vmul.f32 %v4292, %v4242
    %v4297 = vmul.f32 %v4293, %v4257
    %v4298 = vmul.f32 %v4294, %v4272
    %v4299 = vmul.f32 %v4295, %v4287
    %v4300 = vadd.f32 %v4296, 1.4214138
    %v4301 = vadd.f32 %v4297, 1.4214138
    %v4302 = vadd.f32 %v4298, 1.4214138
    %v4303 = vadd.f32 %v4299, 1.4214138
    %v4304 = vmul.f32 %v4300, %v4242
    %v4305 = vmul.f32 %v4301, %v4257
    %v4306 = vmul.f32 %v4302, %v4272
    %v4307 = vmul.f32 %v4303, %v4287
    %v4308 = vadd.f32 %v4304, -0.28449672
    %v4309 = vadd.f32 %v4305, -0.28449672
    %v4310 = vadd.f32 %v4306, -0.28449672
    %v4311 = vadd.f32 %v4307, -0.28449672
    %v4312 = vmul.f32 %v4308, %v4242
    %v4313 = vmul.f32 %v4309, %v4257
    %v4314 = vmul.f32 %v4310, %v4272
    %v4315 = vmul.f32 %v4311, %v4287
    %v4316 = vadd.f32 %v4312, 0.2548296
    %v4317 = vadd.f32 %v4313, 0.2548296
    %v4318 = vadd.f32 %v4314, 0.2548296
    %v4319 = vadd.f32 %v4315, 0.2548296
    %v4320 = vmul.f32 %v4316, %v4242
    %v4321 = vmul.f32 %v4317, %v4257
    %v4322 = vmul.f32 %v4318, %v4272
    %v4323 = vmul.f32 %v4319, %v4287
    %v4324 = vsub.f32 0.0, %v4216
    %v4325 = vsub.f32 0.0, %v4217
    %v4326 = vsub.f32 0.0, %v4218
    %v4327 = vsub.f32 0.0, %v4219
    %v4328 = vmul.f32 %v4324, %v4216
    %v4329 = vmul.f32 %v4325, %v4217
    %v4330 = vmul.f32 %v4326, %v4218
    %v4331 = vmul.f32 %v4327, %v4219
    %v4332 = vmul.f32 %v4328, 1.442695
    %v4333 = vpow.pop %v4332
    %v4334 = vmul.f32 %v4329, 1.442695
    %v4335 = vpow.pop %v4334
    %v4336 = vmul.f32 %v4330, 1.442695
    %v4337 = vpow.pop %v4336
    %v4338 = vmul.f32 %v4331, 1.442695
    %v4339 = vpow.pop %v4338
    %v4340 = vmul.f32 %v4320, %v4333
    %v4341 = vmul.f32 %v4321, %v4335
    %v4342 = vmul.f32 %v4322, %v4337
    %v4343 = vmul.f32 %v4323, %v4339
    %v4344 = vsub.f32 1.0, %v4340
    %v4345 = vsub.f32 1.0, %v4341
    %v4346 = vsub.f32 1.0, %v4342
    %v4347 = vsub.f32 1.0, %v4343
    %vm4348 = vcmp.ge.f32.partialorder %v4212, 0.0
    %vm4349 = vcmp.ge.f32.partialorder %v4213, 0.0
    %vm4350 = vcmp.ge.f32.partialorder %v4214, 0.0
    %vm4351 = vcmp.ge.f32.partialorder %v4215, 0.0
    %v4352 = vsub.f32 0.0, %v4344
    %v4353 = vsub.f32 0.0, %v4345
    %v4354 = vsub.f32 0.0, %v4346
    %v4355 = vsub.f32 0.0, %v4347
    %v4356 = vsel %vm4348, %v4344, %v4352
    %v4357 = vsel %vm4349, %v4345, %v4353
    %v4358 = vsel %vm4350, %v4346, %v4354
    %v4359 = vsel %vm4351, %v4347, %v4355
    %v4360 = vadd.f32 %v4356, 1.0
    %v4361 = vadd.f32 %v4357, 1.0
    %v4362 = vadd.f32 %v4358, 1.0
    %v4363 = vadd.f32 %v4359, 1.0
    %v4364 = vmul.f32 %v4208, %v4360
    %v4365 = vmul.f32 %v4209, %v4361
    %v4366 = vmul.f32 %v4210, %v4362
    %v4367 = vmul.f32 %v4211, %v4363
    %v4368 = vperm.slane %v3653, 0
    %4373 = vrot.lane.b32.xlu0 %v4162, 96
    %v4374 = vpop.permute.xlu0 %4373
    %4375 = vrot.lane.b32.xlu0 %v4163, 96
    %v4376 = vpop.permute.xlu0 %4375
    %4377 = vrot.lane.b32.xlu0 %v4164, 96
    %v4378 = vpop.permute.xlu0 %4377
    %4379 = vrot.lane.b32.xlu0 %v4165, 96
    %v4380 = vpop.permute.xlu0 %4379
    %v4386 = vsel %vm185, %v4364, 0
    %v4389 = vsel %vm185, %v4365, 0
    %v4392 = vsel %vm185, %v4366, 0
    %v4395 = vsel %vm185, %v4367, 0
    %4397 = vmatpush.msra.mxu0 0.0
    %4398 = vmatpush.msra.mxu0 0.0
    %4399 = vmatpush.msra.mxu0 0.0
    %4400 = vmatpush.msra.mxu0 0.0
    %4401 = vmatpush.msra.mxu0 0.0
    %4402 = vmatpush.msra.mxu0 0.0
    %4403 = vmatpush.msra.mxu0 0.0
    %4404 = vmatpush.msra.mxu0 0.0
    %4405 = vmatpush.msra.mxu0 0.0
    %4406 = vmatpush.msra.mxu0 0.0
    %4407 = vmatpush.msra.mxu0 0.0
    %4408 = vmatpush.msra.mxu0 0.0
    %4409 = vmatpush.msra.mxu0 %v4380
    %4410 = vmatpush.msra.mxu0 %v4378
    %4411 = vmatpush.msra.mxu0 %v4376
    %4412 = vmatpush.msra.mxu0 %v4374
    %4413 = vmatmul.f32.gmra.mxu0 %v4386
    %v4414 = vpop.f32.mrf.mxu0
    %v4415 = vadd.f32 %v4368, %v4414
    %4416 = vmatmul.f32.gmra.mxu0 %v4389
    %v4417 = vpop.f32.mrf.mxu0
    %v4418 = vadd.f32 %v4368, %v4417
    %4419 = vmatmul.f32.gmra.mxu0 %v4392
    %v4420 = vpop.f32.mrf.mxu0
    %v4421 = vadd.f32 %v4368, %v4420
    %4422 = vmatmul.f32.gmra.mxu0 %v4395
    %v4423 = vpop.f32.mrf.mxu0
    %v4424 = vadd.f32 %v4368, %v4423
    %4425 = vdwg.mxu0
    %v4426 = vadd.f32 %v4060, %v4415
    %v4427 = vadd.f32 %v4061, %v4418
    %v4428 = vadd.f32 %v4062, %v4421
    %v4429 = vadd.f32 %v4063, %v4424
    %v4430 = vld [vmem:[%s10 + $0x2] sm:$0x1]
    %v4431 = vld [vmem:[%s9] sm:$0xff]
    %v4432 = vld [vmem:[%s9 + $0x8] sm:$0xff]
    %v4433 = vld [vmem:[%s9 + $0x10] sm:$0xff]
    %v4434 = vld [vmem:[%s9 + $0x18] sm:$0xff]
    %v4435 = vld [vmem:[%s9 + $0x20] sm:$0xff]
    %v4436 = vld [vmem:[%s9 + $0x28] sm:$0xff]
    %v4437 = vld [vmem:[%s9 + $0x30] sm:$0xff]
    %v4438 = vld [vmem:[%s9 + $0x38] sm:$0xff]
    %v4439 = vld [vmem:[%s9 + $0x40] sm:$0xff]
    %v4440 = vld [vmem:[%s9 + $0x48] sm:$0xff]
    %v4441 = vld [vmem:[%s9 + $0x50] sm:$0xff]
    %v4442 = vld [vmem:[%s9 + $0x58] sm:$0xff]
    %v4443 = vld [vmem:[%s9 + $0x60] sm:$0xff]
    %v4444 = vld [vmem:[%s9 + $0x68] sm:$0xff]
    %v4445 = vld [vmem:[%s9 + $0x70] sm:$0xff]
    %v4446 = vld [vmem:[%s9 + $0x78] sm:$0xff]
    %v4447 = vld [vmem:[%s9 + $0x80] sm:$0xff]
    %v4448 = vld [vmem:[%s9 + $0x88] sm:$0xff]
    %v4449 = vld [vmem:[%s9 + $0x90] sm:$0xff]
    %v4450 = vld [vmem:[%s9 + $0x98] sm:$0xff]
    %v4452 = vsel %vm185, %v4426, 0
    %v4455 = vsel %vm185, %v4427, 0
    %v4458 = vsel %vm185, %v4428, 0
    %v4461 = vsel %vm185, %v4429, 0
    %4463 = vmatpush.msra.mxu0 0.0
    %4464 = vmatpush.msra.mxu0 0.0
    %4465 = vmatpush.msra.mxu0 0.0
    %4466 = vmatpush.msra.mxu0 0.0
    %4467 = vmatpush.msra.mxu0 0.0
    %4468 = vmatpush.msra.mxu0 0.0
    %4469 = vmatpush.msra.mxu0 0.0
    %4470 = vmatpush.msra.mxu0 0.0
    %4471 = vmatpush.msra.mxu0 0.0
    %4472 = vmatpush.msra.mxu0 0.0
    %4473 = vmatpush.msra.mxu0 0.0
    %4474 = vmatpush.msra.mxu0 0.0
    %4475 = vmatpush.msra.mxu0 %v4446
    %4476 = vmatpush.msra.mxu0 %v4441
    %4477 = vmatpush.msra.mxu0 %v4436
    %4478 = vmatpush.msra.mxu0 %v4431
    %4479 = vmatmul.f32.gmra.mxu0 %v4452
    %v4480 = vpop.f32.mrf.mxu0
    %v4481 = vadd.f32 0.0, %v4480
    %4482 = vmatmul.f32.gmra.mxu0 %v4455
    %v4483 = vpop.f32.mrf.mxu0
    %v4484 = vadd.f32 0.0, %v4483
    %4485 = vmatmul.f32.gmra.mxu0 %v4458
    %v4486 = vpop.f32.mrf.mxu0
    %v4487 = vadd.f32 0.0, %v4486
    %4488 = vmatmul.f32.gmra.mxu0 %v4461
    %v4489 = vpop.f32.mrf.mxu0
    %v4490 = vadd.f32 0.0, %v4489
    %4491 = vdwg.mxu0
    %4492 = vmatpush.msra.mxu0 0.0
    %4493 = vmatpush.msra.mxu0 0.0
    %4494 = vmatpush.msra.mxu0 0.0
    %4495 = vmatpush.msra.mxu0 0.0
    %4496 = vmatpush.msra.mxu0 0.0
    %4497 = vmatpush.msra.mxu0 0.0
    %4498 = vmatpush.msra.mxu0 0.0
    %4499 = vmatpush.msra.mxu0 0.0
    %4500 = vmatpush.msra.mxu0 0.0
    %4501 = vmatpush.msra.mxu0 0.0
    %4502 = vmatpush.msra.mxu0 0.0
    %4503 = vmatpush.msra.mxu0 0.0
    %4504 = vmatpush.msra.mxu0 %v4447
    %4505 = vmatpush.msra.mxu0 %v4442
    %4506 = vmatpush.msra.mxu0 %v4437
    %4507 = vmatpush.msra.mxu0 %v4432
    %4508 = vmatmul.f32.gmra.mxu0 %v4452
    %v4509 = vpop.f32.mrf.mxu0
    %v4510 = vadd.f32 0.0, %v4509
    %4511 = vmatmul.f32.gmra.mxu0 %v4455
    %v4512 = vpop.f32.mrf.mxu0
    %v4513 = vadd.f32 0.0, %v4512
    %4514 = vmatmul.f32.gmra.mxu0 %v4458
    %v4515 = vpop.f32.mrf.mxu0
    %v4516 = vadd.f32 0.0, %v4515
    %4517 = vmatmul.f32.gmra.mxu0 %v4461
    %v4518 = vpop.f32.mrf.mxu0
    %v4519 = vadd.f32 0.0, %v4518
    %4520 = vdwg.mxu0
    %4521 = vmatpush.msra.mxu0 0.0
    %4522 = vmatpush.msra.mxu0 0.0
    %4523 = vmatpush.msra.mxu0 0.0
    %4524 = vmatpush.msra.mxu0 0.0
    %4525 = vmatpush.msra.mxu0 0.0
    %4526 = vmatpush.msra.mxu0 0.0
    %4527 = vmatpush.msra.mxu0 0.0
    %4528 = vmatpush.msra.mxu0 0.0
    %4529 = vmatpush.msra.mxu0 0.0
    %4530 = vmatpush.msra.mxu0 0.0
    %4531 = vmatpush.msra.mxu0 0.0
    %4532 = vmatpush.msra.mxu0 0.0
    %4533 = vmatpush.msra.mxu0 %v4448
    %4534 = vmatpush.msra.mxu0 %v4443
    %4535 = vmatpush.msra.mxu0 %v4438
    %4536 = vmatpush.msra.mxu0 %v4433
    %4537 = vmatmul.f32.gmra.mxu0 %v4452
    %v4538 = vpop.f32.mrf.mxu0
    %v4539 = vadd.f32 0.0, %v4538
    %4540 = vmatmul.f32.gmra.mxu0 %v4455
    %v4541 = vpop.f32.mrf.mxu0
    %v4542 = vadd.f32 0.0, %v4541
    %4543 = vmatmul.f32.gmra.mxu0 %v4458
    %v4544 = vpop.f32.mrf.mxu0
    %v4545 = vadd.f32 0.0, %v4544
    %4546 = vmatmul.f32.gmra.mxu0 %v4461
    %v4547 = vpop.f32.mrf.mxu0
    %v4548 = vadd.f32 0.0, %v4547
    %4549 = vdwg.mxu0
    %4550 = vmatpush.msra.mxu0 0.0
    %4551 = vmatpush.msra.mxu0 0.0
    %4552 = vmatpush.msra.mxu0 0.0
    %4553 = vmatpush.msra.mxu0 0.0
    %4554 = vmatpush.msra.mxu0 0.0
    %4555 = vmatpush.msra.mxu0 0.0
    %4556 = vmatpush.msra.mxu0 0.0
    %4557 = vmatpush.msra.mxu0 0.0
    %4558 = vmatpush.msra.mxu0 0.0
    %4559 = vmatpush.msra.mxu0 0.0
    %4560 = vmatpush.msra.mxu0 0.0
    %4561 = vmatpush.msra.mxu0 0.0
    %4562 = vmatpush.msra.mxu0 %v4449
    %4563 = vmatpush.msra.mxu0 %v4444
    %4564 = vmatpush.msra.mxu0 %v4439
    %4565 = vmatpush.msra.mxu0 %v4434
    %4566 = vmatmul.f32.gmra.mxu0 %v4452
    %v4567 = vpop.f32.mrf.mxu0
    %v4568 = vadd.f32 0.0, %v4567
    %4569 = vmatmul.f32.gmra.mxu0 %v4455
    %v4570 = vpop.f32.mrf.mxu0
    %v4571 = vadd.f32 0.0, %v4570
    %4572 = vmatmul.f32.gmra.mxu0 %v4458
    %v4573 = vpop.f32.mrf.mxu0
    %v4574 = vadd.f32 0.0, %v4573
    %4575 = vmatmul.f32.gmra.mxu0 %v4461
    %v4576 = vpop.f32.mrf.mxu0
    %v4577 = vadd.f32 0.0, %v4576
    %4578 = vdwg.mxu0
    %4579 = vmatpush.msra.mxu0 0.0
    %4580 = vmatpush.msra.mxu0 0.0
    %4581 = vmatpush.msra.mxu0 0.0
    %4582 = vmatpush.msra.mxu0 0.0
    %4583 = vmatpush.msra.mxu0 0.0
    %4584 = vmatpush.msra.mxu0 0.0
    %4585 = vmatpush.msra.mxu0 0.0
    %4586 = vmatpush.msra.mxu0 0.0
    %4587 = vmatpush.msra.mxu0 0.0
    %4588 = vmatpush.msra.mxu0 0.0
    %4589 = vmatpush.msra.mxu0 0.0
    %4590 = vmatpush.msra.mxu0 0.0
    %4591 = vmatpush.msra.mxu0 %v4450
    %4592 = vmatpush.msra.mxu0 %v4445
    %4593 = vmatpush.msra.mxu0 %v4440
    %4594 = vmatpush.msra.mxu0 %v4435
    %4595 = vmatmul.f32.gmra.mxu0 %v4452
    %v4596 = vpop.f32.mrf.mxu0
    %v4597 = vadd.f32 0.0, %v4596
    %4598 = vmatmul.f32.gmra.mxu0 %v4455
    %v4599 = vpop.f32.mrf.mxu0
    %v4600 = vadd.f32 0.0, %v4599
    %4601 = vmatmul.f32.gmra.mxu0 %v4458
    %v4602 = vpop.f32.mrf.mxu0
    %v4603 = vadd.f32 0.0, %v4602
    %4604 = vmatmul.f32.gmra.mxu0 %v4461
    %v4605 = vpop.f32.mrf.mxu0
    %v4606 = vadd.f32 0.0, %v4605
    %4607 = vdwg.mxu0
    %v4608 = vld [vmem:[%s8] sm:$0xff]
    %s4609 = scalar_lea.vmem %s8, 8
    %v4610 = vld [vmem:[%s4609] sm:$0xff]
    %4615 = vrot.lane.b32.xlu0 %v4481, 64
    %v4616 = vpop.permute.xlu0 %4615
    %4617 = vrot.lane.b32.xlu0 %v4484, 64
    %v4618 = vpop.permute.xlu0 %4617
    %4619 = vrot.lane.b32.xlu0 %v4487, 64
    %v4620 = vpop.permute.xlu0 %4619
    %4621 = vrot.lane.b32.xlu0 %v4490, 64
    %v4622 = vpop.permute.xlu0 %4621
    %v4628 = vsel %vm185, %v4610, 0
    %4630 = vmatpush.msra.mxu0 0.0
    %4631 = vmatpush.msra.mxu0 0.0
    %4632 = vmatpush.msra.mxu0 0.0
    %4633 = vmatpush.msra.mxu0 0.0
    %4634 = vmatpush.msra.mxu0 0.0
    %4635 = vmatpush.msra.mxu0 0.0
    %4636 = vmatpush.msra.mxu0 0.0
    %4637 = vmatpush.msra.mxu0 0.0
    %4638 = vmatpush.msra.mxu0 0.0
    %4639 = vmatpush.msra.mxu0 0.0
    %4640 = vmatpush.msra.mxu0 0.0
    %4641 = vmatpush.msra.mxu0 0.0
    %4642 = vmatpush.msra.mxu0 %v4622
    %4643 = vmatpush.msra.mxu0 %v4620
    %4644 = vmatpush.msra.mxu0 %v4618
    %4645 = vmatpush.msra.mxu0 %v4616
    %4646 = vmatmul.f32.gmra.mxu0 %v4628
    %v4647 = vpop.f32.mrf.mxu0
    %v4648 = vadd.f32 0.0, %v4647
    %4649 = vdwg.mxu0
    %v4651 = vsel %vm185, %v4608, 0
    %4653 = vmatpush.msra.mxu0 0.0
    %4654 = vmatpush.msra.mxu0 0.0
    %4655 = vmatpush.msra.mxu0 0.0
    %4656 = vmatpush.msra.mxu0 0.0
    %4657 = vmatpush.msra.mxu0 0.0
    %4658 = vmatpush.msra.mxu0 0.0
    %4659 = vmatpush.msra.mxu0 0.0
    %4660 = vmatpush.msra.mxu0 0.0
    %4661 = vmatpush.msra.mxu0 0.0
    %4662 = vmatpush.msra.mxu0 0.0
    %4663 = vmatpush.msra.mxu0 0.0
    %4664 = vmatpush.msra.mxu0 0.0
    %4665 = vmatpush.msra.mxu0 %v4490
    %4666 = vmatpush.msra.mxu0 %v4487
    %4667 = vmatpush.msra.mxu0 %v4484
    %4668 = vmatpush.msra.mxu0 %v4481
    %4669 = vmatmul.f32.gmra.mxu0 %v4651
    %v4670 = vpop.f32.mrf.mxu0
    %v4671 = vadd.f32 %v4648, %v4670
    %4672 = vdwg.mxu0
    %s4673 = scalar_lea.vmem %s8, 16
    %v4674 = vld [vmem:[%s4673] sm:$0xff]
    %v4676 = vsel %vm185, %v4674, 0
    %4678 = vmatpush.msra.mxu0 0.0
    %4679 = vmatpush.msra.mxu0 0.0
    %4680 = vmatpush.msra.mxu0 0.0
    %4681 = vmatpush.msra.mxu0 0.0
    %4682 = vmatpush.msra.mxu0 0.0
    %4683 = vmatpush.msra.mxu0 0.0
    %4684 = vmatpush.msra.mxu0 0.0
    %4685 = vmatpush.msra.mxu0 0.0
    %4686 = vmatpush.msra.mxu0 0.0
    %4687 = vmatpush.msra.mxu0 0.0
    %4688 = vmatpush.msra.mxu0 0.0
    %4689 = vmatpush.msra.mxu0 0.0
    %4690 = vmatpush.msra.mxu0 %v4519
    %4691 = vmatpush.msra.mxu0 %v4516
    %4692 = vmatpush.msra.mxu0 %v4513
    %4693 = vmatpush.msra.mxu0 %v4510
    %4694 = vmatmul.f32.gmra.mxu0 %v4676
    %v4695 = vpop.f32.mrf.mxu0
    %v4696 = vadd.f32 0.0, %v4695
    %4697 = vdwg.mxu0
    %v4698 = vadd.f32 %v4671, %v4696
    %s4699 = scalar_lea.vmem %s8, 24
    %v4700 = vld [vmem:[%s4699] sm:$0xff]
    %4705 = vrot.lane.b32.xlu0 %v4510, 64
    %v4706 = vpop.permute.xlu0 %4705
    %4707 = vrot.lane.b32.xlu0 %v4513, 64
    %v4708 = vpop.permute.xlu0 %4707
    %4709 = vrot.lane.b32.xlu0 %v4516, 64
    %v4710 = vpop.permute.xlu0 %4709
    %4711 = vrot.lane.b32.xlu0 %v4519, 64
    %v4712 = vpop.permute.xlu0 %4711
    %v4718 = vsel %vm185, %v4700, 0
    %4720 = vmatpush.msra.mxu0 0.0
    %4721 = vmatpush.msra.mxu0 0.0
    %4722 = vmatpush.msra.mxu0 0.0
    %4723 = vmatpush.msra.mxu0 0.0
    %4724 = vmatpush.msra.mxu0 0.0
    %4725 = vmatpush.msra.mxu0 0.0
    %4726 = vmatpush.msra.mxu0 0.0
    %4727 = vmatpush.msra.mxu0 0.0
    %4728 = vmatpush.msra.mxu0 0.0
    %4729 = vmatpush.msra.mxu0 0.0
    %4730 = vmatpush.msra.mxu0 0.0
    %4731 = vmatpush.msra.mxu0 0.0
    %4732 = vmatpush.msra.mxu0 %v4712
    %4733 = vmatpush.msra.mxu0 %v4710
    %4734 = vmatpush.msra.mxu0 %v4708
    %4735 = vmatpush.msra.mxu0 %v4706
    %4736 = vmatmul.f32.gmra.mxu0 %v4718
    %v4737 = vpop.f32.mrf.mxu0
    %v4738 = vadd.f32 0.0, %v4737
    %4739 = vdwg.mxu0
    %v4740 = vadd.f32 %v4698, %v4738
    %s4741 = scalar_lea.vmem %s8, 32
    %v4742 = vld [vmem:[%s4741] sm:$0xff]
    %v4744 = vsel %vm185, %v4742, 0
    %4746 = vmatpush.msra.mxu0 0.0
    %4747 = vmatpush.msra.mxu0 0.0
    %4748 = vmatpush.msra.mxu0 0.0
    %4749 = vmatpush.msra.mxu0 0.0
    %4750 = vmatpush.msra.mxu0 0.0
    %4751 = vmatpush.msra.mxu0 0.0
    %4752 = vmatpush.msra.mxu0 0.0
    %4753 = vmatpush.msra.mxu0 0.0
    %4754 = vmatpush.msra.mxu0 0.0
    %4755 = vmatpush.msra.mxu0 0.0
    %4756 = vmatpush.msra.mxu0 0.0
    %4757 = vmatpush.msra.mxu0 0.0
    %4758 = vmatpush.msra.mxu0 %v4548
    %4759 = vmatpush.msra.mxu0 %v4545
    %4760 = vmatpush.msra.mxu0 %v4542
    %4761 = vmatpush.msra.mxu0 %v4539
    %4762 = vmatmul.f32.gmra.mxu0 %v4744
    %v4763 = vpop.f32.mrf.mxu0
    %v4764 = vadd.f32 0.0, %v4763
    %4765 = vdwg.mxu0
    %v4766 = vadd.f32 %v4740, %v4764
    %s4767 = scalar_lea.vmem %s8, 40
    %v4768 = vld [vmem:[%s4767] sm:$0xff]
    %4773 = vrot.lane.b32.xlu0 %v4539, 64
    %v4774 = vpop.permute.xlu0 %4773
    %4775 = vrot.lane.b32.xlu0 %v4542, 64
    %v4776 = vpop.permute.xlu0 %4775
    %4777 = vrot.lane.b32.xlu0 %v4545, 64
    %v4778 = vpop.permute.xlu0 %4777
    %4779 = vrot.lane.b32.xlu0 %v4548, 64
    %v4780 = vpop.permute.xlu0 %4779
    %v4786 = vsel %vm185, %v4768, 0
    %4788 = vmatpush.msra.mxu0 0.0
    %4789 = vmatpush.msra.mxu0 0.0
    %4790 = vmatpush.msra.mxu0 0.0
    %4791 = vmatpush.msra.mxu0 0.0
    %4792 = vmatpush.msra.mxu0 0.0
    %4793 = vmatpush.msra.mxu0 0.0
    %4794 = vmatpush.msra.mxu0 0.0
    %4795 = vmatpush.msra.mxu0 0.0
    %4796 = vmatpush.msra.mxu0 0.0
    %4797 = vmatpush.msra.mxu0 0.0
    %4798 = vmatpush.msra.mxu0 0.0
    %4799 = vmatpush.msra.mxu0 0.0
    %4800 = vmatpush.msra.mxu0 %v4780
    %4801 = vmatpush.msra.mxu0 %v4778
    %4802 = vmatpush.msra.mxu0 %v4776
    %4803 = vmatpush.msra.mxu0 %v4774
    %4804 = vmatmul.f32.gmra.mxu0 %v4786
    %v4805 = vpop.f32.mrf.mxu0
    %v4806 = vadd.f32 0.0, %v4805
    %4807 = vdwg.mxu0
    %v4808 = vadd.f32 %v4766, %v4806
    %s4809 = scalar_lea.vmem %s8, 48
    %v4810 = vld [vmem:[%s4809] sm:$0xff]
    %v4812 = vsel %vm185, %v4810, 0
    %4814 = vmatpush.msra.mxu0 0.0
    %4815 = vmatpush.msra.mxu0 0.0
    %4816 = vmatpush.msra.mxu0 0.0
    %4817 = vmatpush.msra.mxu0 0.0
    %4818 = vmatpush.msra.mxu0 0.0
    %4819 = vmatpush.msra.mxu0 0.0
    %4820 = vmatpush.msra.mxu0 0.0
    %4821 = vmatpush.msra.mxu0 0.0
    %4822 = vmatpush.msra.mxu0 0.0
    %4823 = vmatpush.msra.mxu0 0.0
    %4824 = vmatpush.msra.mxu0 0.0
    %4825 = vmatpush.msra.mxu0 0.0
    %4826 = vmatpush.msra.mxu0 %v4577
    %4827 = vmatpush.msra.mxu0 %v4574
    %4828 = vmatpush.msra.mxu0 %v4571
    %4829 = vmatpush.msra.mxu0 %v4568
    %4830 = vmatmul.f32.gmra.mxu0 %v4812
    %v4831 = vpop.f32.mrf.mxu0
    %v4832 = vadd.f32 0.0, %v4831
    %4833 = vdwg.mxu0
    %v4834 = vadd.f32 %v4808, %v4832
    %s4835 = scalar_lea.vmem %s8, 56
    %v4836 = vld [vmem:[%s4835] sm:$0xff]
    %4841 = vrot.lane.b32.xlu0 %v4568, 64
    %v4842 = vpop.permute.xlu0 %4841
    %4843 = vrot.lane.b32.xlu0 %v4571, 64
    %v4844 = vpop.permute.xlu0 %4843
    %4845 = vrot.lane.b32.xlu0 %v4574, 64
    %v4846 = vpop.permute.xlu0 %4845
    %4847 = vrot.lane.b32.xlu0 %v4577, 64
    %v4848 = vpop.permute.xlu0 %4847
    %v4854 = vsel %vm185, %v4836, 0
    %4856 = vmatpush.msra.mxu0 0.0
    %4857 = vmatpush.msra.mxu0 0.0
    %4858 = vmatpush.msra.mxu0 0.0
    %4859 = vmatpush.msra.mxu0 0.0
    %4860 = vmatpush.msra.mxu0 0.0
    %4861 = vmatpush.msra.mxu0 0.0
    %4862 = vmatpush.msra.mxu0 0.0
    %4863 = vmatpush.msra.mxu0 0.0
    %4864 = vmatpush.msra.mxu0 0.0
    %4865 = vmatpush.msra.mxu0 0.0
    %4866 = vmatpush.msra.mxu0 0.0
    %4867 = vmatpush.msra.mxu0 0.0
    %4868 = vmatpush.msra.mxu0 %v4848
    %4869 = vmatpush.msra.mxu0 %v4846
    %4870 = vmatpush.msra.mxu0 %v4844
    %4871 = vmatpush.msra.mxu0 %v4842
    %4872 = vmatmul.f32.gmra.mxu0 %v4854
    %v4873 = vpop.f32.mrf.mxu0
    %v4874 = vadd.f32 0.0, %v4873
    %4875 = vdwg.mxu0
    %v4876 = vadd.f32 %v4834, %v4874
    %s4877 = scalar_lea.vmem %s8, 64
    %v4878 = vld [vmem:[%s4877] sm:$0xff]
    %v4880 = vsel %vm185, %v4878, 0
    %4882 = vmatpush.msra.mxu0 0.0
    %4883 = vmatpush.msra.mxu0 0.0
    %4884 = vmatpush.msra.mxu0 0.0
    %4885 = vmatpush.msra.mxu0 0.0
    %4886 = vmatpush.msra.mxu0 0.0
    %4887 = vmatpush.msra.mxu0 0.0
    %4888 = vmatpush.msra.mxu0 0.0
    %4889 = vmatpush.msra.mxu0 0.0
    %4890 = vmatpush.msra.mxu0 0.0
    %4891 = vmatpush.msra.mxu0 0.0
    %4892 = vmatpush.msra.mxu0 0.0
    %4893 = vmatpush.msra.mxu0 0.0
    %4894 = vmatpush.msra.mxu0 %v4606
    %4895 = vmatpush.msra.mxu0 %v4603
    %4896 = vmatpush.msra.mxu0 %v4600
    %4897 = vmatpush.msra.mxu0 %v4597
    %4898 = vmatmul.f32.gmra.mxu0 %v4880
    %v4899 = vpop.f32.mrf.mxu0
    %v4900 = vadd.f32 0.0, %v4899
    %4901 = vdwg.mxu0
    %v4902 = vadd.f32 %v4876, %v4900
    %v4903 = vperm.slane %v4430, 0
    %v4904 = vadd.f32 %v4902, %v4903
    %4905 = vst.msk [vmem:[#allocation2] sm:$0xff] %vm922, %v4904
    // Predicated region
    $region46: #{t2t_forward.1} parent=1 // pred_check
      _
    $region47: #{t2t_forward.1} parent=1 // pred_check_branch
      %4907 = sbr.rel (0) target = $region49
    $region48: #{t2t_forward.1} parent=1 // pred_region
      %4909 = vsyncadd [#allocation3], 0
      %s4911 = sshll.u32 [#allocation2], 4
      %s4912 = int_to_ptr.vmem [resolvable:$true] %s4911
      %s4913 = sshll.u32 %s11, 4
      %s4914 = int_to_ptr.hbm [resolvable:$true] %s4913
      %4916 = dma.vmem_to_hbm [thread:$0]  %s4912, 128, %s4914, [#allocation3]
    $region49: #{t2t_forward.1} parent=1 // pred_fallthru
      _
    // Predicated region
    $region50: #{t2t_forward.1} parent=1 // pred_check
      _
    $region51: #{t2t_forward.1} parent=1 // pred_check_branch
      %4918 = sbr.rel (0) target = $region53
    $region52: #{t2t_forward.1} parent=1 // pred_region
      %4920 = dma.done [#allocation3], 128
    $region53: #{t2t_forward.1} parent=1 // pred_fallthru
      _
    %4921 = vsyncpa [#allocation3], 1

</llo_original>
